<compile_context>
chip_gen: v5e
topology: v5e:2x2
jax: 0.10.0
libtpu: 0.0.40
codegen_flags: <defaults>
</compile_context>

<pallas_src>
import functools
import math

import jax
import jax.numpy as jnp
from jax import lax
from jax.experimental import pallas as pl
from jax.experimental.pallas import tpu as pltpu


# ----------------------------- kernel --------------------------------------- #

def _layer_norm(x, gamma, beta, eps=1e-5):
    # x: (..., D) f32 ; gamma/beta broadcastable to x
    mu = jnp.mean(x, axis=-1, keepdims=True)
    var = jnp.mean((x - mu) ** 2, axis=-1, keepdims=True)
    return (x - mu) * lax.rsqrt(var + eps) * gamma + beta


def fused_encoder_kernel(x_ref, bias_ref,
                         wqkv_ref, bqkv_ref, wo_ref, bo_ref,
                         g1_ref, be1_ref, w1_ref, b1_ref, w2_ref, b2_ref,
                         g2_ref, be2_ref, gf_ref, bf_ref,
                         o_ref, *, n_layers, heads, batch, seq, d_model, d_ff):
    """All encoder layers + final LayerNorm, whole batch, one invocation."""
    dh = d_model // heads
    G = heads * batch                       # attention "group" batch dim (h*B + b)
    scale = 1.0 / math.sqrt(dh)

    attn_bias = bias_ref[...]               # (G, 1, S) f32, additive key mask

    def layer_body(l, x):
        # x: (B, S, D) f32
        xb = x.astype(jnp.bfloat16)
        # Replicate x across the (qkv-type, head) groups -> (3*H*B, S, D).
        xg = jnp.broadcast_to(xb, (3 * heads, batch, seq, d_model))
        xg = xg.reshape(3 * G, seq, d_model)                       # leading merge only

        # Batched per-(qkv, head, batch) projections on the MXU.
        qkv = jnp.einsum('gsd,gdk->gsk', xg, wqkv_ref[l],
                         preferred_element_type=jnp.float32)       # (3G, S, dh)
        qkv = qkv + bqkv_ref[l]                                    # (3G, 1, dh) bias

        q = qkv[0 * G:1 * G].astype(jnp.bfloat16)                  # (G, S, dh)
        k = qkv[1 * G:2 * G].astype(jnp.bfloat16)
        v = qkv[2 * G:3 * G].astype(jnp.bfloat16)

        # Scaled dot-product attention, batched over all (head, batch) groups.
        s = jnp.einsum('gqd,gkd->gqk', q, k,
                       preferred_element_type=jnp.float32) * scale  # (G, S, S)
        s = s + attn_bias
        s_max = jnp.max(s, axis=-1, keepdims=True)
        p = jnp.exp(s - s_max)
        denom = jnp.sum(p, axis=-1, keepdims=True)
        p = p * pl.reciprocal(denom, approx=True)
        ctx = jnp.einsum('gqk,gkd->gqd', p.astype(jnp.bfloat16), v,
                         preferred_element_type=jnp.float32)        # (G, S, dh)

        # Output projection: concat over heads folded into a per-head matmul + sum.
        og = jnp.einsum('gsd,gdk->gsk', ctx.astype(jnp.bfloat16), wo_ref[l],
                        preferred_element_type=jnp.float32)         # (G, S, D)
        attn = og[0:batch]
        for hh in range(1, heads):
            attn = attn + og[hh * batch:(hh + 1) * batch]           # (B, S, D)
        attn = attn + bo_ref[l]

        # Add & Norm 1 (f32)
        x = _layer_norm(x + attn, g1_ref[l], be1_ref[l])

        # Feed-forward (ReLU), batched over B with broadcast weights.
        xb2 = x.astype(jnp.bfloat16)
        w1b = jnp.broadcast_to(w1_ref[l], (batch, d_model, d_ff))
        h1 = jnp.einsum('bsd,bdf->bsf', xb2, w1b,
                        preferred_element_type=jnp.float32) + b1_ref[l]
        h1 = jnp.maximum(h1, 0.0)
        w2b = jnp.broadcast_to(w2_ref[l], (batch, d_ff, d_model))
        ff = jnp.einsum('bsf,bfd->bsd', h1.astype(jnp.bfloat16), w2b,
                        preferred_element_type=jnp.float32) + b2_ref[l]

        # Add & Norm 2 (f32)
        x = _layer_norm(x + ff, g2_ref[l], be2_ref[l])
        return x

    x = x_ref[...].astype(jnp.float32)
    x = lax.fori_loop(0, n_layers, layer_body, x, unroll=True)
    x = _layer_norm(x, gf_ref[...], bf_ref[...])
    # TODO(synk): output last dim is D=32 (<128 lanes) -> masked stores; at this
    # size (2 vregs) a lane-dense relayout would cost more than it saves.
    o_ref[...] = x.astype(o_ref.dtype)


# ----------------------------- wrapper -------------------------------------- #

def encoder_forward(params, tokens, mask, *, heads):
    B, S = tokens.shape
    D = params["emb"].shape[1]
    L = len(params["layers"])
    d_ff = params["layers"][0]["w1"].shape[1]
    dh = D // heads
    G = heads * B

    # Embedding gather + positional encoding: plain JAX glue outside the kernel.
    x = params["emb"][tokens] + sinusoidal_pe(S, D)[None, :, :]     # (B, S, D) f32
    if mask is None:
        mask = jnp.ones((B, S), jnp.float32)
    bias = ((1.0 - mask.astype(jnp.float32)) * (-1e9))[:, None, :]  # (B, 1, S)
    bias_g = jnp.tile(bias, (heads, 1, 1))                          # (G, 1, S), g=h*B+b

    # ---- host/XLA-side weight pre-arrangement (free, no kernel cost) ---------
    def per_head_in(w):      # (D, D) -> (H, D, dh): column blocks per head
        return jnp.transpose(w.reshape(D, heads, dh), (1, 0, 2))

    def per_head_bias(b):    # (1, D) -> (H, 1, dh)
        return b.reshape(heads, dh)[:, None, :]

    wqkv, bqkv, wo_g, bo, g1, be1, w1, b1, w2, b2, g2, be2 = ([] for _ in range(12))
    for lw in params["layers"]:
        wq_h, wk_h, wv_h = (per_head_in(lw[n]) for n in ("wq", "wk", "wv"))
        wqkv.append(jnp.repeat(jnp.concatenate([wq_h, wk_h, wv_h], 0), B, axis=0))   # (3G,D,dh)
        bqkv.append(jnp.repeat(jnp.concatenate(
            [per_head_bias(lw["bq"]), per_head_bias(lw["bk"]),
             per_head_bias(lw["bv"])], 0), B, axis=0))                               # (3G,1,dh)
        wo_g.append(jnp.repeat(lw["wo"].reshape(heads, dh, D), B, axis=0))           # (G,dh,D)
        bo.append(lw["bo"].reshape(1, 1, D))
        g1.append(lw["ln1_g"].reshape(1, 1, D)); be1.append(lw["ln1_b"].reshape(1, 1, D))
        w1.append(lw["w1"]); b1.append(lw["b1"].reshape(1, 1, d_ff))
        w2.append(lw["w2"]); b2.append(lw["b2"].reshape(1, 1, D))
        g2.append(lw["ln2_g"].reshape(1, 1, D)); be2.append(lw["ln2_b"].reshape(1, 1, D))

    st = lambda xs: jnp.stack(xs, axis=0)          # stack across layers
    cast = lambda a: a.astype(jnp.bfloat16)        # bf16 matmul weights (halved DMA)

    args = (x, bias_g,
            cast(st(wqkv)), st(bqkv), cast(st(wo_g)), st(bo),
            st(g1), st(be1), cast(st(w1)), st(b1), cast(st(w2)), st(b2),
            st(g2), st(be2),
            params["norm_g"].reshape(1, 1, D), params["norm_b"].reshape(1, 1, D))

    kernel = functools.partial(fused_encoder_kernel, n_layers=L, heads=heads,
                               batch=B, seq=S, d_model=D, d_ff=d_ff)
    vmem = pl.BlockSpec(memory_space=pltpu.MemorySpace.VMEM)
    return pl.pallas_call(
        kernel,
        out_shape=jax.ShapeDtypeStruct((B, S, D), jnp.float32),
        in_specs=[vmem] * len(args),
        out_specs=vmem,
    )(*args)


# ----------------------------- parameter setup ------------------------------ #

def init_params(key, token_size, n_layers, d_model, d_ff):
    def normal(k, shape, scale=0.02):
        return scale * jax.random.normal(k, shape, dtype=jnp.float32)

    keys = jax.random.split(key, 1 + n_layers)
    params = {"emb": normal(keys[0], (token_size, d_model), 1.0),
              "layers": [],
              "norm_g": jnp.ones((1, d_model), jnp.float32),
              "norm_b": jnp.zeros((1, d_model), jnp.float32)}
    for li in range(n_layers):
        ks = jax.random.split(keys[1 + li], 6)
        lw = {
            "wq": normal(ks[0], (d_model, d_model)), "bq": jnp.zeros((1, d_model), jnp.float32),
            "wk": normal(ks[1], (d_model, d_model)), "bk": jnp.zeros((1, d_model), jnp.float32),
            "wv": normal(ks[2], (d_model, d_model)), "bv": jnp.zeros((1, d_model), jnp.float32),
            "wo": normal(ks[3], (d_model, d_model)), "bo": jnp.zeros((1, d_model), jnp.float32),
            "ln1_g": jnp.ones((1, d_model), jnp.float32), "ln1_b": jnp.zeros((1, d_model), jnp.float32),
            "w1": normal(ks[4], (d_model, d_ff)), "b1": jnp.zeros((1, d_ff), jnp.float32),
            "w2": normal(ks[5], (d_ff, d_model)), "b2": jnp.zeros((1, d_model), jnp.float32),
            "ln2_g": jnp.ones((1, d_model), jnp.float32), "ln2_b": jnp.zeros((1, d_model), jnp.float32),
        }
        params["layers"].append(lw)
    return params


def sinusoidal_pe(seq_len, d_model):
    pos = jnp.arange(seq_len, dtype=jnp.float32)[:, None]
    i = jnp.arange(d_model // 2, dtype=jnp.float32)[None, :]
    angle = pos / jnp.power(10000.0, 2.0 * i / d_model)
    pe = jnp.zeros((seq_len, d_model), jnp.float32)
    pe = pe.at[:, 0::2].set(jnp.sin(angle))
    pe = pe.at[:, 1::2].set(jnp.cos(angle))
    return pe


# ----------------------------- main ------------------------------------------ #

if __name__ == "__main__":
    TOKEN_SIZE = 50
    N_LAYERS = 2
    D_MODEL = 32
    HEADS = 4
    D_FF = 4 * D_MODEL   # TODO(synk): EncoderBlock FFN width not given; using standard 4*d_model.
    B, S = 2, 8

    key = jax.random.PRNGKey(0)
    pkey, tkey = jax.random.split(key)
    params = init_params(pkey, TOKEN_SIZE, N_LAYERS, D_MODEL, D_FF)

    tokens = jax.random.randint(tkey, (B, S), 0, TOKEN_SIZE, dtype=jnp.int32)
    mask = jnp.ones((B, S), jnp.float32).at[1, S - 2:].set(0.0)   # mask last 2 keys of batch 1

    fwd = jax.jit(functools.partial(encoder_forward, heads=HEADS))
    out = jax.block_until_ready(fwd(params, tokens, mask))
    assert out.shape == (B, S, D_MODEL) and out.dtype == jnp.float32
    assert bool(jnp.all(jnp.isfinite(out)))
    print("KERNEL_OK")
</pallas_src>

<mosaic_0001>
module attributes {stable_mosaic.version = 11 : i64} {
  func.func @fused_encoder_kernel(%arg0: memref<2x8x32xf32, #tpu.memory_space<vmem>>, %arg1: memref<8x1x8xf32, #tpu.memory_space<vmem>>, %arg2: memref<2x24x32x8xbf16, #tpu.memory_space<vmem>>, %arg3: memref<2x24x1x8xf32, #tpu.memory_space<vmem>>, %arg4: memref<2x8x8x32xbf16, #tpu.memory_space<vmem>>, %arg5: memref<2x1x1x32xf32, #tpu.memory_space<vmem>>, %arg6: memref<2x1x1x32xf32, #tpu.memory_space<vmem>>, %arg7: memref<2x1x1x32xf32, #tpu.memory_space<vmem>>, %arg8: memref<2x32x128xbf16, #tpu.memory_space<vmem>>, %arg9: memref<2x1x1x128xf32, #tpu.memory_space<vmem>>, %arg10: memref<2x128x32xbf16, #tpu.memory_space<vmem>>, %arg11: memref<2x1x1x32xf32, #tpu.memory_space<vmem>>, %arg12: memref<2x1x1x32xf32, #tpu.memory_space<vmem>>, %arg13: memref<2x1x1x32xf32, #tpu.memory_space<vmem>>, %arg14: memref<1x1x32xf32, #tpu.memory_space<vmem>>, %arg15: memref<1x1x32xf32, #tpu.memory_space<vmem>>, %arg16: memref<2x8x32xf32, #tpu.memory_space<vmem>>) attributes {dimension_semantics = [], scalar_prefetch = 0 : i64, scratch_operands = 0 : i64, tpu.core_type = #tpu.core_type<tc>} {
    %c0 = arith.constant 0 : index
    %c0_0 = arith.constant 0 : index
    %c0_1 = arith.constant 0 : index
    %0 = vector.load %arg1[%c0, %c0_0, %c0_1] : memref<8x1x8xf32, #tpu.memory_space<vmem>>, vector<8x1x8xf32>
    %c0_2 = arith.constant 0 : index
    %c0_3 = arith.constant 0 : index
    %c0_4 = arith.constant 0 : index
    %1 = vector.load %arg0[%c0_2, %c0_3, %c0_4] : memref<2x8x32xf32, #tpu.memory_space<vmem>>, vector<2x8x32xf32>
    %c0_i32 = arith.constant 0 : i32
    %2 = arith.truncf %1 : vector<2x8x32xf32> to vector<2x8x32xbf16>
    %3 = vector.shape_cast %2 : vector<2x8x32xbf16> to vector<1x2x8x32xbf16>
    %4 = vector.broadcast %3 : vector<1x2x8x32xbf16> to vector<12x2x8x32xbf16>
    %5 = vector.shape_cast %4 : vector<12x2x8x32xbf16> to vector<24x8x32xbf16>
    %6 = arith.index_cast %c0_i32 : i32 to index
    %c0_5 = arith.constant 0 : index
    %c0_6 = arith.constant 0 : index
    %c0_7 = arith.constant 0 : index
    %7 = vector.load %arg2[%6, %c0_5, %c0_6, %c0_7] : memref<2x24x32x8xbf16, #tpu.memory_space<vmem>>, vector<1x24x32x8xbf16>
    %8 = vector.shape_cast %7 : vector<1x24x32x8xbf16> to vector<24x32x8xbf16>
    "tpu.trace_start"() <{level = 10 : i32, message = "gsd,gdk->gsk"}> : () -> ()
    %cst = arith.constant dense<0.000000e+00> : vector<24x8x8xf32>
    %9 = tpu.matmul %5, %8, %cst {dimension_numbers = #tpu.dot_dimension_numbers<[2], [1], [1], [2], [0, 0, 0, 1, 1, 2], [0], [0]>} : vector<24x8x32xbf16>, vector<24x32x8xbf16>, vector<24x8x8xf32> -> vector<24x8x8xf32>
    "tpu.trace_stop"() : () -> ()
    %10 = arith.index_cast %c0_i32 : i32 to index
    %c0_8 = arith.constant 0 : index
    %c0_9 = arith.constant 0 : index
    %c0_10 = arith.constant 0 : index
    %11 = vector.load %arg3[%10, %c0_8, %c0_9, %c0_10] : memref<2x24x1x8xf32, #tpu.memory_space<vmem>>, vector<1x24x1x8xf32>
    %12 = vector.shape_cast %11 : vector<1x24x1x8xf32> to vector<24x1x8xf32>
    %13 = vector.broadcast %12 : vector<24x1x8xf32> to vector<24x8x8xf32>
    %14 = arith.addf %9, %13 : vector<24x8x8xf32>
    %15 = vector.extract_strided_slice %14 {offsets = [0, 0, 0], sizes = [8, 8, 8], strides = [1, 1, 1]} : vector<24x8x8xf32> to vector<8x8x8xf32>
    %16 = arith.truncf %15 : vector<8x8x8xf32> to vector<8x8x8xbf16>
    %17 = vector.extract_strided_slice %14 {offsets = [8, 0, 0], sizes = [8, 8, 8], strides = [1, 1, 1]} : vector<24x8x8xf32> to vector<8x8x8xf32>
    %18 = arith.truncf %17 : vector<8x8x8xf32> to vector<8x8x8xbf16>
    %19 = vector.extract_strided_slice %14 {offsets = [16, 0, 0], sizes = [8, 8, 8], strides = [1, 1, 1]} : vector<24x8x8xf32> to vector<8x8x8xf32>
    %20 = arith.truncf %19 : vector<8x8x8xf32> to vector<8x8x8xbf16>
    "tpu.trace_start"() <{level = 10 : i32, message = "gqd,gkd->gqk"}> : () -> ()
    %cst_11 = arith.constant dense<0.000000e+00> : vector<8x8x8xf32>
    %21 = tpu.matmul %16, %18, %cst_11 {dimension_numbers = #tpu.dot_dimension_numbers<[2], [2], [1], [1], [0, 0, 0, 1, 1, 1], [0], [0]>} : vector<8x8x8xbf16>, vector<8x8x8xbf16>, vector<8x8x8xf32> -> vector<8x8x8xf32>
    "tpu.trace_stop"() : () -> ()
    %cst_12 = arith.constant 0.353553385 : f32
    %22 = vector.broadcast %cst_12 : f32 to vector<8x8x8xf32>
    %23 = arith.mulf %21, %22 : vector<8x8x8xf32>
    %24 = vector.broadcast %0 : vector<8x1x8xf32> to vector<8x8x8xf32>
    %25 = arith.addf %23, %24 : vector<8x8x8xf32>
    %cst_13 = arith.constant dense<0xFF800000> : vector<8x8xf32>
    %26 = vector.multi_reduction <maximumf>, %25, %cst_13 [2] : vector<8x8x8xf32> to vector<8x8xf32>
    %27 = vector.shape_cast %26 : vector<8x8xf32> to vector<8x8x1xf32>
    %28 = vector.broadcast %27 : vector<8x8x1xf32> to vector<8x8x8xf32>
    %29 = arith.subf %25, %28 : vector<8x8x8xf32>
    %30 = math.exp %29 : vector<8x8x8xf32>
    %cst_14 = arith.constant dense<0.000000e+00> : vector<8x8xf32>
    %31 = vector.multi_reduction <add>, %30, %cst_14 [2] : vector<8x8x8xf32> to vector<8x8xf32>
    %32 = vector.shape_cast %31 : vector<8x8xf32> to vector<8x8x1xf32>
    %33 = tpu.reciprocal %32 {approx = true} : vector<8x8x1xf32> -> vector<8x8x1xf32>
    %34 = vector.broadcast %33 : vector<8x8x1xf32> to vector<8x8x8xf32>
    %35 = arith.mulf %30, %34 : vector<8x8x8xf32>
    %36 = arith.truncf %35 : vector<8x8x8xf32> to vector<8x8x8xbf16>
    "tpu.trace_start"() <{level = 10 : i32, message = "gqk,gkd->gqd"}> : () -> ()
    %cst_15 = arith.constant dense<0.000000e+00> : vector<8x8x8xf32>
    %37 = tpu.matmul %36, %20, %cst_15 {dimension_numbers = #tpu.dot_dimension_numbers<[2], [1], [1], [2], [0, 0, 0, 1, 1, 2], [0], [0]>} : vector<8x8x8xbf16>, vector<8x8x8xbf16>, vector<8x8x8xf32> -> vector<8x8x8xf32>
    "tpu.trace_stop"() : () -> ()
    %38 = arith.truncf %37 : vector<8x8x8xf32> to vector<8x8x8xbf16>
    %39 = arith.index_cast %c0_i32 : i32 to index
    %c0_16 = arith.constant 0 : index
    %c0_17 = arith.constant 0 : index
    %c0_18 = arith.constant 0 : index
    %40 = vector.load %arg4[%39, %c0_16, %c0_17, %c0_18] : memref<2x8x8x32xbf16, #tpu.memory_space<vmem>>, vector<1x8x8x32xbf16>
    %41 = vector.shape_cast %40 : vector<1x8x8x32xbf16> to vector<8x8x32xbf16>
    "tpu.trace_start"() <{level = 10 : i32, message = "gsd,gdk->gsk"}> : () -> ()
    %cst_19 = arith.constant dense<0.000000e+00> : vector<8x8x32xf32>
    %42 = tpu.matmul %38, %41, %cst_19 {dimension_numbers = #tpu.dot_dimension_numbers<[2], [1], [1], [2], [0, 0, 0, 1, 1, 2], [0], [0]>} : vector<8x8x8xbf16>, vector<8x8x32xbf16>, vector<8x8x32xf32> -> vector<8x8x32xf32>
    "tpu.trace_stop"() : () -> ()
    %43 = vector.extract_strided_slice %42 {offsets = [0, 0, 0], sizes = [2, 8, 32], strides = [1, 1, 1]} : vector<8x8x32xf32> to vector<2x8x32xf32>
    %44 = vector.extract_strided_slice %42 {offsets = [2, 0, 0], sizes = [2, 8, 32], strides = [1, 1, 1]} : vector<8x8x32xf32> to vector<2x8x32xf32>
    %45 = arith.addf %43, %44 : vector<2x8x32xf32>
    %46 = vector.extract_strided_slice %42 {offsets = [4, 0, 0], sizes = [2, 8, 32], strides = [1, 1, 1]} : vector<8x8x32xf32> to vector<2x8x32xf32>
    %47 = arith.addf %45, %46 : vector<2x8x32xf32>
    %48 = vector.extract_strided_slice %42 {offsets = [6, 0, 0], sizes = [2, 8, 32], strides = [1, 1, 1]} : vector<8x8x32xf32> to vector<2x8x32xf32>
    %49 = arith.addf %47, %48 : vector<2x8x32xf32>
    %50 = arith.index_cast %c0_i32 : i32 to index
    %c0_20 = arith.constant 0 : index
    %c0_21 = arith.constant 0 : index
    %c0_22 = arith.constant 0 : index
    %51 = vector.load %arg5[%50, %c0_20, %c0_21, %c0_22] : memref<2x1x1x32xf32, #tpu.memory_space<vmem>>, vector<1x1x1x32xf32>
    %52 = vector.shape_cast %51 : vector<1x1x1x32xf32> to vector<1x1x32xf32>
    %53 = vector.broadcast %52 : vector<1x1x32xf32> to vector<2x8x32xf32>
    %54 = arith.addf %49, %53 : vector<2x8x32xf32>
    %55 = arith.addf %1, %54 : vector<2x8x32xf32>
    %56 = arith.index_cast %c0_i32 : i32 to index
    %c0_23 = arith.constant 0 : index
    %c0_24 = arith.constant 0 : index
    %c0_25 = arith.constant 0 : index
    %57 = vector.load %arg6[%56, %c0_23, %c0_24, %c0_25] : memref<2x1x1x32xf32, #tpu.memory_space<vmem>>, vector<1x1x1x32xf32>
    %58 = vector.shape_cast %57 : vector<1x1x1x32xf32> to vector<1x1x32xf32>
    %59 = arith.index_cast %c0_i32 : i32 to index
    %c0_26 = arith.constant 0 : index
    %c0_27 = arith.constant 0 : index
    %c0_28 = arith.constant 0 : index
    %60 = vector.load %arg7[%59, %c0_26, %c0_27, %c0_28] : memref<2x1x1x32xf32, #tpu.memory_space<vmem>>, vector<1x1x1x32xf32>
    %61 = vector.shape_cast %60 : vector<1x1x1x32xf32> to vector<1x1x32xf32>
    %cst_29 = arith.constant dense<0.000000e+00> : vector<2x8xf32>
    %62 = vector.multi_reduction <add>, %55, %cst_29 [2] : vector<2x8x32xf32> to vector<2x8xf32>
    %63 = vector.shape_cast %62 : vector<2x8xf32> to vector<2x8x1xf32>
    %cst_30 = arith.constant 3.200000e+01 : f32
    %64 = vector.broadcast %cst_30 : f32 to vector<2x8x1xf32>
    %65 = arith.divf %63, %64 : vector<2x8x1xf32>
    %66 = vector.broadcast %65 : vector<2x8x1xf32> to vector<2x8x32xf32>
    %67 = arith.subf %55, %66 : vector<2x8x32xf32>
    %68 = arith.mulf %67, %67 : vector<2x8x32xf32>
    %cst_31 = arith.constant dense<0.000000e+00> : vector<2x8xf32>
    %69 = vector.multi_reduction <add>, %68, %cst_31 [2] : vector<2x8x32xf32> to vector<2x8xf32>
    %70 = vector.shape_cast %69 : vector<2x8xf32> to vector<2x8x1xf32>
    %cst_32 = arith.constant 3.200000e+01 : f32
    %71 = vector.broadcast %cst_32 : f32 to vector<2x8x1xf32>
    %72 = arith.divf %70, %71 : vector<2x8x1xf32>
    %73 = vector.broadcast %65 : vector<2x8x1xf32> to vector<2x8x32xf32>
    %74 = arith.subf %55, %73 : vector<2x8x32xf32>
    %cst_33 = arith.constant 9.99999974E-6 : f32
    %75 = vector.broadcast %cst_33 : f32 to vector<2x8x1xf32>
    %76 = arith.addf %72, %75 : vector<2x8x1xf32>
    %77 = math.rsqrt %76 : vector<2x8x1xf32>
    %78 = vector.broadcast %77 : vector<2x8x1xf32> to vector<2x8x32xf32>
    %79 = arith.mulf %74, %78 : vector<2x8x32xf32>
    %80 = vector.broadcast %58 : vector<1x1x32xf32> to vector<2x8x32xf32>
    %81 = arith.mulf %79, %80 : vector<2x8x32xf32>
    %82 = vector.broadcast %61 : vector<1x1x32xf32> to vector<2x8x32xf32>
    %83 = arith.addf %81, %82 : vector<2x8x32xf32>
    %84 = arith.truncf %83 : vector<2x8x32xf32> to vector<2x8x32xbf16>
    %85 = arith.index_cast %c0_i32 : i32 to index
    %c0_34 = arith.constant 0 : index
    %c0_35 = arith.constant 0 : index
    %86 = vector.load %arg8[%85, %c0_34, %c0_35] : memref<2x32x128xbf16, #tpu.memory_space<vmem>>, vector<1x32x128xbf16>
    %87 = vector.shape_cast %86 : vector<1x32x128xbf16> to vector<32x128xbf16>
    %88 = vector.shape_cast %87 : vector<32x128xbf16> to vector<1x32x128xbf16>
    %89 = vector.broadcast %88 : vector<1x32x128xbf16> to vector<2x32x128xbf16>
    "tpu.trace_start"() <{level = 10 : i32, message = "bsd,bdf->bsf"}> : () -> ()
    %cst_36 = arith.constant dense<0.000000e+00> : vector<2x8x128xf32>
    %90 = tpu.matmul %84, %89, %cst_36 {dimension_numbers = #tpu.dot_dimension_numbers<[2], [1], [1], [2], [0, 0, 0, 1, 1, 2], [0], [0]>} : vector<2x8x32xbf16>, vector<2x32x128xbf16>, vector<2x8x128xf32> -> vector<2x8x128xf32>
    "tpu.trace_stop"() : () -> ()
    %91 = arith.index_cast %c0_i32 : i32 to index
    %c0_37 = arith.constant 0 : index
    %c0_38 = arith.constant 0 : index
    %c0_39 = arith.constant 0 : index
    %92 = vector.load %arg9[%91, %c0_37, %c0_38, %c0_39] : memref<2x1x1x128xf32, #tpu.memory_space<vmem>>, vector<1x1x1x128xf32>
    %93 = vector.shape_cast %92 : vector<1x1x1x128xf32> to vector<1x1x128xf32>
    %94 = vector.broadcast %93 : vector<1x1x128xf32> to vector<2x8x128xf32>
    %95 = arith.addf %90, %94 : vector<2x8x128xf32>
    %cst_40 = arith.constant 0.000000e+00 : f32
    %96 = vector.broadcast %cst_40 : f32 to vector<2x8x128xf32>
    %97 = arith.maximumf %95, %96 : vector<2x8x128xf32>
    %98 = arith.index_cast %c0_i32 : i32 to index
    %c0_41 = arith.constant 0 : index
    %c0_42 = arith.constant 0 : index
    %99 = vector.load %arg10[%98, %c0_41, %c0_42] : memref<2x128x32xbf16, #tpu.memory_space<vmem>>, vector<1x128x32xbf16>
    %100 = vector.shape_cast %99 : vector<1x128x32xbf16> to vector<128x32xbf16>
    %101 = vector.shape_cast %100 : vector<128x32xbf16> to vector<1x128x32xbf16>
    %102 = vector.broadcast %101 : vector<1x128x32xbf16> to vector<2x128x32xbf16>
    %103 = arith.truncf %97 : vector<2x8x128xf32> to vector<2x8x128xbf16>
    "tpu.trace_start"() <{level = 10 : i32, message = "bsf,bfd->bsd"}> : () -> ()
    %cst_43 = arith.constant dense<0.000000e+00> : vector<2x8x32xf32>
    %104 = tpu.matmul %103, %102, %cst_43 {dimension_numbers = #tpu.dot_dimension_numbers<[2], [1], [1], [2], [0, 0, 0, 1, 1, 2], [0], [0]>} : vector<2x8x128xbf16>, vector<2x128x32xbf16>, vector<2x8x32xf32> -> vector<2x8x32xf32>
    "tpu.trace_stop"() : () -> ()
    %105 = arith.index_cast %c0_i32 : i32 to index
    %c0_44 = arith.constant 0 : index
    %c0_45 = arith.constant 0 : index
    %c0_46 = arith.constant 0 : index
    %106 = vector.load %arg11[%105, %c0_44, %c0_45, %c0_46] : memref<2x1x1x32xf32, #tpu.memory_space<vmem>>, vector<1x1x1x32xf32>
    %107 = vector.shape_cast %106 : vector<1x1x1x32xf32> to vector<1x1x32xf32>
    %108 = vector.broadcast %107 : vector<1x1x32xf32> to vector<2x8x32xf32>
    %109 = arith.addf %104, %108 : vector<2x8x32xf32>
    %110 = arith.addf %83, %109 : vector<2x8x32xf32>
    %111 = arith.index_cast %c0_i32 : i32 to index
    %c0_47 = arith.constant 0 : index
    %c0_48 = arith.constant 0 : index
    %c0_49 = arith.constant 0 : index
    %112 = vector.load %arg12[%111, %c0_47, %c0_48, %c0_49] : memref<2x1x1x32xf32, #tpu.memory_space<vmem>>, vector<1x1x1x32xf32>
    %113 = vector.shape_cast %112 : vector<1x1x1x32xf32> to vector<1x1x32xf32>
    %114 = arith.index_cast %c0_i32 : i32 to index
    %c0_50 = arith.constant 0 : index
    %c0_51 = arith.constant 0 : index
    %c0_52 = arith.constant 0 : index
    %115 = vector.load %arg13[%114, %c0_50, %c0_51, %c0_52] : memref<2x1x1x32xf32, #tpu.memory_space<vmem>>, vector<1x1x1x32xf32>
    %116 = vector.shape_cast %115 : vector<1x1x1x32xf32> to vector<1x1x32xf32>
    %cst_53 = arith.constant dense<0.000000e+00> : vector<2x8xf32>
    %117 = vector.multi_reduction <add>, %110, %cst_53 [2] : vector<2x8x32xf32> to vector<2x8xf32>
    %118 = vector.shape_cast %117 : vector<2x8xf32> to vector<2x8x1xf32>
    %cst_54 = arith.constant 3.200000e+01 : f32
    %119 = vector.broadcast %cst_54 : f32 to vector<2x8x1xf32>
    %120 = arith.divf %118, %119 : vector<2x8x1xf32>
    %121 = vector.broadcast %120 : vector<2x8x1xf32> to vector<2x8x32xf32>
    %122 = arith.subf %110, %121 : vector<2x8x32xf32>
    %123 = arith.mulf %122, %122 : vector<2x8x32xf32>
    %cst_55 = arith.constant dense<0.000000e+00> : vector<2x8xf32>
    %124 = vector.multi_reduction <add>, %123, %cst_55 [2] : vector<2x8x32xf32> to vector<2x8xf32>
    %125 = vector.shape_cast %124 : vector<2x8xf32> to vector<2x8x1xf32>
    %cst_56 = arith.constant 3.200000e+01 : f32
    %126 = vector.broadcast %cst_56 : f32 to vector<2x8x1xf32>
    %127 = arith.divf %125, %126 : vector<2x8x1xf32>
    %128 = vector.broadcast %120 : vector<2x8x1xf32> to vector<2x8x32xf32>
    %129 = arith.subf %110, %128 : vector<2x8x32xf32>
    %cst_57 = arith.constant 9.99999974E-6 : f32
    %130 = vector.broadcast %cst_57 : f32 to vector<2x8x1xf32>
    %131 = arith.addf %127, %130 : vector<2x8x1xf32>
    %132 = math.rsqrt %131 : vector<2x8x1xf32>
    %133 = vector.broadcast %132 : vector<2x8x1xf32> to vector<2x8x32xf32>
    %134 = arith.mulf %129, %133 : vector<2x8x32xf32>
    %135 = vector.broadcast %113 : vector<1x1x32xf32> to vector<2x8x32xf32>
    %136 = arith.mulf %134, %135 : vector<2x8x32xf32>
    %137 = vector.broadcast %116 : vector<1x1x32xf32> to vector<2x8x32xf32>
    %138 = arith.addf %136, %137 : vector<2x8x32xf32>
    %c1_i32 = arith.constant 1 : i32
    %139 = arith.truncf %138 : vector<2x8x32xf32> to vector<2x8x32xbf16>
    %140 = vector.shape_cast %139 : vector<2x8x32xbf16> to vector<1x2x8x32xbf16>
    %141 = vector.broadcast %140 : vector<1x2x8x32xbf16> to vector<12x2x8x32xbf16>
    %142 = vector.shape_cast %141 : vector<12x2x8x32xbf16> to vector<24x8x32xbf16>
    %143 = arith.index_cast %c1_i32 : i32 to index
    %c0_58 = arith.constant 0 : index
    %c0_59 = arith.constant 0 : index
    %c0_60 = arith.constant 0 : index
    %144 = vector.load %arg2[%143, %c0_58, %c0_59, %c0_60] : memref<2x24x32x8xbf16, #tpu.memory_space<vmem>>, vector<1x24x32x8xbf16>
    %145 = vector.shape_cast %144 : vector<1x24x32x8xbf16> to vector<24x32x8xbf16>
    "tpu.trace_start"() <{level = 10 : i32, message = "gsd,gdk->gsk"}> : () -> ()
    %cst_61 = arith.constant dense<0.000000e+00> : vector<24x8x8xf32>
    %146 = tpu.matmul %142, %145, %cst_61 {dimension_numbers = #tpu.dot_dimension_numbers<[2], [1], [1], [2], [0, 0, 0, 1, 1, 2], [0], [0]>} : vector<24x8x32xbf16>, vector<24x32x8xbf16>, vector<24x8x8xf32> -> vector<24x8x8xf32>
    "tpu.trace_stop"() : () -> ()
    %147 = arith.index_cast %c1_i32 : i32 to index
    %c0_62 = arith.constant 0 : index
    %c0_63 = arith.constant 0 : index
    %c0_64 = arith.constant 0 : index
    %148 = vector.load %arg3[%147, %c0_62, %c0_63, %c0_64] : memref<2x24x1x8xf32, #tpu.memory_space<vmem>>, vector<1x24x1x8xf32>
    %149 = vector.shape_cast %148 : vector<1x24x1x8xf32> to vector<24x1x8xf32>
    %150 = vector.broadcast %149 : vector<24x1x8xf32> to vector<24x8x8xf32>
    %151 = arith.addf %146, %150 : vector<24x8x8xf32>
    %152 = vector.extract_strided_slice %151 {offsets = [0, 0, 0], sizes = [8, 8, 8], strides = [1, 1, 1]} : vector<24x8x8xf32> to vector<8x8x8xf32>
    %153 = arith.truncf %152 : vector<8x8x8xf32> to vector<8x8x8xbf16>
    %154 = vector.extract_strided_slice %151 {offsets = [8, 0, 0], sizes = [8, 8, 8], strides = [1, 1, 1]} : vector<24x8x8xf32> to vector<8x8x8xf32>
    %155 = arith.truncf %154 : vector<8x8x8xf32> to vector<8x8x8xbf16>
    %156 = vector.extract_strided_slice %151 {offsets = [16, 0, 0], sizes = [8, 8, 8], strides = [1, 1, 1]} : vector<24x8x8xf32> to vector<8x8x8xf32>
    %157 = arith.truncf %156 : vector<8x8x8xf32> to vector<8x8x8xbf16>
    "tpu.trace_start"() <{level = 10 : i32, message = "gqd,gkd->gqk"}> : () -> ()
    %cst_65 = arith.constant dense<0.000000e+00> : vector<8x8x8xf32>
    %158 = tpu.matmul %153, %155, %cst_65 {dimension_numbers = #tpu.dot_dimension_numbers<[2], [2], [1], [1], [0, 0, 0, 1, 1, 1], [0], [0]>} : vector<8x8x8xbf16>, vector<8x8x8xbf16>, vector<8x8x8xf32> -> vector<8x8x8xf32>
    "tpu.trace_stop"() : () -> ()
    %cst_66 = arith.constant 0.353553385 : f32
    %159 = vector.broadcast %cst_66 : f32 to vector<8x8x8xf32>
    %160 = arith.mulf %158, %159 : vector<8x8x8xf32>
    %161 = vector.broadcast %0 : vector<8x1x8xf32> to vector<8x8x8xf32>
    %162 = arith.addf %160, %161 : vector<8x8x8xf32>
    %cst_67 = arith.constant dense<0xFF800000> : vector<8x8xf32>
    %163 = vector.multi_reduction <maximumf>, %162, %cst_67 [2] : vector<8x8x8xf32> to vector<8x8xf32>
    %164 = vector.shape_cast %163 : vector<8x8xf32> to vector<8x8x1xf32>
    %165 = vector.broadcast %164 : vector<8x8x1xf32> to vector<8x8x8xf32>
    %166 = arith.subf %162, %165 : vector<8x8x8xf32>
    %167 = math.exp %166 : vector<8x8x8xf32>
    %cst_68 = arith.constant dense<0.000000e+00> : vector<8x8xf32>
    %168 = vector.multi_reduction <add>, %167, %cst_68 [2] : vector<8x8x8xf32> to vector<8x8xf32>
    %169 = vector.shape_cast %168 : vector<8x8xf32> to vector<8x8x1xf32>
    %170 = tpu.reciprocal %169 {approx = true} : vector<8x8x1xf32> -> vector<8x8x1xf32>
    %171 = vector.broadcast %170 : vector<8x8x1xf32> to vector<8x8x8xf32>
    %172 = arith.mulf %167, %171 : vector<8x8x8xf32>
    %173 = arith.truncf %172 : vector<8x8x8xf32> to vector<8x8x8xbf16>
    "tpu.trace_start"() <{level = 10 : i32, message = "gqk,gkd->gqd"}> : () -> ()
    %cst_69 = arith.constant dense<0.000000e+00> : vector<8x8x8xf32>
    %174 = tpu.matmul %173, %157, %cst_69 {dimension_numbers = #tpu.dot_dimension_numbers<[2], [1], [1], [2], [0, 0, 0, 1, 1, 2], [0], [0]>} : vector<8x8x8xbf16>, vector<8x8x8xbf16>, vector<8x8x8xf32> -> vector<8x8x8xf32>
    "tpu.trace_stop"() : () -> ()
    %175 = arith.truncf %174 : vector<8x8x8xf32> to vector<8x8x8xbf16>
    %176 = arith.index_cast %c1_i32 : i32 to index
    %c0_70 = arith.constant 0 : index
    %c0_71 = arith.constant 0 : index
    %c0_72 = arith.constant 0 : index
    %177 = vector.load %arg4[%176, %c0_70, %c0_71, %c0_72] : memref<2x8x8x32xbf16, #tpu.memory_space<vmem>>, vector<1x8x8x32xbf16>
    %178 = vector.shape_cast %177 : vector<1x8x8x32xbf16> to vector<8x8x32xbf16>
    "tpu.trace_start"() <{level = 10 : i32, message = "gsd,gdk->gsk"}> : () -> ()
    %cst_73 = arith.constant dense<0.000000e+00> : vector<8x8x32xf32>
    %179 = tpu.matmul %175, %178, %cst_73 {dimension_numbers = #tpu.dot_dimension_numbers<[2], [1], [1], [2], [0, 0, 0, 1, 1, 2], [0], [0]>} : vector<8x8x8xbf16>, vector<8x8x32xbf16>, vector<8x8x32xf32> -> vector<8x8x32xf32>
    "tpu.trace_stop"() : () -> ()
    %180 = vector.extract_strided_slice %179 {offsets = [0, 0, 0], sizes = [2, 8, 32], strides = [1, 1, 1]} : vector<8x8x32xf32> to vector<2x8x32xf32>
    %181 = vector.extract_strided_slice %179 {offsets = [2, 0, 0], sizes = [2, 8, 32], strides = [1, 1, 1]} : vector<8x8x32xf32> to vector<2x8x32xf32>
    %182 = arith.addf %180, %181 : vector<2x8x32xf32>
    %183 = vector.extract_strided_slice %179 {offsets = [4, 0, 0], sizes = [2, 8, 32], strides = [1, 1, 1]} : vector<8x8x32xf32> to vector<2x8x32xf32>
    %184 = arith.addf %182, %183 : vector<2x8x32xf32>
    %185 = vector.extract_strided_slice %179 {offsets = [6, 0, 0], sizes = [2, 8, 32], strides = [1, 1, 1]} : vector<8x8x32xf32> to vector<2x8x32xf32>
    %186 = arith.addf %184, %185 : vector<2x8x32xf32>
    %187 = arith.index_cast %c1_i32 : i32 to index
    %c0_74 = arith.constant 0 : index
    %c0_75 = arith.constant 0 : index
    %c0_76 = arith.constant 0 : index
    %188 = vector.load %arg5[%187, %c0_74, %c0_75, %c0_76] : memref<2x1x1x32xf32, #tpu.memory_space<vmem>>, vector<1x1x1x32xf32>
    %189 = vector.shape_cast %188 : vector<1x1x1x32xf32> to vector<1x1x32xf32>
    %190 = vector.broadcast %189 : vector<1x1x32xf32> to vector<2x8x32xf32>
    %191 = arith.addf %186, %190 : vector<2x8x32xf32>
    %192 = arith.addf %138, %191 : vector<2x8x32xf32>
    %193 = arith.index_cast %c1_i32 : i32 to index
    %c0_77 = arith.constant 0 : index
    %c0_78 = arith.constant 0 : index
    %c0_79 = arith.constant 0 : index
    %194 = vector.load %arg6[%193, %c0_77, %c0_78, %c0_79] : memref<2x1x1x32xf32, #tpu.memory_space<vmem>>, vector<1x1x1x32xf32>
    %195 = vector.shape_cast %194 : vector<1x1x1x32xf32> to vector<1x1x32xf32>
    %196 = arith.index_cast %c1_i32 : i32 to index
    %c0_80 = arith.constant 0 : index
    %c0_81 = arith.constant 0 : index
    %c0_82 = arith.constant 0 : index
    %197 = vector.load %arg7[%196, %c0_80, %c0_81, %c0_82] : memref<2x1x1x32xf32, #tpu.memory_space<vmem>>, vector<1x1x1x32xf32>
    %198 = vector.shape_cast %197 : vector<1x1x1x32xf32> to vector<1x1x32xf32>
    %cst_83 = arith.constant dense<0.000000e+00> : vector<2x8xf32>
    %199 = vector.multi_reduction <add>, %192, %cst_83 [2] : vector<2x8x32xf32> to vector<2x8xf32>
    %200 = vector.shape_cast %199 : vector<2x8xf32> to vector<2x8x1xf32>
    %cst_84 = arith.constant 3.200000e+01 : f32
    %201 = vector.broadcast %cst_84 : f32 to vector<2x8x1xf32>
    %202 = arith.divf %200, %201 : vector<2x8x1xf32>
    %203 = vector.broadcast %202 : vector<2x8x1xf32> to vector<2x8x32xf32>
    %204 = arith.subf %192, %203 : vector<2x8x32xf32>
    %205 = arith.mulf %204, %204 : vector<2x8x32xf32>
    %cst_85 = arith.constant dense<0.000000e+00> : vector<2x8xf32>
    %206 = vector.multi_reduction <add>, %205, %cst_85 [2] : vector<2x8x32xf32> to vector<2x8xf32>
    %207 = vector.shape_cast %206 : vector<2x8xf32> to vector<2x8x1xf32>
    %cst_86 = arith.constant 3.200000e+01 : f32
    %208 = vector.broadcast %cst_86 : f32 to vector<2x8x1xf32>
    %209 = arith.divf %207, %208 : vector<2x8x1xf32>
    %210 = vector.broadcast %202 : vector<2x8x1xf32> to vector<2x8x32xf32>
    %211 = arith.subf %192, %210 : vector<2x8x32xf32>
    %cst_87 = arith.constant 9.99999974E-6 : f32
    %212 = vector.broadcast %cst_87 : f32 to vector<2x8x1xf32>
    %213 = arith.addf %209, %212 : vector<2x8x1xf32>
    %214 = math.rsqrt %213 : vector<2x8x1xf32>
    %215 = vector.broadcast %214 : vector<2x8x1xf32> to vector<2x8x32xf32>
    %216 = arith.mulf %211, %215 : vector<2x8x32xf32>
    %217 = vector.broadcast %195 : vector<1x1x32xf32> to vector<2x8x32xf32>
    %218 = arith.mulf %216, %217 : vector<2x8x32xf32>
    %219 = vector.broadcast %198 : vector<1x1x32xf32> to vector<2x8x32xf32>
    %220 = arith.addf %218, %219 : vector<2x8x32xf32>
    %221 = arith.truncf %220 : vector<2x8x32xf32> to vector<2x8x32xbf16>
    %222 = arith.index_cast %c1_i32 : i32 to index
    %c0_88 = arith.constant 0 : index
    %c0_89 = arith.constant 0 : index
    %223 = vector.load %arg8[%222, %c0_88, %c0_89] : memref<2x32x128xbf16, #tpu.memory_space<vmem>>, vector<1x32x128xbf16>
    %224 = vector.shape_cast %223 : vector<1x32x128xbf16> to vector<32x128xbf16>
    %225 = vector.shape_cast %224 : vector<32x128xbf16> to vector<1x32x128xbf16>
    %226 = vector.broadcast %225 : vector<1x32x128xbf16> to vector<2x32x128xbf16>
    "tpu.trace_start"() <{level = 10 : i32, message = "bsd,bdf->bsf"}> : () -> ()
    %cst_90 = arith.constant dense<0.000000e+00> : vector<2x8x128xf32>
    %227 = tpu.matmul %221, %226, %cst_90 {dimension_numbers = #tpu.dot_dimension_numbers<[2], [1], [1], [2], [0, 0, 0, 1, 1, 2], [0], [0]>} : vector<2x8x32xbf16>, vector<2x32x128xbf16>, vector<2x8x128xf32> -> vector<2x8x128xf32>
    "tpu.trace_stop"() : () -> ()
    %228 = arith.index_cast %c1_i32 : i32 to index
    %c0_91 = arith.constant 0 : index
    %c0_92 = arith.constant 0 : index
    %c0_93 = arith.constant 0 : index
    %229 = vector.load %arg9[%228, %c0_91, %c0_92, %c0_93] : memref<2x1x1x128xf32, #tpu.memory_space<vmem>>, vector<1x1x1x128xf32>
    %230 = vector.shape_cast %229 : vector<1x1x1x128xf32> to vector<1x1x128xf32>
    %231 = vector.broadcast %230 : vector<1x1x128xf32> to vector<2x8x128xf32>
    %232 = arith.addf %227, %231 : vector<2x8x128xf32>
    %cst_94 = arith.constant 0.000000e+00 : f32
    %233 = vector.broadcast %cst_94 : f32 to vector<2x8x128xf32>
    %234 = arith.maximumf %232, %233 : vector<2x8x128xf32>
    %235 = arith.index_cast %c1_i32 : i32 to index
    %c0_95 = arith.constant 0 : index
    %c0_96 = arith.constant 0 : index
    %236 = vector.load %arg10[%235, %c0_95, %c0_96] : memref<2x128x32xbf16, #tpu.memory_space<vmem>>, vector<1x128x32xbf16>
    %237 = vector.shape_cast %236 : vector<1x128x32xbf16> to vector<128x32xbf16>
    %238 = vector.shape_cast %237 : vector<128x32xbf16> to vector<1x128x32xbf16>
    %239 = vector.broadcast %238 : vector<1x128x32xbf16> to vector<2x128x32xbf16>
    %240 = arith.truncf %234 : vector<2x8x128xf32> to vector<2x8x128xbf16>
    "tpu.trace_start"() <{level = 10 : i32, message = "bsf,bfd->bsd"}> : () -> ()
    %cst_97 = arith.constant dense<0.000000e+00> : vector<2x8x32xf32>
    %241 = tpu.matmul %240, %239, %cst_97 {dimension_numbers = #tpu.dot_dimension_numbers<[2], [1], [1], [2], [0, 0, 0, 1, 1, 2], [0], [0]>} : vector<2x8x128xbf16>, vector<2x128x32xbf16>, vector<2x8x32xf32> -> vector<2x8x32xf32>
    "tpu.trace_stop"() : () -> ()
    %242 = arith.index_cast %c1_i32 : i32 to index
    %c0_98 = arith.constant 0 : index
    %c0_99 = arith.constant 0 : index
    %c0_100 = arith.constant 0 : index
    %243 = vector.load %arg11[%242, %c0_98, %c0_99, %c0_100] : memref<2x1x1x32xf32, #tpu.memory_space<vmem>>, vector<1x1x1x32xf32>
    %244 = vector.shape_cast %243 : vector<1x1x1x32xf32> to vector<1x1x32xf32>
    %245 = vector.broadcast %244 : vector<1x1x32xf32> to vector<2x8x32xf32>
    %246 = arith.addf %241, %245 : vector<2x8x32xf32>
    %247 = arith.addf %220, %246 : vector<2x8x32xf32>
    %248 = arith.index_cast %c1_i32 : i32 to index
    %c0_101 = arith.constant 0 : index
    %c0_102 = arith.constant 0 : index
    %c0_103 = arith.constant 0 : index
    %249 = vector.load %arg12[%248, %c0_101, %c0_102, %c0_103] : memref<2x1x1x32xf32, #tpu.memory_space<vmem>>, vector<1x1x1x32xf32>
    %250 = vector.shape_cast %249 : vector<1x1x1x32xf32> to vector<1x1x32xf32>
    %251 = arith.index_cast %c1_i32 : i32 to index
    %c0_104 = arith.constant 0 : index
    %c0_105 = arith.constant 0 : index
    %c0_106 = arith.constant 0 : index
    %252 = vector.load %arg13[%251, %c0_104, %c0_105, %c0_106] : memref<2x1x1x32xf32, #tpu.memory_space<vmem>>, vector<1x1x1x32xf32>
    %253 = vector.shape_cast %252 : vector<1x1x1x32xf32> to vector<1x1x32xf32>
    %cst_107 = arith.constant dense<0.000000e+00> : vector<2x8xf32>
    %254 = vector.multi_reduction <add>, %247, %cst_107 [2] : vector<2x8x32xf32> to vector<2x8xf32>
    %255 = vector.shape_cast %254 : vector<2x8xf32> to vector<2x8x1xf32>
    %cst_108 = arith.constant 3.200000e+01 : f32
    %256 = vector.broadcast %cst_108 : f32 to vector<2x8x1xf32>
    %257 = arith.divf %255, %256 : vector<2x8x1xf32>
    %258 = vector.broadcast %257 : vector<2x8x1xf32> to vector<2x8x32xf32>
    %259 = arith.subf %247, %258 : vector<2x8x32xf32>
    %260 = arith.mulf %259, %259 : vector<2x8x32xf32>
    %cst_109 = arith.constant dense<0.000000e+00> : vector<2x8xf32>
    %261 = vector.multi_reduction <add>, %260, %cst_109 [2] : vector<2x8x32xf32> to vector<2x8xf32>
    %262 = vector.shape_cast %261 : vector<2x8xf32> to vector<2x8x1xf32>
    %cst_110 = arith.constant 3.200000e+01 : f32
    %263 = vector.broadcast %cst_110 : f32 to vector<2x8x1xf32>
    %264 = arith.divf %262, %263 : vector<2x8x1xf32>
    %265 = vector.broadcast %257 : vector<2x8x1xf32> to vector<2x8x32xf32>
    %266 = arith.subf %247, %265 : vector<2x8x32xf32>
    %cst_111 = arith.constant 9.99999974E-6 : f32
    %267 = vector.broadcast %cst_111 : f32 to vector<2x8x1xf32>
    %268 = arith.addf %264, %267 : vector<2x8x1xf32>
    %269 = math.rsqrt %268 : vector<2x8x1xf32>
    %270 = vector.broadcast %269 : vector<2x8x1xf32> to vector<2x8x32xf32>
    %271 = arith.mulf %266, %270 : vector<2x8x32xf32>
    %272 = vector.broadcast %250 : vector<1x1x32xf32> to vector<2x8x32xf32>
    %273 = arith.mulf %271, %272 : vector<2x8x32xf32>
    %274 = vector.broadcast %253 : vector<1x1x32xf32> to vector<2x8x32xf32>
    %275 = arith.addf %273, %274 : vector<2x8x32xf32>
    %c2_i32 = arith.constant 2 : i32
    %c0_112 = arith.constant 0 : index
    %c0_113 = arith.constant 0 : index
    %c0_114 = arith.constant 0 : index
    %276 = vector.load %arg14[%c0_112, %c0_113, %c0_114] : memref<1x1x32xf32, #tpu.memory_space<vmem>>, vector<1x1x32xf32>
    %c0_115 = arith.constant 0 : index
    %c0_116 = arith.constant 0 : index
    %c0_117 = arith.constant 0 : index
    %277 = vector.load %arg15[%c0_115, %c0_116, %c0_117] : memref<1x1x32xf32, #tpu.memory_space<vmem>>, vector<1x1x32xf32>
    %cst_118 = arith.constant dense<0.000000e+00> : vector<2x8xf32>
    %278 = vector.multi_reduction <add>, %275, %cst_118 [2] : vector<2x8x32xf32> to vector<2x8xf32>
    %279 = vector.shape_cast %278 : vector<2x8xf32> to vector<2x8x1xf32>
    %cst_119 = arith.constant 3.200000e+01 : f32
    %280 = vector.broadcast %cst_119 : f32 to vector<2x8x1xf32>
    %281 = arith.divf %279, %280 : vector<2x8x1xf32>
    %282 = vector.broadcast %281 : vector<2x8x1xf32> to vector<2x8x32xf32>
    %283 = arith.subf %275, %282 : vector<2x8x32xf32>
    %284 = arith.mulf %283, %283 : vector<2x8x32xf32>
    %cst_120 = arith.constant dense<0.000000e+00> : vector<2x8xf32>
    %285 = vector.multi_reduction <add>, %284, %cst_120 [2] : vector<2x8x32xf32> to vector<2x8xf32>
    %286 = vector.shape_cast %285 : vector<2x8xf32> to vector<2x8x1xf32>
    %cst_121 = arith.constant 3.200000e+01 : f32
    %287 = vector.broadcast %cst_121 : f32 to vector<2x8x1xf32>
    %288 = arith.divf %286, %287 : vector<2x8x1xf32>
    %289 = vector.broadcast %281 : vector<2x8x1xf32> to vector<2x8x32xf32>
    %290 = arith.subf %275, %289 : vector<2x8x32xf32>
    %cst_122 = arith.constant 9.99999974E-6 : f32
    %291 = vector.broadcast %cst_122 : f32 to vector<2x8x1xf32>
    %292 = arith.addf %288, %291 : vector<2x8x1xf32>
    %293 = math.rsqrt %292 : vector<2x8x1xf32>
    %294 = vector.broadcast %293 : vector<2x8x1xf32> to vector<2x8x32xf32>
    %295 = arith.mulf %290, %294 : vector<2x8x32xf32>
    %296 = vector.broadcast %276 : vector<1x1x32xf32> to vector<2x8x32xf32>
    %297 = arith.mulf %295, %296 : vector<2x8x32xf32>
    %298 = vector.broadcast %277 : vector<1x1x32xf32> to vector<2x8x32xf32>
    %299 = arith.addf %297, %298 : vector<2x8x32xf32>
    %c0_123 = arith.constant 0 : index
    %c0_124 = arith.constant 0 : index
    %c0_125 = arith.constant 0 : index
    %300 = vector.load %arg16[%c0_123, %c0_124, %c0_125] : memref<2x8x32xf32, #tpu.memory_space<vmem>>, vector<2x8x32xf32>
    tpu.vector_store %arg16[%c0_123, %c0_124, %c0_125], %299 {strides = array<i32>} : memref<2x8x32xf32, #tpu.memory_space<vmem>>, vector<2x8x32xf32>,
    return
  }
}

</mosaic_0001>

<llo_original>
// kernel: encoder_forward.1
$region0: #{encoder_forward.1}
  #allocation0 [shape = 'u32[]', space=smem, size = 0x4, offset = 0x4, fixed_abs, tag = 'smem constant byte address 0x4 - core index']
  #allocation1 [shape = 'u32[72,128]{1,0:T(1,128)}', space=vmem, size = 0x9000, scoped, tag = 'internal scratch']
  %s0 = inlined_call_operand.vmem [shape: f32[2,8,32], index: 0, kind: input, shape index: {}]
  %s1 = inlined_call_operand.vmem [shape: f32[8,1,8], index: 1, kind: input, shape index: {}]
  %s2 = inlined_call_operand.vmem [shape: bf16[2,24,32,8], index: 2, kind: input, shape index: {}]
  %s3 = inlined_call_operand.vmem [shape: f32[2,24,1,8], index: 3, kind: input, shape index: {}]
  %s4 = inlined_call_operand.vmem [shape: bf16[2,8,8,32], index: 4, kind: input, shape index: {}]
  %s5 = inlined_call_operand.vmem [shape: f32[2,1,1,32], index: 5, kind: input, shape index: {}]
  %s6 = inlined_call_operand.vmem [shape: f32[2,1,1,32], index: 6, kind: input, shape index: {}]
  %s7 = inlined_call_operand.vmem [shape: f32[2,1,1,32], index: 7, kind: input, shape index: {}]
  %s8 = inlined_call_operand.vmem [shape: bf16[2,32,128], index: 8, kind: input, shape index: {}]
  %s9 = inlined_call_operand.vmem [shape: f32[2,1,1,128], index: 9, kind: input, shape index: {}]
  %s10 = inlined_call_operand.vmem [shape: bf16[2,128,32], index: 10, kind: input, shape index: {}]
  %s11 = inlined_call_operand.vmem [shape: f32[2,1,1,32], index: 11, kind: input, shape index: {}]
  %s12 = inlined_call_operand.vmem [shape: f32[2,1,1,32], index: 12, kind: input, shape index: {}]
  %s13 = inlined_call_operand.vmem [shape: f32[2,1,1,32], index: 13, kind: input, shape index: {}]
  %s14 = inlined_call_operand.vmem [shape: f32[1,1,32], index: 14, kind: input, shape index: {}]
  %s15 = inlined_call_operand.vmem [shape: f32[1,1,32], index: 15, kind: input, shape index: {}]
  %s16 = inlined_call_operand.hbm [shape: f32[2,8,32], index: 16, kind: output, shape index: {}]
  %s17 = sld [smem:[#allocation0]]
  $region74: #{encoder_forward.1} parent=0
    _
  %s19 = ssub.s32 1, %s17
  %s20 = scalar_select 0, %s19, %s17
  $region1: #{encoder_forward.1} parent=0
    #allocation2 [shape = 'u8[8192]{0}', space=vmem, size = 0x2000, scoped, tag = 'output window, operand 0, single buffered']
    #allocation3 [shape = 's32[1]{0}', space=sflag, size = 0x4, scoped, tag = 'scoped memory for encoder_forward.1']
    %21 = vsyncpa [#allocation3], 0
    // Predicated region
    $region2: #{encoder_forward.1} parent=1 // pred_check
      _
    $region3: #{encoder_forward.1} parent=1 // pred_check_branch
      %23 = sbr.rel (0) target = $region5
    $region4: #{encoder_forward.1} parent=1 // pred_region
      _
    $region5: #{encoder_forward.1} parent=1 // pred_fallthru
      _
    // Predicated region
    $region6: #{encoder_forward.1} parent=1 // pred_check
      _
    $region7: #{encoder_forward.1} parent=1 // pred_check_branch
      %25 = sbr.rel (0) target = $region9
    $region8: #{encoder_forward.1} parent=1 // pred_region
      _
    $region9: #{encoder_forward.1} parent=1 // pred_fallthru
      _
    // Predicated region
    $region10: #{encoder_forward.1} parent=1 // pred_check
      _
    $region11: #{encoder_forward.1} parent=1 // pred_check_branch
      %27 = sbr.rel (0) target = $region13
    $region12: #{encoder_forward.1} parent=1 // pred_region
      _
    $region13: #{encoder_forward.1} parent=1 // pred_fallthru
      _
    // Predicated region
    $region14: #{encoder_forward.1} parent=1 // pred_check
      _
    $region15: #{encoder_forward.1} parent=1 // pred_check_branch
      %29 = sbr.rel (0) target = $region17
    $region16: #{encoder_forward.1} parent=1 // pred_region
      _
    $region17: #{encoder_forward.1} parent=1 // pred_fallthru
      _
    // Predicated region
    $region18: #{encoder_forward.1} parent=1 // pred_check
      _
    $region19: #{encoder_forward.1} parent=1 // pred_check_branch
      %31 = sbr.rel (0) target = $region21
    $region20: #{encoder_forward.1} parent=1 // pred_region
      _
    $region21: #{encoder_forward.1} parent=1 // pred_fallthru
      _
    // Predicated region
    $region22: #{encoder_forward.1} parent=1 // pred_check
      _
    $region23: #{encoder_forward.1} parent=1 // pred_check_branch
      %33 = sbr.rel (0) target = $region25
    $region24: #{encoder_forward.1} parent=1 // pred_region
      _
    $region25: #{encoder_forward.1} parent=1 // pred_fallthru
      _
    // Predicated region
    $region26: #{encoder_forward.1} parent=1 // pred_check
      _
    $region27: #{encoder_forward.1} parent=1 // pred_check_branch
      %35 = sbr.rel (0) target = $region29
    $region28: #{encoder_forward.1} parent=1 // pred_region
      _
    $region29: #{encoder_forward.1} parent=1 // pred_fallthru
      _
    // Predicated region
    $region30: #{encoder_forward.1} parent=1 // pred_check
      _
    $region31: #{encoder_forward.1} parent=1 // pred_check_branch
      %37 = sbr.rel (0) target = $region33
    $region32: #{encoder_forward.1} parent=1 // pred_region
      _
    $region33: #{encoder_forward.1} parent=1 // pred_fallthru
      _
    // Predicated region
    $region34: #{encoder_forward.1} parent=1 // pred_check
      _
    $region35: #{encoder_forward.1} parent=1 // pred_check_branch
      %39 = sbr.rel (0) target = $region37
    $region36: #{encoder_forward.1} parent=1 // pred_region
      _
    $region37: #{encoder_forward.1} parent=1 // pred_fallthru
      _
    // Predicated region
    $region38: #{encoder_forward.1} parent=1 // pred_check
      _
    $region39: #{encoder_forward.1} parent=1 // pred_check_branch
      %41 = sbr.rel (0) target = $region41
    $region40: #{encoder_forward.1} parent=1 // pred_region
      _
    $region41: #{encoder_forward.1} parent=1 // pred_fallthru
      _
    // Predicated region
    $region42: #{encoder_forward.1} parent=1 // pred_check
      _
    $region43: #{encoder_forward.1} parent=1 // pred_check_branch
      %43 = sbr.rel (0) target = $region45
    $region44: #{encoder_forward.1} parent=1 // pred_region
      _
    $region45: #{encoder_forward.1} parent=1 // pred_fallthru
      _
    // Predicated region
    $region46: #{encoder_forward.1} parent=1 // pred_check
      _
    $region47: #{encoder_forward.1} parent=1 // pred_check_branch
      %45 = sbr.rel (0) target = $region49
    $region48: #{encoder_forward.1} parent=1 // pred_region
      _
    $region49: #{encoder_forward.1} parent=1 // pred_fallthru
      _
    // Predicated region
    $region50: #{encoder_forward.1} parent=1 // pred_check
      _
    $region51: #{encoder_forward.1} parent=1 // pred_check_branch
      %47 = sbr.rel (0) target = $region53
    $region52: #{encoder_forward.1} parent=1 // pred_region
      _
    $region53: #{encoder_forward.1} parent=1 // pred_fallthru
      _
    // Predicated region
    $region54: #{encoder_forward.1} parent=1 // pred_check
      _
    $region55: #{encoder_forward.1} parent=1 // pred_check_branch
      %49 = sbr.rel (0) target = $region57
    $region56: #{encoder_forward.1} parent=1 // pred_region
      _
    $region57: #{encoder_forward.1} parent=1 // pred_fallthru
      _
    // Predicated region
    $region58: #{encoder_forward.1} parent=1 // pred_check
      _
    $region59: #{encoder_forward.1} parent=1 // pred_check_branch
      %51 = sbr.rel (0) target = $region61
    $region60: #{encoder_forward.1} parent=1 // pred_region
      _
    $region61: #{encoder_forward.1} parent=1 // pred_fallthru
      _
    // Predicated region
    $region62: #{encoder_forward.1} parent=1 // pred_check
      _
    $region63: #{encoder_forward.1} parent=1 // pred_check_branch
      %53 = sbr.rel (0) target = $region65
    $region64: #{encoder_forward.1} parent=1 // pred_region
      _
    $region65: #{encoder_forward.1} parent=1 // pred_fallthru
      _
    %v55 = vld [vmem:[%s1] sm:$0x1]
    %v56 = vld [vmem:[%s1 + $0x1] sm:$0x1]
    %v57 = vld [vmem:[%s1 + $0x2] sm:$0x1]
    %v58 = vld [vmem:[%s1 + $0x3] sm:$0x1]
    %v59 = vld [vmem:[%s1 + $0x4] sm:$0x1]
    %v60 = vld [vmem:[%s1 + $0x5] sm:$0x1]
    %v61 = vld [vmem:[%s1 + $0x6] sm:$0x1]
    %v62 = vld [vmem:[%s1 + $0x7] sm:$0x1]
    %v63 = vld [vmem:[%s0] sm:$0xff]
    %v64 = vld [vmem:[%s0 + $0x8] sm:$0xff]
    %v65 = vpack.c.bf16 %v63, %v63
    %v66 = vpack.c.bf16 %v64, %v64
    %v67 = vld [vmem:[%s2] sm:$0xf]
    %v68 = vld [vmem:[%s2 + $0x4] sm:$0xf]
    %v69 = vld [vmem:[%s2 + $0x8] sm:$0xf]
    %v70 = vld [vmem:[%s2 + $0xc] sm:$0xf]
    %v71 = vld [vmem:[%s2 + $0x10] sm:$0xf]
    %v72 = vld [vmem:[%s2 + $0x14] sm:$0xf]
    %v73 = vld [vmem:[%s2 + $0x18] sm:$0xf]
    %v74 = vld [vmem:[%s2 + $0x1c] sm:$0xf]
    %v75 = vld [vmem:[%s2 + $0x20] sm:$0xf]
    %v76 = vld [vmem:[%s2 + $0x24] sm:$0xf]
    %v77 = vld [vmem:[%s2 + $0x28] sm:$0xf]
    %v78 = vld [vmem:[%s2 + $0x2c] sm:$0xf]
    %v79 = vld [vmem:[%s2 + $0x30] sm:$0xf]
    %v80 = vld [vmem:[%s2 + $0x34] sm:$0xf]
    %v81 = vld [vmem:[%s2 + $0x38] sm:$0xf]
    %v82 = vld [vmem:[%s2 + $0x3c] sm:$0xf]
    %v83 = vld [vmem:[%s2 + $0x40] sm:$0xf]
    %v84 = vld [vmem:[%s2 + $0x44] sm:$0xf]
    %v85 = vld [vmem:[%s2 + $0x48] sm:$0xf]
    %v86 = vld [vmem:[%s2 + $0x4c] sm:$0xf]
    %v87 = vld [vmem:[%s2 + $0x50] sm:$0xf]
    %v88 = vld [vmem:[%s2 + $0x54] sm:$0xf]
    %v89 = vld [vmem:[%s2 + $0x58] sm:$0xf]
    %v90 = vld [vmem:[%s2 + $0x5c] sm:$0xf]
    %v91 = vld [vmem:[%s2 + $0x60] sm:$0xf]
    %v92 = vld [vmem:[%s2 + $0x64] sm:$0xf]
    %v93 = vld [vmem:[%s2 + $0x68] sm:$0xf]
    %v94 = vld [vmem:[%s2 + $0x6c] sm:$0xf]
    %v95 = vld [vmem:[%s2 + $0x70] sm:$0xf]
    %v96 = vld [vmem:[%s2 + $0x74] sm:$0xf]
    %v97 = vld [vmem:[%s2 + $0x78] sm:$0xf]
    %v98 = vld [vmem:[%s2 + $0x7c] sm:$0xf]
    %v99 = vld [vmem:[%s2 + $0x80] sm:$0xf]
    %v100 = vld [vmem:[%s2 + $0x84] sm:$0xf]
    %v101 = vld [vmem:[%s2 + $0x88] sm:$0xf]
    %v102 = vld [vmem:[%s2 + $0x8c] sm:$0xf]
    %v103 = vld [vmem:[%s2 + $0x90] sm:$0xf]
    %v104 = vld [vmem:[%s2 + $0x94] sm:$0xf]
    %v105 = vld [vmem:[%s2 + $0x98] sm:$0xf]
    %v106 = vld [vmem:[%s2 + $0x9c] sm:$0xf]
    %v107 = vld [vmem:[%s2 + $0xa0] sm:$0xf]
    %v108 = vld [vmem:[%s2 + $0xa4] sm:$0xf]
    %v109 = vld [vmem:[%s2 + $0xa8] sm:$0xf]
    %v110 = vld [vmem:[%s2 + $0xac] sm:$0xf]
    %v111 = vld [vmem:[%s2 + $0xb0] sm:$0xf]
    %v112 = vld [vmem:[%s2 + $0xb4] sm:$0xf]
    %v113 = vld [vmem:[%s2 + $0xb8] sm:$0xf]
    %v114 = vld [vmem:[%s2 + $0xbc] sm:$0xf]
    %v115 = vld [vmem:[%s2 + $0xc0] sm:$0xf]
    %v116 = vld [vmem:[%s2 + $0xc4] sm:$0xf]
    %v117 = vld [vmem:[%s2 + $0xc8] sm:$0xf]
    %v118 = vld [vmem:[%s2 + $0xcc] sm:$0xf]
    %v119 = vld [vmem:[%s2 + $0xd0] sm:$0xf]
    %v120 = vld [vmem:[%s2 + $0xd4] sm:$0xf]
    %v121 = vld [vmem:[%s2 + $0xd8] sm:$0xf]
    %v122 = vld [vmem:[%s2 + $0xdc] sm:$0xf]
    %v123 = vld [vmem:[%s2 + $0xe0] sm:$0xf]
    %v124 = vld [vmem:[%s2 + $0xe4] sm:$0xf]
    %v125 = vld [vmem:[%s2 + $0xe8] sm:$0xf]
    %v126 = vld [vmem:[%s2 + $0xec] sm:$0xf]
    %v127 = vld [vmem:[%s2 + $0xf0] sm:$0xf]
    %v128 = vld [vmem:[%s2 + $0xf4] sm:$0xf]
    %v129 = vld [vmem:[%s2 + $0xf8] sm:$0xf]
    %v130 = vld [vmem:[%s2 + $0xfc] sm:$0xf]
    %v131 = vld [vmem:[%s2 + $0x100] sm:$0xf]
    %v132 = vld [vmem:[%s2 + $0x104] sm:$0xf]
    %v133 = vld [vmem:[%s2 + $0x108] sm:$0xf]
    %v134 = vld [vmem:[%s2 + $0x10c] sm:$0xf]
    %v135 = vld [vmem:[%s2 + $0x110] sm:$0xf]
    %v136 = vld [vmem:[%s2 + $0x114] sm:$0xf]
    %v137 = vld [vmem:[%s2 + $0x118] sm:$0xf]
    %v138 = vld [vmem:[%s2 + $0x11c] sm:$0xf]
    %v139 = vld [vmem:[%s2 + $0x120] sm:$0xf]
    %v140 = vld [vmem:[%s2 + $0x124] sm:$0xf]
    %v141 = vld [vmem:[%s2 + $0x128] sm:$0xf]
    %v142 = vld [vmem:[%s2 + $0x12c] sm:$0xf]
    %v143 = vld [vmem:[%s2 + $0x130] sm:$0xf]
    %v144 = vld [vmem:[%s2 + $0x134] sm:$0xf]
    %v145 = vld [vmem:[%s2 + $0x138] sm:$0xf]
    %v146 = vld [vmem:[%s2 + $0x13c] sm:$0xf]
    %v147 = vld [vmem:[%s2 + $0x140] sm:$0xf]
    %v148 = vld [vmem:[%s2 + $0x144] sm:$0xf]
    %v149 = vld [vmem:[%s2 + $0x148] sm:$0xf]
    %v150 = vld [vmem:[%s2 + $0x14c] sm:$0xf]
    %v151 = vld [vmem:[%s2 + $0x150] sm:$0xf]
    %v152 = vld [vmem:[%s2 + $0x154] sm:$0xf]
    %v153 = vld [vmem:[%s2 + $0x158] sm:$0xf]
    %v154 = vld [vmem:[%s2 + $0x15c] sm:$0xf]
    %v155 = vld [vmem:[%s2 + $0x160] sm:$0xf]
    %v156 = vld [vmem:[%s2 + $0x164] sm:$0xf]
    %v157 = vld [vmem:[%s2 + $0x168] sm:$0xf]
    %v158 = vld [vmem:[%s2 + $0x16c] sm:$0xf]
    %v159 = vld [vmem:[%s2 + $0x170] sm:$0xf]
    %v160 = vld [vmem:[%s2 + $0x174] sm:$0xf]
    %v161 = vld [vmem:[%s2 + $0x178] sm:$0xf]
    %v162 = vld [vmem:[%s2 + $0x17c] sm:$0xf]
    %v163 = vld [vmem:[%s3] sm:$0x1]
    %v164 = vld [vmem:[%s3 + $0x1] sm:$0x1]
    %v165 = vld [vmem:[%s3 + $0x2] sm:$0x1]
    %v166 = vld [vmem:[%s3 + $0x3] sm:$0x1]
    %v167 = vld [vmem:[%s3 + $0x4] sm:$0x1]
    %v168 = vld [vmem:[%s3 + $0x5] sm:$0x1]
    %v169 = vld [vmem:[%s3 + $0x6] sm:$0x1]
    %v170 = vld [vmem:[%s3 + $0x7] sm:$0x1]
    %v171 = vld [vmem:[%s3 + $0x8] sm:$0x1]
    %v172 = vld [vmem:[%s3 + $0x9] sm:$0x1]
    %v173 = vld [vmem:[%s3 + $0xa] sm:$0x1]
    %v174 = vld [vmem:[%s3 + $0xb] sm:$0x1]
    %v175 = vld [vmem:[%s3 + $0xc] sm:$0x1]
    %v176 = vld [vmem:[%s3 + $0xd] sm:$0x1]
    %v177 = vld [vmem:[%s3 + $0xe] sm:$0x1]
    %v178 = vld [vmem:[%s3 + $0xf] sm:$0x1]
    %v179 = vld [vmem:[%s3 + $0x10] sm:$0x1]
    %v180 = vld [vmem:[%s3 + $0x11] sm:$0x1]
    %v181 = vld [vmem:[%s3 + $0x12] sm:$0x1]
    %v182 = vld [vmem:[%s3 + $0x13] sm:$0x1]
    %v183 = vld [vmem:[%s3 + $0x14] sm:$0x1]
    %v184 = vld [vmem:[%s3 + $0x15] sm:$0x1]
    %v185 = vld [vmem:[%s3 + $0x16] sm:$0x1]
    %v186 = vld [vmem:[%s3 + $0x17] sm:$0x1]
    %v211 = vperm.slane %v163, 0
    %v212 = vperm.slane %v164, 0
    %v213 = vperm.slane %v165, 0
    %v214 = vperm.slane %v166, 0
    %v215 = vperm.slane %v167, 0
    %v216 = vperm.slane %v168, 0
    %v217 = vperm.slane %v169, 0
    %v218 = vperm.slane %v170, 0
    %v219 = vperm.slane %v171, 0
    %v220 = vperm.slane %v172, 0
    %v221 = vperm.slane %v173, 0
    %v222 = vperm.slane %v174, 0
    %v223 = vperm.slane %v175, 0
    %v224 = vperm.slane %v176, 0
    %v225 = vperm.slane %v177, 0
    %v226 = vperm.slane %v178, 0
    %v227 = vperm.slane %v179, 0
    %v228 = vperm.slane %v180, 0
    %v229 = vperm.slane %v181, 0
    %v230 = vperm.slane %v182, 0
    %v231 = vperm.slane %v183, 0
    %v232 = vperm.slane %v184, 0
    %v233 = vperm.slane %v185, 0
    %v234 = vperm.slane %v186, 0
    %v263 = vunpack.c.l.b16 %v67
    %v264 = vunpack.c.l.b16 %v68
    %v265 = vunpack.c.l.b16 %v69
    %v266 = vunpack.c.l.b16 %v70
    %v267 = vpack.c.b16 %v264, %v263
    %v268 = vpack.c.b16 %v266, %v265
    %vm271 = vcmask 261120
    %v273 = vsel %vm271, %v65, 0
    %275 = vmatpush.bf16.msra.mxu0 0
    %276 = vmatpush.bf16.msra.mxu0 0
    %277 = vmatpush.bf16.msra.mxu0 0
    %278 = vmatpush.bf16.msra.mxu0 0
    %279 = vmatpush.bf16.msra.mxu0 0
    %280 = vmatpush.bf16.msra.mxu0 0
    %281 = vmatpush.bf16.msra.mxu0 %v268
    %282 = vmatpush.bf16.msra.mxu0 %v267
    %283 = vmatmul.bf16.gmra.mxu0 %v273
    %v284 = vpop.f32.mrf.mxu0
    %v285 = vadd.f32 %v211, %v284
    %v286 = vpop.f32.mrf.mxu0
    %287 = vdwg.mxu0
    %v292 = vunpack.c.l.b16 %v71
    %v293 = vunpack.c.l.b16 %v72
    %v294 = vunpack.c.l.b16 %v73
    %v295 = vunpack.c.l.b16 %v74
    %v296 = vpack.c.b16 %v293, %v292
    %v297 = vpack.c.b16 %v295, %v294
    %v301 = vsel %vm271, %v66, 0
    %303 = vmatpush.bf16.msra.mxu0 0
    %304 = vmatpush.bf16.msra.mxu0 0
    %305 = vmatpush.bf16.msra.mxu0 0
    %306 = vmatpush.bf16.msra.mxu0 0
    %307 = vmatpush.bf16.msra.mxu0 0
    %308 = vmatpush.bf16.msra.mxu0 0
    %309 = vmatpush.bf16.msra.mxu0 %v297
    %310 = vmatpush.bf16.msra.mxu0 %v296
    %311 = vmatmul.bf16.gmra.mxu0 %v301
    %v312 = vpop.f32.mrf.mxu0
    %v313 = vadd.f32 %v212, %v312
    %v314 = vpop.f32.mrf.mxu0
    %315 = vdwg.mxu0
    %v320 = vunpack.c.l.b16 %v75
    %v321 = vunpack.c.l.b16 %v76
    %v322 = vunpack.c.l.b16 %v77
    %v323 = vunpack.c.l.b16 %v78
    %v324 = vpack.c.b16 %v321, %v320
    %v325 = vpack.c.b16 %v323, %v322
    %328 = vmatpush.bf16.msra.mxu0 0
    %329 = vmatpush.bf16.msra.mxu0 0
    %330 = vmatpush.bf16.msra.mxu0 0
    %331 = vmatpush.bf16.msra.mxu0 0
    %332 = vmatpush.bf16.msra.mxu0 0
    %333 = vmatpush.bf16.msra.mxu0 0
    %334 = vmatpush.bf16.msra.mxu0 %v325
    %335 = vmatpush.bf16.msra.mxu0 %v324
    %336 = vmatmul.bf16.gmra.mxu0 %v273
    %v337 = vpop.f32.mrf.mxu0
    %v338 = vadd.f32 %v213, %v337
    %v339 = vpop.f32.mrf.mxu0
    %340 = vdwg.mxu0
    %v345 = vunpack.c.l.b16 %v79
    %v346 = vunpack.c.l.b16 %v80
    %v347 = vunpack.c.l.b16 %v81
    %v348 = vunpack.c.l.b16 %v82
    %v349 = vpack.c.b16 %v346, %v345
    %v350 = vpack.c.b16 %v348, %v347
    %353 = vmatpush.bf16.msra.mxu0 0
    %354 = vmatpush.bf16.msra.mxu0 0
    %355 = vmatpush.bf16.msra.mxu0 0
    %356 = vmatpush.bf16.msra.mxu0 0
    %357 = vmatpush.bf16.msra.mxu0 0
    %358 = vmatpush.bf16.msra.mxu0 0
    %359 = vmatpush.bf16.msra.mxu0 %v350
    %360 = vmatpush.bf16.msra.mxu0 %v349
    %361 = vmatmul.bf16.gmra.mxu0 %v301
    %v362 = vpop.f32.mrf.mxu0
    %v363 = vadd.f32 %v214, %v362
    %v364 = vpop.f32.mrf.mxu0
    %365 = vdwg.mxu0
    %v370 = vunpack.c.l.b16 %v83
    %v371 = vunpack.c.l.b16 %v84
    %v372 = vunpack.c.l.b16 %v85
    %v373 = vunpack.c.l.b16 %v86
    %v374 = vpack.c.b16 %v371, %v370
    %v375 = vpack.c.b16 %v373, %v372
    %378 = vmatpush.bf16.msra.mxu0 0
    %379 = vmatpush.bf16.msra.mxu0 0
    %380 = vmatpush.bf16.msra.mxu0 0
    %381 = vmatpush.bf16.msra.mxu0 0
    %382 = vmatpush.bf16.msra.mxu0 0
    %383 = vmatpush.bf16.msra.mxu0 0
    %384 = vmatpush.bf16.msra.mxu0 %v375
    %385 = vmatpush.bf16.msra.mxu0 %v374
    %386 = vmatmul.bf16.gmra.mxu0 %v273
    %v387 = vpop.f32.mrf.mxu0
    %v388 = vadd.f32 %v215, %v387
    %v389 = vpop.f32.mrf.mxu0
    %390 = vdwg.mxu0
    %v395 = vunpack.c.l.b16 %v87
    %v396 = vunpack.c.l.b16 %v88
    %v397 = vunpack.c.l.b16 %v89
    %v398 = vunpack.c.l.b16 %v90
    %v399 = vpack.c.b16 %v396, %v395
    %v400 = vpack.c.b16 %v398, %v397
    %403 = vmatpush.bf16.msra.mxu0 0
    %404 = vmatpush.bf16.msra.mxu0 0
    %405 = vmatpush.bf16.msra.mxu0 0
    %406 = vmatpush.bf16.msra.mxu0 0
    %407 = vmatpush.bf16.msra.mxu0 0
    %408 = vmatpush.bf16.msra.mxu0 0
    %409 = vmatpush.bf16.msra.mxu0 %v400
    %410 = vmatpush.bf16.msra.mxu0 %v399
    %411 = vmatmul.bf16.gmra.mxu0 %v301
    %v412 = vpop.f32.mrf.mxu0
    %v413 = vadd.f32 %v216, %v412
    %v414 = vpop.f32.mrf.mxu0
    %415 = vdwg.mxu0
    %v420 = vunpack.c.l.b16 %v91
    %v421 = vunpack.c.l.b16 %v92
    %v422 = vunpack.c.l.b16 %v93
    %v423 = vunpack.c.l.b16 %v94
    %v424 = vpack.c.b16 %v421, %v420
    %v425 = vpack.c.b16 %v423, %v422
    %428 = vmatpush.bf16.msra.mxu0 0
    %429 = vmatpush.bf16.msra.mxu0 0
    %430 = vmatpush.bf16.msra.mxu0 0
    %431 = vmatpush.bf16.msra.mxu0 0
    %432 = vmatpush.bf16.msra.mxu0 0
    %433 = vmatpush.bf16.msra.mxu0 0
    %434 = vmatpush.bf16.msra.mxu0 %v425
    %435 = vmatpush.bf16.msra.mxu0 %v424
    %436 = vmatmul.bf16.gmra.mxu0 %v273
    %v437 = vpop.f32.mrf.mxu0
    %v438 = vadd.f32 %v217, %v437
    %v439 = vpop.f32.mrf.mxu0
    %440 = vdwg.mxu0
    %v445 = vunpack.c.l.b16 %v95
    %v446 = vunpack.c.l.b16 %v96
    %v447 = vunpack.c.l.b16 %v97
    %v448 = vunpack.c.l.b16 %v98
    %v449 = vpack.c.b16 %v446, %v445
    %v450 = vpack.c.b16 %v448, %v447
    %453 = vmatpush.bf16.msra.mxu0 0
    %454 = vmatpush.bf16.msra.mxu0 0
    %455 = vmatpush.bf16.msra.mxu0 0
    %456 = vmatpush.bf16.msra.mxu0 0
    %457 = vmatpush.bf16.msra.mxu0 0
    %458 = vmatpush.bf16.msra.mxu0 0
    %459 = vmatpush.bf16.msra.mxu0 %v450
    %460 = vmatpush.bf16.msra.mxu0 %v449
    %461 = vmatmul.bf16.gmra.mxu0 %v301
    %v462 = vpop.f32.mrf.mxu0
    %v463 = vadd.f32 %v218, %v462
    %v464 = vpop.f32.mrf.mxu0
    %465 = vdwg.mxu0
    %v470 = vunpack.c.l.b16 %v99
    %v471 = vunpack.c.l.b16 %v100
    %v472 = vunpack.c.l.b16 %v101
    %v473 = vunpack.c.l.b16 %v102
    %v474 = vpack.c.b16 %v471, %v470
    %v475 = vpack.c.b16 %v473, %v472
    %478 = vmatpush.bf16.msra.mxu0 0
    %479 = vmatpush.bf16.msra.mxu0 0
    %480 = vmatpush.bf16.msra.mxu0 0
    %481 = vmatpush.bf16.msra.mxu0 0
    %482 = vmatpush.bf16.msra.mxu0 0
    %483 = vmatpush.bf16.msra.mxu0 0
    %484 = vmatpush.bf16.msra.mxu0 %v475
    %485 = vmatpush.bf16.msra.mxu0 %v474
    %486 = vmatmul.bf16.gmra.mxu0 %v273
    %v487 = vpop.f32.mrf.mxu0
    %v488 = vadd.f32 %v219, %v487
    %v489 = vpop.f32.mrf.mxu0
    %490 = vdwg.mxu0
    %v495 = vunpack.c.l.b16 %v103
    %v496 = vunpack.c.l.b16 %v104
    %v497 = vunpack.c.l.b16 %v105
    %v498 = vunpack.c.l.b16 %v106
    %v499 = vpack.c.b16 %v496, %v495
    %v500 = vpack.c.b16 %v498, %v497
    %503 = vmatpush.bf16.msra.mxu0 0
    %504 = vmatpush.bf16.msra.mxu0 0
    %505 = vmatpush.bf16.msra.mxu0 0
    %506 = vmatpush.bf16.msra.mxu0 0
    %507 = vmatpush.bf16.msra.mxu0 0
    %508 = vmatpush.bf16.msra.mxu0 0
    %509 = vmatpush.bf16.msra.mxu0 %v500
    %510 = vmatpush.bf16.msra.mxu0 %v499
    %511 = vmatmul.bf16.gmra.mxu0 %v301
    %v512 = vpop.f32.mrf.mxu0
    %v513 = vadd.f32 %v220, %v512
    %v514 = vpop.f32.mrf.mxu0
    %515 = vdwg.mxu0
    %v520 = vunpack.c.l.b16 %v107
    %v521 = vunpack.c.l.b16 %v108
    %v522 = vunpack.c.l.b16 %v109
    %v523 = vunpack.c.l.b16 %v110
    %v524 = vpack.c.b16 %v521, %v520
    %v525 = vpack.c.b16 %v523, %v522
    %528 = vmatpush.bf16.msra.mxu0 0
    %529 = vmatpush.bf16.msra.mxu0 0
    %530 = vmatpush.bf16.msra.mxu0 0
    %531 = vmatpush.bf16.msra.mxu0 0
    %532 = vmatpush.bf16.msra.mxu0 0
    %533 = vmatpush.bf16.msra.mxu0 0
    %534 = vmatpush.bf16.msra.mxu0 %v525
    %535 = vmatpush.bf16.msra.mxu0 %v524
    %536 = vmatmul.bf16.gmra.mxu0 %v273
    %v537 = vpop.f32.mrf.mxu0
    %v538 = vadd.f32 %v221, %v537
    %v539 = vpop.f32.mrf.mxu0
    %540 = vdwg.mxu0
    %v545 = vunpack.c.l.b16 %v111
    %v546 = vunpack.c.l.b16 %v112
    %v547 = vunpack.c.l.b16 %v113
    %v548 = vunpack.c.l.b16 %v114
    %v549 = vpack.c.b16 %v546, %v545
    %v550 = vpack.c.b16 %v548, %v547
    %553 = vmatpush.bf16.msra.mxu0 0
    %554 = vmatpush.bf16.msra.mxu0 0
    %555 = vmatpush.bf16.msra.mxu0 0
    %556 = vmatpush.bf16.msra.mxu0 0
    %557 = vmatpush.bf16.msra.mxu0 0
    %558 = vmatpush.bf16.msra.mxu0 0
    %559 = vmatpush.bf16.msra.mxu0 %v550
    %560 = vmatpush.bf16.msra.mxu0 %v549
    %561 = vmatmul.bf16.gmra.mxu0 %v301
    %v562 = vpop.f32.mrf.mxu0
    %v563 = vadd.f32 %v222, %v562
    %v564 = vpop.f32.mrf.mxu0
    %565 = vdwg.mxu0
    %v570 = vunpack.c.l.b16 %v115
    %v571 = vunpack.c.l.b16 %v116
    %v572 = vunpack.c.l.b16 %v117
    %v573 = vunpack.c.l.b16 %v118
    %v574 = vpack.c.b16 %v571, %v570
    %v575 = vpack.c.b16 %v573, %v572
    %578 = vmatpush.bf16.msra.mxu0 0
    %579 = vmatpush.bf16.msra.mxu0 0
    %580 = vmatpush.bf16.msra.mxu0 0
    %581 = vmatpush.bf16.msra.mxu0 0
    %582 = vmatpush.bf16.msra.mxu0 0
    %583 = vmatpush.bf16.msra.mxu0 0
    %584 = vmatpush.bf16.msra.mxu0 %v575
    %585 = vmatpush.bf16.msra.mxu0 %v574
    %586 = vmatmul.bf16.gmra.mxu0 %v273
    %v587 = vpop.f32.mrf.mxu0
    %v588 = vadd.f32 %v223, %v587
    %v589 = vpop.f32.mrf.mxu0
    %590 = vdwg.mxu0
    %v595 = vunpack.c.l.b16 %v119
    %v596 = vunpack.c.l.b16 %v120
    %v597 = vunpack.c.l.b16 %v121
    %v598 = vunpack.c.l.b16 %v122
    %v599 = vpack.c.b16 %v596, %v595
    %v600 = vpack.c.b16 %v598, %v597
    %603 = vmatpush.bf16.msra.mxu0 0
    %604 = vmatpush.bf16.msra.mxu0 0
    %605 = vmatpush.bf16.msra.mxu0 0
    %606 = vmatpush.bf16.msra.mxu0 0
    %607 = vmatpush.bf16.msra.mxu0 0
    %608 = vmatpush.bf16.msra.mxu0 0
    %609 = vmatpush.bf16.msra.mxu0 %v600
    %610 = vmatpush.bf16.msra.mxu0 %v599
    %611 = vmatmul.bf16.gmra.mxu0 %v301
    %v612 = vpop.f32.mrf.mxu0
    %v613 = vadd.f32 %v224, %v612
    %v614 = vpop.f32.mrf.mxu0
    %615 = vdwg.mxu0
    %v620 = vunpack.c.l.b16 %v123
    %v621 = vunpack.c.l.b16 %v124
    %v622 = vunpack.c.l.b16 %v125
    %v623 = vunpack.c.l.b16 %v126
    %v624 = vpack.c.b16 %v621, %v620
    %v625 = vpack.c.b16 %v623, %v622
    %628 = vmatpush.bf16.msra.mxu0 0
    %629 = vmatpush.bf16.msra.mxu0 0
    %630 = vmatpush.bf16.msra.mxu0 0
    %631 = vmatpush.bf16.msra.mxu0 0
    %632 = vmatpush.bf16.msra.mxu0 0
    %633 = vmatpush.bf16.msra.mxu0 0
    %634 = vmatpush.bf16.msra.mxu0 %v625
    %635 = vmatpush.bf16.msra.mxu0 %v624
    %636 = vmatmul.bf16.gmra.mxu0 %v273
    %v637 = vpop.f32.mrf.mxu0
    %v638 = vadd.f32 %v225, %v637
    %v639 = vpop.f32.mrf.mxu0
    %640 = vdwg.mxu0
    %v645 = vunpack.c.l.b16 %v127
    %v646 = vunpack.c.l.b16 %v128
    %v647 = vunpack.c.l.b16 %v129
    %v648 = vunpack.c.l.b16 %v130
    %v649 = vpack.c.b16 %v646, %v645
    %v650 = vpack.c.b16 %v648, %v647
    %653 = vmatpush.bf16.msra.mxu0 0
    %654 = vmatpush.bf16.msra.mxu0 0
    %655 = vmatpush.bf16.msra.mxu0 0
    %656 = vmatpush.bf16.msra.mxu0 0
    %657 = vmatpush.bf16.msra.mxu0 0
    %658 = vmatpush.bf16.msra.mxu0 0
    %659 = vmatpush.bf16.msra.mxu0 %v650
    %660 = vmatpush.bf16.msra.mxu0 %v649
    %661 = vmatmul.bf16.gmra.mxu0 %v301
    %v662 = vpop.f32.mrf.mxu0
    %v663 = vadd.f32 %v226, %v662
    %v664 = vpop.f32.mrf.mxu0
    %665 = vdwg.mxu0
    %v670 = vunpack.c.l.b16 %v131
    %v671 = vunpack.c.l.b16 %v132
    %v672 = vunpack.c.l.b16 %v133
    %v673 = vunpack.c.l.b16 %v134
    %v674 = vpack.c.b16 %v671, %v670
    %v675 = vpack.c.b16 %v673, %v672
    %678 = vmatpush.bf16.msra.mxu0 0
    %679 = vmatpush.bf16.msra.mxu0 0
    %680 = vmatpush.bf16.msra.mxu0 0
    %681 = vmatpush.bf16.msra.mxu0 0
    %682 = vmatpush.bf16.msra.mxu0 0
    %683 = vmatpush.bf16.msra.mxu0 0
    %684 = vmatpush.bf16.msra.mxu0 %v675
    %685 = vmatpush.bf16.msra.mxu0 %v674
    %686 = vmatmul.bf16.gmra.mxu0 %v273
    %v687 = vpop.f32.mrf.mxu0
    %v688 = vadd.f32 %v227, %v687
    %v689 = vpop.f32.mrf.mxu0
    %690 = vdwg.mxu0
    %v695 = vunpack.c.l.b16 %v135
    %v696 = vunpack.c.l.b16 %v136
    %v697 = vunpack.c.l.b16 %v137
    %v698 = vunpack.c.l.b16 %v138
    %v699 = vpack.c.b16 %v696, %v695
    %v700 = vpack.c.b16 %v698, %v697
    %703 = vmatpush.bf16.msra.mxu0 0
    %704 = vmatpush.bf16.msra.mxu0 0
    %705 = vmatpush.bf16.msra.mxu0 0
    %706 = vmatpush.bf16.msra.mxu0 0
    %707 = vmatpush.bf16.msra.mxu0 0
    %708 = vmatpush.bf16.msra.mxu0 0
    %709 = vmatpush.bf16.msra.mxu0 %v700
    %710 = vmatpush.bf16.msra.mxu0 %v699
    %711 = vmatmul.bf16.gmra.mxu0 %v301
    %v712 = vpop.f32.mrf.mxu0
    %v713 = vadd.f32 %v228, %v712
    %v714 = vpop.f32.mrf.mxu0
    %715 = vdwg.mxu0
    %v720 = vunpack.c.l.b16 %v139
    %v721 = vunpack.c.l.b16 %v140
    %v722 = vunpack.c.l.b16 %v141
    %v723 = vunpack.c.l.b16 %v142
    %v724 = vpack.c.b16 %v721, %v720
    %v725 = vpack.c.b16 %v723, %v722
    %728 = vmatpush.bf16.msra.mxu0 0
    %729 = vmatpush.bf16.msra.mxu0 0
    %730 = vmatpush.bf16.msra.mxu0 0
    %731 = vmatpush.bf16.msra.mxu0 0
    %732 = vmatpush.bf16.msra.mxu0 0
    %733 = vmatpush.bf16.msra.mxu0 0
    %734 = vmatpush.bf16.msra.mxu0 %v725
    %735 = vmatpush.bf16.msra.mxu0 %v724
    %736 = vmatmul.bf16.gmra.mxu0 %v273
    %v737 = vpop.f32.mrf.mxu0
    %v738 = vadd.f32 %v229, %v737
    %v739 = vpop.f32.mrf.mxu0
    %740 = vdwg.mxu0
    %v745 = vunpack.c.l.b16 %v143
    %v746 = vunpack.c.l.b16 %v144
    %v747 = vunpack.c.l.b16 %v145
    %v748 = vunpack.c.l.b16 %v146
    %v749 = vpack.c.b16 %v746, %v745
    %v750 = vpack.c.b16 %v748, %v747
    %753 = vmatpush.bf16.msra.mxu0 0
    %754 = vmatpush.bf16.msra.mxu0 0
    %755 = vmatpush.bf16.msra.mxu0 0
    %756 = vmatpush.bf16.msra.mxu0 0
    %757 = vmatpush.bf16.msra.mxu0 0
    %758 = vmatpush.bf16.msra.mxu0 0
    %759 = vmatpush.bf16.msra.mxu0 %v750
    %760 = vmatpush.bf16.msra.mxu0 %v749
    %761 = vmatmul.bf16.gmra.mxu0 %v301
    %v762 = vpop.f32.mrf.mxu0
    %v763 = vadd.f32 %v230, %v762
    %v764 = vpop.f32.mrf.mxu0
    %765 = vdwg.mxu0
    %v770 = vunpack.c.l.b16 %v147
    %v771 = vunpack.c.l.b16 %v148
    %v772 = vunpack.c.l.b16 %v149
    %v773 = vunpack.c.l.b16 %v150
    %v774 = vpack.c.b16 %v771, %v770
    %v775 = vpack.c.b16 %v773, %v772
    %778 = vmatpush.bf16.msra.mxu0 0
    %779 = vmatpush.bf16.msra.mxu0 0
    %780 = vmatpush.bf16.msra.mxu0 0
    %781 = vmatpush.bf16.msra.mxu0 0
    %782 = vmatpush.bf16.msra.mxu0 0
    %783 = vmatpush.bf16.msra.mxu0 0
    %784 = vmatpush.bf16.msra.mxu0 %v775
    %785 = vmatpush.bf16.msra.mxu0 %v774
    %786 = vmatmul.bf16.gmra.mxu0 %v273
    %v787 = vpop.f32.mrf.mxu0
    %v788 = vadd.f32 %v231, %v787
    %v789 = vpop.f32.mrf.mxu0
    %790 = vdwg.mxu0
    %v795 = vunpack.c.l.b16 %v151
    %v796 = vunpack.c.l.b16 %v152
    %v797 = vunpack.c.l.b16 %v153
    %v798 = vunpack.c.l.b16 %v154
    %v799 = vpack.c.b16 %v796, %v795
    %v800 = vpack.c.b16 %v798, %v797
    %803 = vmatpush.bf16.msra.mxu0 0
    %804 = vmatpush.bf16.msra.mxu0 0
    %805 = vmatpush.bf16.msra.mxu0 0
    %806 = vmatpush.bf16.msra.mxu0 0
    %807 = vmatpush.bf16.msra.mxu0 0
    %808 = vmatpush.bf16.msra.mxu0 0
    %809 = vmatpush.bf16.msra.mxu0 %v800
    %810 = vmatpush.bf16.msra.mxu0 %v799
    %811 = vmatmul.bf16.gmra.mxu0 %v301
    %v812 = vpop.f32.mrf.mxu0
    %v813 = vadd.f32 %v232, %v812
    %v814 = vpop.f32.mrf.mxu0
    %815 = vdwg.mxu0
    %v820 = vunpack.c.l.b16 %v155
    %v821 = vunpack.c.l.b16 %v156
    %v822 = vunpack.c.l.b16 %v157
    %v823 = vunpack.c.l.b16 %v158
    %v824 = vpack.c.b16 %v821, %v820
    %v825 = vpack.c.b16 %v823, %v822
    %828 = vmatpush.bf16.msra.mxu0 0
    %829 = vmatpush.bf16.msra.mxu0 0
    %830 = vmatpush.bf16.msra.mxu0 0
    %831 = vmatpush.bf16.msra.mxu0 0
    %832 = vmatpush.bf16.msra.mxu0 0
    %833 = vmatpush.bf16.msra.mxu0 0
    %834 = vmatpush.bf16.msra.mxu0 %v825
    %835 = vmatpush.bf16.msra.mxu0 %v824
    %836 = vmatmul.bf16.gmra.mxu0 %v273
    %v837 = vpop.f32.mrf.mxu0
    %v838 = vadd.f32 %v233, %v837
    %v839 = vpop.f32.mrf.mxu0
    %840 = vdwg.mxu0
    %v845 = vunpack.c.l.b16 %v159
    %v846 = vunpack.c.l.b16 %v160
    %v847 = vunpack.c.l.b16 %v161
    %v848 = vunpack.c.l.b16 %v162
    %v849 = vpack.c.b16 %v846, %v845
    %v850 = vpack.c.b16 %v848, %v847
    %853 = vmatpush.bf16.msra.mxu0 0
    %854 = vmatpush.bf16.msra.mxu0 0
    %855 = vmatpush.bf16.msra.mxu0 0
    %856 = vmatpush.bf16.msra.mxu0 0
    %857 = vmatpush.bf16.msra.mxu0 0
    %858 = vmatpush.bf16.msra.mxu0 0
    %859 = vmatpush.bf16.msra.mxu0 %v850
    %860 = vmatpush.bf16.msra.mxu0 %v849
    %861 = vmatmul.bf16.gmra.mxu0 %v301
    %v862 = vpop.f32.mrf.mxu0
    %v863 = vadd.f32 %v234, %v862
    %v864 = vpop.f32.mrf.mxu0
    %865 = vdwg.mxu0
    %v866 = vpack.c.bf16 %v285, %v285
    %v867 = vpack.c.bf16 %v313, %v313
    %v868 = vpack.c.bf16 %v338, %v338
    %v869 = vpack.c.bf16 %v363, %v363
    %v870 = vpack.c.bf16 %v388, %v388
    %v871 = vpack.c.bf16 %v413, %v413
    %v872 = vpack.c.bf16 %v438, %v438
    %v873 = vpack.c.bf16 %v463, %v463
    %v874 = vpack.c.bf16 %v488, %v488
    %v875 = vpack.c.bf16 %v513, %v513
    %v876 = vpack.c.bf16 %v538, %v538
    %v877 = vpack.c.bf16 %v563, %v563
    %v878 = vpack.c.bf16 %v588, %v588
    %v879 = vpack.c.bf16 %v613, %v613
    %v880 = vpack.c.bf16 %v638, %v638
    %v881 = vpack.c.bf16 %v663, %v663
    %v882 = vpack.c.bf16 %v688, %v688
    %v883 = vpack.c.bf16 %v713, %v713
    %v884 = vpack.c.bf16 %v738, %v738
    %v885 = vpack.c.bf16 %v763, %v763
    %v886 = vpack.c.bf16 %v788, %v788
    %v887 = vpack.c.bf16 %v813, %v813
    %v888 = vpack.c.bf16 %v838, %v838
    %v889 = vpack.c.bf16 %v863, %v863
    %vm890 = vcmask 64512
    %v892 = vsel %vm890, %v866, 0
    %v895 = vsel %vm890, %v874, 0
    %897 = vmatpush.bf16.xpose.msra.mxu0 0
    %898 = vmatpush.bf16.xpose.msra.mxu0 0
    %899 = vmatpush.bf16.xpose.msra.mxu0 0
    %900 = vmatpush.bf16.xpose.msra.mxu0 0
    %901 = vmatpush.bf16.xpose.msra.mxu0 0
    %902 = vmatpush.bf16.xpose.msra.mxu0 0
    %903 = vmatpush.bf16.xpose.msra.mxu0 0
    %904 = vmatpush.bf16.xpose.msra.mxu0 %v895
    %905 = vmatmul.bf16.gmra.mxu0 %v892
    %v906 = vpop.f32.mrf.mxu0
    %v907 = vadd.f32 0.0, %v906
    %v908 = vpop.f32.mrf.mxu0
    %909 = vdwg.mxu0
    %v911 = vsel %vm890, %v867, 0
    %v914 = vsel %vm890, %v875, 0
    %916 = vmatpush.bf16.xpose.msra.mxu0 0
    %917 = vmatpush.bf16.xpose.msra.mxu0 0
    %918 = vmatpush.bf16.xpose.msra.mxu0 0
    %919 = vmatpush.bf16.xpose.msra.mxu0 0
    %920 = vmatpush.bf16.xpose.msra.mxu0 0
    %921 = vmatpush.bf16.xpose.msra.mxu0 0
    %922 = vmatpush.bf16.xpose.msra.mxu0 0
    %923 = vmatpush.bf16.xpose.msra.mxu0 %v914
    %924 = vmatmul.bf16.gmra.mxu0 %v911
    %v925 = vpop.f32.mrf.mxu0
    %v926 = vadd.f32 0.0, %v925
    %v927 = vpop.f32.mrf.mxu0
    %928 = vdwg.mxu0
    %v930 = vsel %vm890, %v868, 0
    %v933 = vsel %vm890, %v876, 0
    %935 = vmatpush.bf16.xpose.msra.mxu0 0
    %936 = vmatpush.bf16.xpose.msra.mxu0 0
    %937 = vmatpush.bf16.xpose.msra.mxu0 0
    %938 = vmatpush.bf16.xpose.msra.mxu0 0
    %939 = vmatpush.bf16.xpose.msra.mxu0 0
    %940 = vmatpush.bf16.xpose.msra.mxu0 0
    %941 = vmatpush.bf16.xpose.msra.mxu0 0
    %942 = vmatpush.bf16.xpose.msra.mxu0 %v933
    %943 = vmatmul.bf16.gmra.mxu0 %v930
    %v944 = vpop.f32.mrf.mxu0
    %v945 = vadd.f32 0.0, %v944
    %v946 = vpop.f32.mrf.mxu0
    %947 = vdwg.mxu0
    %v949 = vsel %vm890, %v869, 0
    %v952 = vsel %vm890, %v877, 0
    %954 = vmatpush.bf16.xpose.msra.mxu0 0
    %955 = vmatpush.bf16.xpose.msra.mxu0 0
    %956 = vmatpush.bf16.xpose.msra.mxu0 0
    %957 = vmatpush.bf16.xpose.msra.mxu0 0
    %958 = vmatpush.bf16.xpose.msra.mxu0 0
    %959 = vmatpush.bf16.xpose.msra.mxu0 0
    %960 = vmatpush.bf16.xpose.msra.mxu0 0
    %961 = vmatpush.bf16.xpose.msra.mxu0 %v952
    %962 = vmatmul.bf16.gmra.mxu0 %v949
    %v963 = vpop.f32.mrf.mxu0
    %v964 = vadd.f32 0.0, %v963
    %v965 = vpop.f32.mrf.mxu0
    %966 = vdwg.mxu0
    %v968 = vsel %vm890, %v870, 0
    %v971 = vsel %vm890, %v878, 0
    %973 = vmatpush.bf16.xpose.msra.mxu0 0
    %974 = vmatpush.bf16.xpose.msra.mxu0 0
    %975 = vmatpush.bf16.xpose.msra.mxu0 0
    %976 = vmatpush.bf16.xpose.msra.mxu0 0
    %977 = vmatpush.bf16.xpose.msra.mxu0 0
    %978 = vmatpush.bf16.xpose.msra.mxu0 0
    %979 = vmatpush.bf16.xpose.msra.mxu0 0
    %980 = vmatpush.bf16.xpose.msra.mxu0 %v971
    %981 = vmatmul.bf16.gmra.mxu0 %v968
    %v982 = vpop.f32.mrf.mxu0
    %v983 = vadd.f32 0.0, %v982
    %v984 = vpop.f32.mrf.mxu0
    %985 = vdwg.mxu0
    %v987 = vsel %vm890, %v871, 0
    %v990 = vsel %vm890, %v879, 0
    %992 = vmatpush.bf16.xpose.msra.mxu0 0
    %993 = vmatpush.bf16.xpose.msra.mxu0 0
    %994 = vmatpush.bf16.xpose.msra.mxu0 0
    %995 = vmatpush.bf16.xpose.msra.mxu0 0
    %996 = vmatpush.bf16.xpose.msra.mxu0 0
    %997 = vmatpush.bf16.xpose.msra.mxu0 0
    %998 = vmatpush.bf16.xpose.msra.mxu0 0
    %999 = vmatpush.bf16.xpose.msra.mxu0 %v990
    %1000 = vmatmul.bf16.gmra.mxu0 %v987
    %v1001 = vpop.f32.mrf.mxu0
    %v1002 = vadd.f32 0.0, %v1001
    %v1003 = vpop.f32.mrf.mxu0
    %1004 = vdwg.mxu0
    %v1006 = vsel %vm890, %v872, 0
    %v1009 = vsel %vm890, %v880, 0
    %1011 = vmatpush.bf16.xpose.msra.mxu0 0
    %1012 = vmatpush.bf16.xpose.msra.mxu0 0
    %1013 = vmatpush.bf16.xpose.msra.mxu0 0
    %1014 = vmatpush.bf16.xpose.msra.mxu0 0
    %1015 = vmatpush.bf16.xpose.msra.mxu0 0
    %1016 = vmatpush.bf16.xpose.msra.mxu0 0
    %1017 = vmatpush.bf16.xpose.msra.mxu0 0
    %1018 = vmatpush.bf16.xpose.msra.mxu0 %v1009
    %1019 = vmatmul.bf16.gmra.mxu0 %v1006
    %v1020 = vpop.f32.mrf.mxu0
    %v1021 = vadd.f32 0.0, %v1020
    %v1022 = vpop.f32.mrf.mxu0
    %1023 = vdwg.mxu0
    %v1025 = vsel %vm890, %v873, 0
    %v1028 = vsel %vm890, %v881, 0
    %1030 = vmatpush.bf16.xpose.msra.mxu0 0
    %1031 = vmatpush.bf16.xpose.msra.mxu0 0
    %1032 = vmatpush.bf16.xpose.msra.mxu0 0
    %1033 = vmatpush.bf16.xpose.msra.mxu0 0
    %1034 = vmatpush.bf16.xpose.msra.mxu0 0
    %1035 = vmatpush.bf16.xpose.msra.mxu0 0
    %1036 = vmatpush.bf16.xpose.msra.mxu0 0
    %1037 = vmatpush.bf16.xpose.msra.mxu0 %v1028
    %1038 = vmatmul.bf16.gmra.mxu0 %v1025
    %v1039 = vpop.f32.mrf.mxu0
    %v1040 = vadd.f32 0.0, %v1039
    %v1041 = vpop.f32.mrf.mxu0
    %1042 = vdwg.mxu0
    %v1043 = vmul.f32 %v907, 0.35355338
    %v1044 = vmul.f32 %v926, 0.35355338
    %v1045 = vmul.f32 %v945, 0.35355338
    %v1046 = vmul.f32 %v964, 0.35355338
    %v1047 = vmul.f32 %v983, 0.35355338
    %v1048 = vmul.f32 %v1002, 0.35355338
    %v1049 = vmul.f32 %v1021, 0.35355338
    %v1050 = vmul.f32 %v1040, 0.35355338
    %v1059 = vperm.slane %v55, 0
    %v1060 = vperm.slane %v56, 0
    %v1061 = vperm.slane %v57, 0
    %v1062 = vperm.slane %v58, 0
    %v1063 = vperm.slane %v59, 0
    %v1064 = vperm.slane %v60, 0
    %v1065 = vperm.slane %v61, 0
    %v1066 = vperm.slane %v62, 0
    %v1075 = vadd.f32 %v1043, %v1059
    %v1076 = vadd.f32 %v1044, %v1060
    %v1077 = vadd.f32 %v1045, %v1061
    %v1078 = vadd.f32 %v1046, %v1062
    %v1079 = vadd.f32 %v1047, %v1063
    %v1080 = vadd.f32 %v1048, %v1064
    %v1081 = vadd.f32 %v1049, %v1065
    %v1082 = vadd.f32 %v1050, %v1066
    %v1083 = vsel %vm890, %v1075, -inf
    %1084 = vmax.xlane.f32.xlu0 %v1083
    %v1085 = vpop.xlane.xlu0 %1084
    %v1086 = vsel %vm890, %v1076, -inf
    %1087 = vmax.xlane.f32.xlu0 %v1086
    %v1088 = vpop.xlane.xlu0 %1087
    %v1089 = vsel %vm890, %v1077, -inf
    %1090 = vmax.xlane.f32.xlu0 %v1089
    %v1091 = vpop.xlane.xlu0 %1090
    %v1092 = vsel %vm890, %v1078, -inf
    %1093 = vmax.xlane.f32.xlu0 %v1092
    %v1094 = vpop.xlane.xlu0 %1093
    %v1095 = vsel %vm890, %v1079, -inf
    %1096 = vmax.xlane.f32.xlu0 %v1095
    %v1097 = vpop.xlane.xlu0 %1096
    %v1098 = vsel %vm890, %v1080, -inf
    %1099 = vmax.xlane.f32.xlu0 %v1098
    %v1100 = vpop.xlane.xlu0 %1099
    %v1101 = vsel %vm890, %v1081, -inf
    %1102 = vmax.xlane.f32.xlu0 %v1101
    %v1103 = vpop.xlane.xlu0 %1102
    %v1104 = vsel %vm890, %v1082, -inf
    %1105 = vmax.xlane.f32.xlu0 %v1104
    %v1106 = vpop.xlane.xlu0 %1105
    %v1107 = vsub.f32 %v1075, %v1085
    %v1108 = vsub.f32 %v1076, %v1088
    %v1109 = vsub.f32 %v1077, %v1091
    %v1110 = vsub.f32 %v1078, %v1094
    %v1111 = vsub.f32 %v1079, %v1097
    %v1112 = vsub.f32 %v1080, %v1100
    %v1113 = vsub.f32 %v1081, %v1103
    %v1114 = vsub.f32 %v1082, %v1106
    %v1115 = vmul.f32 %v1107, 1.442695
    %v1116 = vpow.pop %v1115
    %v1117 = vmul.f32 %v1108, 1.442695
    %v1118 = vpow.pop %v1117
    %v1119 = vmul.f32 %v1109, 1.442695
    %v1120 = vpow.pop %v1119
    %v1121 = vmul.f32 %v1110, 1.442695
    %v1122 = vpow.pop %v1121
    %v1123 = vmul.f32 %v1111, 1.442695
    %v1124 = vpow.pop %v1123
    %v1125 = vmul.f32 %v1112, 1.442695
    %v1126 = vpow.pop %v1125
    %v1127 = vmul.f32 %v1113, 1.442695
    %v1128 = vpow.pop %v1127
    %v1129 = vmul.f32 %v1114, 1.442695
    %v1130 = vpow.pop %v1129
    %v1131 = vsel %vm890, %v1116, 0.0
    %1132 = vadd.xlane.f32.xlu0 %v1131
    %v1133 = vpop.xlane.xlu0 %1132
    %v1134 = vsel %vm890, %v1118, 0.0
    %1135 = vadd.xlane.f32.xlu0 %v1134
    %v1136 = vpop.xlane.xlu0 %1135
    %v1137 = vsel %vm890, %v1120, 0.0
    %1138 = vadd.xlane.f32.xlu0 %v1137
    %v1139 = vpop.xlane.xlu0 %1138
    %v1140 = vsel %vm890, %v1122, 0.0
    %1141 = vadd.xlane.f32.xlu0 %v1140
    %v1142 = vpop.xlane.xlu0 %1141
    %v1143 = vsel %vm890, %v1124, 0.0
    %1144 = vadd.xlane.f32.xlu0 %v1143
    %v1145 = vpop.xlane.xlu0 %1144
    %v1146 = vsel %vm890, %v1126, 0.0
    %1147 = vadd.xlane.f32.xlu0 %v1146
    %v1148 = vpop.xlane.xlu0 %1147
    %v1149 = vsel %vm890, %v1128, 0.0
    %1150 = vadd.xlane.f32.xlu0 %v1149
    %v1151 = vpop.xlane.xlu0 %1150
    %v1152 = vsel %vm890, %v1130, 0.0
    %1153 = vadd.xlane.f32.xlu0 %v1152
    %v1154 = vpop.xlane.xlu0 %1153
    %v1155 = vrcp.pop %v1133
    %v1156 = vrcp.pop %v1136
    %v1157 = vrcp.pop %v1139
    %v1158 = vrcp.pop %v1142
    %v1159 = vrcp.pop %v1145
    %v1160 = vrcp.pop %v1148
    %v1161 = vrcp.pop %v1151
    %v1162 = vrcp.pop %v1154
    %v1163 = vmul.f32 %v1116, %v1155
    %v1164 = vmul.f32 %v1118, %v1156
    %v1165 = vmul.f32 %v1120, %v1157
    %v1166 = vmul.f32 %v1122, %v1158
    %v1167 = vmul.f32 %v1124, %v1159
    %v1168 = vmul.f32 %v1126, %v1160
    %v1169 = vmul.f32 %v1128, %v1161
    %v1170 = vmul.f32 %v1130, %v1162
    %v1171 = vpack.c.bf16 %v1163, %v1163
    %v1172 = vpack.c.bf16 %v1164, %v1164
    %v1173 = vpack.c.bf16 %v1165, %v1165
    %v1174 = vpack.c.bf16 %v1166, %v1166
    %v1175 = vpack.c.bf16 %v1167, %v1167
    %v1176 = vpack.c.bf16 %v1168, %v1168
    %v1177 = vpack.c.bf16 %v1169, %v1169
    %v1178 = vpack.c.bf16 %v1170, %v1170
    %v1180 = vsel %vm890, %v1171, 0
    %vm1182 = vcmask 1043456
    %v1184 = vsel %vm1182, %v882, 0
    %1186 = vmatpush.bf16.msra.mxu0 0
    %1187 = vmatpush.bf16.msra.mxu0 0
    %1188 = vmatpush.bf16.msra.mxu0 0
    %1189 = vmatpush.bf16.msra.mxu0 0
    %1190 = vmatpush.bf16.msra.mxu0 0
    %1191 = vmatpush.bf16.msra.mxu0 0
    %1192 = vmatpush.bf16.msra.mxu0 0
    %1193 = vmatpush.bf16.msra.mxu0 %v1184
    %1194 = vmatmul.bf16.gmra.mxu0 %v1180
    %v1195 = vpop.f32.mrf.mxu0
    %v1196 = vadd.f32 0.0, %v1195
    %v1197 = vpop.f32.mrf.mxu0
    %1198 = vdwg.mxu0
    %v1200 = vsel %vm890, %v1172, 0
    %v1203 = vsel %vm1182, %v883, 0
    %1205 = vmatpush.bf16.msra.mxu0 0
    %1206 = vmatpush.bf16.msra.mxu0 0
    %1207 = vmatpush.bf16.msra.mxu0 0
    %1208 = vmatpush.bf16.msra.mxu0 0
    %1209 = vmatpush.bf16.msra.mxu0 0
    %1210 = vmatpush.bf16.msra.mxu0 0
    %1211 = vmatpush.bf16.msra.mxu0 0
    %1212 = vmatpush.bf16.msra.mxu0 %v1203
    %1213 = vmatmul.bf16.gmra.mxu0 %v1200
    %v1214 = vpop.f32.mrf.mxu0
    %v1215 = vadd.f32 0.0, %v1214
    %v1216 = vpop.f32.mrf.mxu0
    %1217 = vdwg.mxu0
    %v1219 = vsel %vm890, %v1173, 0
    %v1222 = vsel %vm1182, %v884, 0
    %1224 = vmatpush.bf16.msra.mxu0 0
    %1225 = vmatpush.bf16.msra.mxu0 0
    %1226 = vmatpush.bf16.msra.mxu0 0
    %1227 = vmatpush.bf16.msra.mxu0 0
    %1228 = vmatpush.bf16.msra.mxu0 0
    %1229 = vmatpush.bf16.msra.mxu0 0
    %1230 = vmatpush.bf16.msra.mxu0 0
    %1231 = vmatpush.bf16.msra.mxu0 %v1222
    %1232 = vmatmul.bf16.gmra.mxu0 %v1219
    %v1233 = vpop.f32.mrf.mxu0
    %v1234 = vadd.f32 0.0, %v1233
    %v1235 = vpop.f32.mrf.mxu0
    %1236 = vdwg.mxu0
    %v1238 = vsel %vm890, %v1174, 0
    %v1241 = vsel %vm1182, %v885, 0
    %1243 = vmatpush.bf16.msra.mxu0 0
    %1244 = vmatpush.bf16.msra.mxu0 0
    %1245 = vmatpush.bf16.msra.mxu0 0
    %1246 = vmatpush.bf16.msra.mxu0 0
    %1247 = vmatpush.bf16.msra.mxu0 0
    %1248 = vmatpush.bf16.msra.mxu0 0
    %1249 = vmatpush.bf16.msra.mxu0 0
    %1250 = vmatpush.bf16.msra.mxu0 %v1241
    %1251 = vmatmul.bf16.gmra.mxu0 %v1238
    %v1252 = vpop.f32.mrf.mxu0
    %v1253 = vadd.f32 0.0, %v1252
    %v1254 = vpop.f32.mrf.mxu0
    %1255 = vdwg.mxu0
    %v1257 = vsel %vm890, %v1175, 0
    %v1260 = vsel %vm1182, %v886, 0
    %1262 = vmatpush.bf16.msra.mxu0 0
    %1263 = vmatpush.bf16.msra.mxu0 0
    %1264 = vmatpush.bf16.msra.mxu0 0
    %1265 = vmatpush.bf16.msra.mxu0 0
    %1266 = vmatpush.bf16.msra.mxu0 0
    %1267 = vmatpush.bf16.msra.mxu0 0
    %1268 = vmatpush.bf16.msra.mxu0 0
    %1269 = vmatpush.bf16.msra.mxu0 %v1260
    %1270 = vmatmul.bf16.gmra.mxu0 %v1257
    %v1271 = vpop.f32.mrf.mxu0
    %v1272 = vadd.f32 0.0, %v1271
    %v1273 = vpop.f32.mrf.mxu0
    %1274 = vdwg.mxu0
    %v1276 = vsel %vm890, %v1176, 0
    %v1279 = vsel %vm1182, %v887, 0
    %1281 = vmatpush.bf16.msra.mxu0 0
    %1282 = vmatpush.bf16.msra.mxu0 0
    %1283 = vmatpush.bf16.msra.mxu0 0
    %1284 = vmatpush.bf16.msra.mxu0 0
    %1285 = vmatpush.bf16.msra.mxu0 0
    %1286 = vmatpush.bf16.msra.mxu0 0
    %1287 = vmatpush.bf16.msra.mxu0 0
    %1288 = vmatpush.bf16.msra.mxu0 %v1279
    %1289 = vmatmul.bf16.gmra.mxu0 %v1276
    %v1290 = vpop.f32.mrf.mxu0
    %v1291 = vadd.f32 0.0, %v1290
    %v1292 = vpop.f32.mrf.mxu0
    %1293 = vdwg.mxu0
    %v1295 = vsel %vm890, %v1177, 0
    %v1298 = vsel %vm1182, %v888, 0
    %1300 = vmatpush.bf16.msra.mxu0 0
    %1301 = vmatpush.bf16.msra.mxu0 0
    %1302 = vmatpush.bf16.msra.mxu0 0
    %1303 = vmatpush.bf16.msra.mxu0 0
    %1304 = vmatpush.bf16.msra.mxu0 0
    %1305 = vmatpush.bf16.msra.mxu0 0
    %1306 = vmatpush.bf16.msra.mxu0 0
    %1307 = vmatpush.bf16.msra.mxu0 %v1298
    %1308 = vmatmul.bf16.gmra.mxu0 %v1295
    %v1309 = vpop.f32.mrf.mxu0
    %v1310 = vadd.f32 0.0, %v1309
    %v1311 = vpop.f32.mrf.mxu0
    %1312 = vdwg.mxu0
    %v1314 = vsel %vm890, %v1178, 0
    %v1317 = vsel %vm1182, %v889, 0
    %1319 = vmatpush.bf16.msra.mxu0 0
    %1320 = vmatpush.bf16.msra.mxu0 0
    %1321 = vmatpush.bf16.msra.mxu0 0
    %1322 = vmatpush.bf16.msra.mxu0 0
    %1323 = vmatpush.bf16.msra.mxu0 0
    %1324 = vmatpush.bf16.msra.mxu0 0
    %1325 = vmatpush.bf16.msra.mxu0 0
    %1326 = vmatpush.bf16.msra.mxu0 %v1317
    %1327 = vmatmul.bf16.gmra.mxu0 %v1314
    %v1328 = vpop.f32.mrf.mxu0
    %v1329 = vadd.f32 0.0, %v1328
    %v1330 = vpop.f32.mrf.mxu0
    %1331 = vdwg.mxu0
    %v1332 = vpack.c.bf16 %v1196, %v1196
    %v1333 = vpack.c.bf16 %v1215, %v1215
    %v1334 = vpack.c.bf16 %v1234, %v1234
    %v1335 = vpack.c.bf16 %v1253, %v1253
    %v1336 = vpack.c.bf16 %v1272, %v1272
    %v1337 = vpack.c.bf16 %v1291, %v1291
    %v1338 = vpack.c.bf16 %v1310, %v1310
    %v1339 = vpack.c.bf16 %v1329, %v1329
    %v1340 = vld [vmem:[%s4] sm:$0xf]
    %v1341 = vld [vmem:[%s4 + $0x4] sm:$0xf]
    %v1342 = vld [vmem:[%s4 + $0x8] sm:$0xf]
    %v1343 = vld [vmem:[%s4 + $0xc] sm:$0xf]
    %v1344 = vld [vmem:[%s4 + $0x10] sm:$0xf]
    %v1345 = vld [vmem:[%s4 + $0x14] sm:$0xf]
    %v1346 = vld [vmem:[%s4 + $0x18] sm:$0xf]
    %v1347 = vld [vmem:[%s4 + $0x1c] sm:$0xf]
    %v1349 = vsel %vm890, %v1332, 0
    %v1352 = vsel %vm1182, %v1340, 0
    %1354 = vmatpush.bf16.msra.mxu0 0
    %1355 = vmatpush.bf16.msra.mxu0 0
    %1356 = vmatpush.bf16.msra.mxu0 0
    %1357 = vmatpush.bf16.msra.mxu0 0
    %1358 = vmatpush.bf16.msra.mxu0 0
    %1359 = vmatpush.bf16.msra.mxu0 0
    %1360 = vmatpush.bf16.msra.mxu0 0
    %1361 = vmatpush.bf16.msra.mxu0 %v1352
    %1362 = vmatmul.bf16.gmra.mxu0 %v1349
    %v1363 = vpop.f32.mrf.mxu0
    %v1364 = vadd.f32 0.0, %v1363
    %v1365 = vpop.f32.mrf.mxu0
    %1366 = vdwg.mxu0
    %v1368 = vsel %vm890, %v1333, 0
    %v1371 = vsel %vm1182, %v1341, 0
    %1373 = vmatpush.bf16.msra.mxu0 0
    %1374 = vmatpush.bf16.msra.mxu0 0
    %1375 = vmatpush.bf16.msra.mxu0 0
    %1376 = vmatpush.bf16.msra.mxu0 0
    %1377 = vmatpush.bf16.msra.mxu0 0
    %1378 = vmatpush.bf16.msra.mxu0 0
    %1379 = vmatpush.bf16.msra.mxu0 0
    %1380 = vmatpush.bf16.msra.mxu0 %v1371
    %1381 = vmatmul.bf16.gmra.mxu0 %v1368
    %v1382 = vpop.f32.mrf.mxu0
    %v1383 = vadd.f32 0.0, %v1382
    %v1384 = vpop.f32.mrf.mxu0
    %1385 = vdwg.mxu0
    %v1387 = vsel %vm890, %v1334, 0
    %v1390 = vsel %vm1182, %v1342, 0
    %1392 = vmatpush.bf16.msra.mxu0 0
    %1393 = vmatpush.bf16.msra.mxu0 0
    %1394 = vmatpush.bf16.msra.mxu0 0
    %1395 = vmatpush.bf16.msra.mxu0 0
    %1396 = vmatpush.bf16.msra.mxu0 0
    %1397 = vmatpush.bf16.msra.mxu0 0
    %1398 = vmatpush.bf16.msra.mxu0 0
    %1399 = vmatpush.bf16.msra.mxu0 %v1390
    %1400 = vmatmul.bf16.gmra.mxu0 %v1387
    %v1401 = vpop.f32.mrf.mxu0
    %v1402 = vadd.f32 0.0, %v1401
    %v1403 = vpop.f32.mrf.mxu0
    %1404 = vdwg.mxu0
    %v1406 = vsel %vm890, %v1335, 0
    %v1409 = vsel %vm1182, %v1343, 0
    %1411 = vmatpush.bf16.msra.mxu0 0
    %1412 = vmatpush.bf16.msra.mxu0 0
    %1413 = vmatpush.bf16.msra.mxu0 0
    %1414 = vmatpush.bf16.msra.mxu0 0
    %1415 = vmatpush.bf16.msra.mxu0 0
    %1416 = vmatpush.bf16.msra.mxu0 0
    %1417 = vmatpush.bf16.msra.mxu0 0
    %1418 = vmatpush.bf16.msra.mxu0 %v1409
    %1419 = vmatmul.bf16.gmra.mxu0 %v1406
    %v1420 = vpop.f32.mrf.mxu0
    %v1421 = vadd.f32 0.0, %v1420
    %v1422 = vpop.f32.mrf.mxu0
    %1423 = vdwg.mxu0
    %v1425 = vsel %vm890, %v1336, 0
    %v1428 = vsel %vm1182, %v1344, 0
    %1430 = vmatpush.bf16.msra.mxu0 0
    %1431 = vmatpush.bf16.msra.mxu0 0
    %1432 = vmatpush.bf16.msra.mxu0 0
    %1433 = vmatpush.bf16.msra.mxu0 0
    %1434 = vmatpush.bf16.msra.mxu0 0
    %1435 = vmatpush.bf16.msra.mxu0 0
    %1436 = vmatpush.bf16.msra.mxu0 0
    %1437 = vmatpush.bf16.msra.mxu0 %v1428
    %1438 = vmatmul.bf16.gmra.mxu0 %v1425
    %v1439 = vpop.f32.mrf.mxu0
    %v1440 = vadd.f32 0.0, %v1439
    %v1441 = vpop.f32.mrf.mxu0
    %1442 = vdwg.mxu0
    %v1444 = vsel %vm890, %v1337, 0
    %v1447 = vsel %vm1182, %v1345, 0
    %1449 = vmatpush.bf16.msra.mxu0 0
    %1450 = vmatpush.bf16.msra.mxu0 0
    %1451 = vmatpush.bf16.msra.mxu0 0
    %1452 = vmatpush.bf16.msra.mxu0 0
    %1453 = vmatpush.bf16.msra.mxu0 0
    %1454 = vmatpush.bf16.msra.mxu0 0
    %1455 = vmatpush.bf16.msra.mxu0 0
    %1456 = vmatpush.bf16.msra.mxu0 %v1447
    %1457 = vmatmul.bf16.gmra.mxu0 %v1444
    %v1458 = vpop.f32.mrf.mxu0
    %v1459 = vadd.f32 0.0, %v1458
    %v1460 = vpop.f32.mrf.mxu0
    %1461 = vdwg.mxu0
    %v1463 = vsel %vm890, %v1338, 0
    %v1466 = vsel %vm1182, %v1346, 0
    %1468 = vmatpush.bf16.msra.mxu0 0
    %1469 = vmatpush.bf16.msra.mxu0 0
    %1470 = vmatpush.bf16.msra.mxu0 0
    %1471 = vmatpush.bf16.msra.mxu0 0
    %1472 = vmatpush.bf16.msra.mxu0 0
    %1473 = vmatpush.bf16.msra.mxu0 0
    %1474 = vmatpush.bf16.msra.mxu0 0
    %1475 = vmatpush.bf16.msra.mxu0 %v1466
    %1476 = vmatmul.bf16.gmra.mxu0 %v1463
    %v1477 = vpop.f32.mrf.mxu0
    %v1478 = vadd.f32 0.0, %v1477
    %v1479 = vpop.f32.mrf.mxu0
    %1480 = vdwg.mxu0
    %v1482 = vsel %vm890, %v1339, 0
    %v1485 = vsel %vm1182, %v1347, 0
    %1487 = vmatpush.bf16.msra.mxu0 0
    %1488 = vmatpush.bf16.msra.mxu0 0
    %1489 = vmatpush.bf16.msra.mxu0 0
    %1490 = vmatpush.bf16.msra.mxu0 0
    %1491 = vmatpush.bf16.msra.mxu0 0
    %1492 = vmatpush.bf16.msra.mxu0 0
    %1493 = vmatpush.bf16.msra.mxu0 0
    %1494 = vmatpush.bf16.msra.mxu0 %v1485
    %1495 = vmatmul.bf16.gmra.mxu0 %v1482
    %v1496 = vpop.f32.mrf.mxu0
    %v1497 = vadd.f32 0.0, %v1496
    %v1498 = vpop.f32.mrf.mxu0
    %1499 = vdwg.mxu0
    %v1500 = vadd.f32 %v1364, %v1402
    %v1501 = vadd.f32 %v1383, %v1421
    %v1502 = vadd.f32 %v1500, %v1440
    %v1503 = vadd.f32 %v1501, %v1459
    %v1504 = vadd.f32 %v1502, %v1478
    %v1505 = vadd.f32 %v1503, %v1497
    %v1506 = vld [vmem:[%s5] sm:$0x1]
    %v1508 = vperm.slane %v1506, 0
    %v1510 = vadd.f32 %v1504, %v1508
    %v1511 = vadd.f32 %v1505, %v1508
    %v1512 = vadd.f32 %v63, %v1510
    %v1513 = vadd.f32 %v64, %v1511
    %v1514 = vld [vmem:[%s6] sm:$0x1]
    %v1515 = vld [vmem:[%s7] sm:$0x1]
    %v1516 = vsel %vm271, %v1512, 0.0
    %1517 = vadd.xlane.f32.xlu0 %v1516
    %v1518 = vpop.xlane.xlu0 %1517
    %v1519 = vsel %vm271, %v1513, 0.0
    %1520 = vadd.xlane.f32.xlu0 %v1519
    %v1521 = vpop.xlane.xlu0 %1520
    %v1522 = vrcp.pop 32.0
    %v1523 = vmul.f32 32.0, %v1522
    %v1524 = vsub.f32 1.0, %v1523
    %v1525 = vmul.f32 %v1522, %v1524
    %v1526 = vadd.f32 %v1522, %v1525
    %vm1527 = vweird.f32 %v1522
    %v1528 = vsel %vm1527, %v1522, %v1526
    %v1529 = vmul.f32 %v1518, %v1528
    %v1530 = vmul.f32 %v1521, %v1528
    %v1531 = vsub.f32 %v1512, %v1529
    %v1532 = vsub.f32 %v1513, %v1530
    %v1533 = vmul.f32 %v1531, %v1531
    %v1534 = vmul.f32 %v1532, %v1532
    %v1535 = vsel %vm271, %v1533, 0.0
    %1536 = vadd.xlane.f32.xlu0 %v1535
    %v1537 = vpop.xlane.xlu0 %1536
    %v1538 = vsel %vm271, %v1534, 0.0
    %1539 = vadd.xlane.f32.xlu0 %v1538
    %v1540 = vpop.xlane.xlu0 %1539
    %v1541 = vmul.f32 %v1537, %v1528
    %v1542 = vmul.f32 %v1540, %v1528
    %v1543 = vadd.f32 %v1541, 1e-05
    %v1544 = vadd.f32 %v1542, 1e-05
    %v1545 = vrsqrt.pop %v1543
    %v1546 = vmul.f32 %v1545, %v1543
    %v1547 = vmul.f32 %v1546, %v1545
    %v1548 = vmul.f32 0.5, %v1547
    %v1549 = vsub.f32 1.5, %v1548
    %v1550 = vmul.f32 %v1545, %v1549
    %vm1551 = vweird.f32 %v1543
    %vm1552 = vweird.f32 %v1545
    %vm1553 = vmor %vm1551, %vm1552
    %v1554 = vsel %vm1553, %v1545, %v1550
    %v1555 = vrsqrt.pop %v1544
    %v1556 = vmul.f32 %v1555, %v1544
    %v1557 = vmul.f32 %v1556, %v1555
    %v1558 = vmul.f32 0.5, %v1557
    %v1559 = vsub.f32 1.5, %v1558
    %v1560 = vmul.f32 %v1555, %v1559
    %vm1561 = vweird.f32 %v1544
    %vm1562 = vweird.f32 %v1555
    %vm1563 = vmor %vm1561, %vm1562
    %v1564 = vsel %vm1563, %v1555, %v1560
    %v1565 = vmul.f32 %v1531, %v1554
    %v1566 = vmul.f32 %v1532, %v1564
    %v1568 = vperm.slane %v1514, 0
    %v1570 = vmul.f32 %v1565, %v1568
    %v1571 = vmul.f32 %v1566, %v1568
    %v1573 = vperm.slane %v1515, 0
    %v1575 = vadd.f32 %v1570, %v1573
    %v1576 = vadd.f32 %v1571, %v1573
    %v1577 = vpack.c.bf16 %v1575, %v1575
    %v1578 = vpack.c.bf16 %v1576, %v1576
    %v1579 = vld [vmem:[%s8] sm:$0xf]
    %v1580 = vld [vmem:[%s8 + $0x4] sm:$0xf]
    %v1581 = vld [vmem:[%s8 + $0x8] sm:$0xf]
    %v1582 = vld [vmem:[%s8 + $0xc] sm:$0xf]
    %v1583 = vld [vmem:[%s9] sm:$0x1]
    %v1585 = vperm.slane %v1583, 0
    %v1591 = vunpack.c.l.b16 %v1579
    %v1592 = vunpack.c.l.b16 %v1580
    %v1593 = vunpack.c.l.b16 %v1581
    %v1594 = vunpack.c.l.b16 %v1582
    %v1595 = vpack.c.b16 %v1592, %v1591
    %v1596 = vpack.c.b16 %v1594, %v1593
    %v1600 = vsel %vm271, %v1577, 0
    %1602 = vmatpush.bf16.msra.mxu0 0
    %1603 = vmatpush.bf16.msra.mxu0 0
    %1604 = vmatpush.bf16.msra.mxu0 0
    %1605 = vmatpush.bf16.msra.mxu0 0
    %1606 = vmatpush.bf16.msra.mxu0 0
    %1607 = vmatpush.bf16.msra.mxu0 0
    %1608 = vmatpush.bf16.msra.mxu0 %v1596
    %1609 = vmatpush.bf16.msra.mxu0 %v1595
    %1610 = vmatmul.bf16.gmra.mxu0 %v1600
    %v1611 = vpop.f32.mrf.mxu0
    %v1612 = vadd.f32 %v1585, %v1611
    %v1613 = vpop.f32.mrf.mxu0
    %1614 = vdwg.mxu0
    %v1616 = vsel %vm271, %v1578, 0
    %1618 = vmatpush.bf16.msra.mxu0 0
    %1619 = vmatpush.bf16.msra.mxu0 0
    %1620 = vmatpush.bf16.msra.mxu0 0
    %1621 = vmatpush.bf16.msra.mxu0 0
    %1622 = vmatpush.bf16.msra.mxu0 0
    %1623 = vmatpush.bf16.msra.mxu0 0
    %1624 = vmatpush.bf16.msra.mxu0 %v1596
    %1625 = vmatpush.bf16.msra.mxu0 %v1595
    %1626 = vmatmul.bf16.gmra.mxu0 %v1616
    %v1627 = vpop.f32.mrf.mxu0
    %v1628 = vadd.f32 %v1585, %v1627
    %v1629 = vpop.f32.mrf.mxu0
    %1630 = vdwg.mxu0
    %v1631 = vmax.f32 %v1612, 0.0
    %v1632 = vmax.f32 %v1628, 0.0
    %v1633 = vld [vmem:[%s10] sm:$0xf]
    %v1634 = vld [vmem:[%s10 + $0x4] sm:$0xf]
    %v1635 = vld [vmem:[%s10 + $0x8] sm:$0xf]
    %v1636 = vld [vmem:[%s10 + $0xc] sm:$0xf]
    %v1637 = vld [vmem:[%s10 + $0x10] sm:$0xf]
    %v1638 = vld [vmem:[%s10 + $0x14] sm:$0xf]
    %v1639 = vld [vmem:[%s10 + $0x18] sm:$0xf]
    %v1640 = vld [vmem:[%s10 + $0x1c] sm:$0xf]
    %v1641 = vld [vmem:[%s10 + $0x20] sm:$0xf]
    %v1642 = vld [vmem:[%s10 + $0x24] sm:$0xf]
    %v1643 = vld [vmem:[%s10 + $0x28] sm:$0xf]
    %v1644 = vld [vmem:[%s10 + $0x2c] sm:$0xf]
    %v1645 = vld [vmem:[%s10 + $0x30] sm:$0xf]
    %v1646 = vld [vmem:[%s10 + $0x34] sm:$0xf]
    %v1647 = vld [vmem:[%s10 + $0x38] sm:$0xf]
    %v1648 = vld [vmem:[%s10 + $0x3c] sm:$0xf]
    %v1649 = vpack.c.bf16 %v1631, %v1631
    %v1650 = vpack.c.bf16 %v1632, %v1632
    %v1651 = vld [vmem:[%s11] sm:$0x1]
    %v1653 = vperm.slane %v1651, 0
    %v1671 = vunpack.c.l.b16 %v1633
    %v1672 = vunpack.c.l.b16 %v1634
    %v1673 = vunpack.c.l.b16 %v1635
    %v1674 = vunpack.c.l.b16 %v1636
    %v1675 = vunpack.c.l.b16 %v1637
    %v1676 = vunpack.c.l.b16 %v1638
    %v1677 = vunpack.c.l.b16 %v1639
    %v1678 = vunpack.c.l.b16 %v1640
    %v1679 = vunpack.c.l.b16 %v1641
    %v1680 = vunpack.c.l.b16 %v1642
    %v1681 = vunpack.c.l.b16 %v1643
    %v1682 = vunpack.c.l.b16 %v1644
    %v1683 = vunpack.c.l.b16 %v1645
    %v1684 = vunpack.c.l.b16 %v1646
    %v1685 = vunpack.c.l.b16 %v1647
    %v1686 = vunpack.c.l.b16 %v1648
    %v1687 = vpack.c.b16 %v1672, %v1671
    %v1688 = vpack.c.b16 %v1674, %v1673
    %v1689 = vpack.c.b16 %v1676, %v1675
    %v1690 = vpack.c.b16 %v1678, %v1677
    %v1691 = vpack.c.b16 %v1680, %v1679
    %v1692 = vpack.c.b16 %v1682, %v1681
    %v1693 = vpack.c.b16 %v1684, %v1683
    %v1694 = vpack.c.b16 %v1686, %v1685
    %1703 = vmatpush.bf16.msra.mxu0 %v1694
    %1704 = vmatpush.bf16.msra.mxu0 %v1693
    %1705 = vmatpush.bf16.msra.mxu0 %v1692
    %1706 = vmatpush.bf16.msra.mxu0 %v1691
    %1707 = vmatpush.bf16.msra.mxu0 %v1690
    %1708 = vmatpush.bf16.msra.mxu0 %v1689
    %1709 = vmatpush.bf16.msra.mxu0 %v1688
    %1710 = vmatpush.bf16.msra.mxu0 %v1687
    %1711 = vmatmul.bf16.gmra.mxu0 %v1649
    %v1712 = vpop.f32.mrf.mxu0
    %v1713 = vadd.f32 %v1653, %v1712
    %v1714 = vpop.f32.mrf.mxu0
    %1715 = vdwg.mxu0
    %1716 = vmatpush.bf16.msra.mxu0 %v1694
    %1717 = vmatpush.bf16.msra.mxu0 %v1693
    %1718 = vmatpush.bf16.msra.mxu0 %v1692
    %1719 = vmatpush.bf16.msra.mxu0 %v1691
    %1720 = vmatpush.bf16.msra.mxu0 %v1690
    %1721 = vmatpush.bf16.msra.mxu0 %v1689
    %1722 = vmatpush.bf16.msra.mxu0 %v1688
    %1723 = vmatpush.bf16.msra.mxu0 %v1687
    %1724 = vmatmul.bf16.gmra.mxu0 %v1650
    %v1725 = vpop.f32.mrf.mxu0
    %v1726 = vadd.f32 %v1653, %v1725
    %v1727 = vpop.f32.mrf.mxu0
    %1728 = vdwg.mxu0
    %v1729 = vadd.f32 %v1575, %v1713
    %v1730 = vadd.f32 %v1576, %v1726
    %v1731 = vld [vmem:[%s12] sm:$0x1]
    %v1732 = vld [vmem:[%s13] sm:$0x1]
    %v1733 = vsel %vm271, %v1729, 0.0
    %1734 = vadd.xlane.f32.xlu0 %v1733
    %v1735 = vpop.xlane.xlu0 %1734
    %v1736 = vsel %vm271, %v1730, 0.0
    %1737 = vadd.xlane.f32.xlu0 %v1736
    %v1738 = vpop.xlane.xlu0 %1737
    %v1739 = vmul.f32 %v1735, %v1528
    %v1740 = vmul.f32 %v1738, %v1528
    %v1741 = vsub.f32 %v1729, %v1739
    %v1742 = vsub.f32 %v1730, %v1740
    %v1743 = vmul.f32 %v1741, %v1741
    %v1744 = vmul.f32 %v1742, %v1742
    %v1745 = vsel %vm271, %v1743, 0.0
    %1746 = vadd.xlane.f32.xlu0 %v1745
    %v1747 = vpop.xlane.xlu0 %1746
    %v1748 = vsel %vm271, %v1744, 0.0
    %1749 = vadd.xlane.f32.xlu0 %v1748
    %v1750 = vpop.xlane.xlu0 %1749
    %v1751 = vmul.f32 %v1747, %v1528
    %v1752 = vmul.f32 %v1750, %v1528
    %v1753 = vadd.f32 %v1751, 1e-05
    %v1754 = vadd.f32 %v1752, 1e-05
    %v1755 = vrsqrt.pop %v1753
    %v1756 = vmul.f32 %v1755, %v1753
    %v1757 = vmul.f32 %v1756, %v1755
    %v1758 = vmul.f32 0.5, %v1757
    %v1759 = vsub.f32 1.5, %v1758
    %v1760 = vmul.f32 %v1755, %v1759
    %vm1761 = vweird.f32 %v1753
    %vm1762 = vweird.f32 %v1755
    %vm1763 = vmor %vm1761, %vm1762
    %v1764 = vsel %vm1763, %v1755, %v1760
    %v1765 = vrsqrt.pop %v1754
    %v1766 = vmul.f32 %v1765, %v1754
    %v1767 = vmul.f32 %v1766, %v1765
    %v1768 = vmul.f32 0.5, %v1767
    %v1769 = vsub.f32 1.5, %v1768
    %v1770 = vmul.f32 %v1765, %v1769
    %vm1771 = vweird.f32 %v1754
    %vm1772 = vweird.f32 %v1765
    %vm1773 = vmor %vm1771, %vm1772
    %v1774 = vsel %vm1773, %v1765, %v1770
    %v1775 = vmul.f32 %v1741, %v1764
    %v1776 = vmul.f32 %v1742, %v1774
    %v1778 = vperm.slane %v1731, 0
    %v1780 = vmul.f32 %v1775, %v1778
    %v1781 = vmul.f32 %v1776, %v1778
    %v1783 = vperm.slane %v1732, 0
    %v1785 = vadd.f32 %v1780, %v1783
    %v1786 = vadd.f32 %v1781, %v1783
    %v1787 = vpack.c.bf16 %v1785, %v1785
    %v1788 = vpack.c.bf16 %v1786, %v1786
    %s1789 = scalar_lea.vmem %s2, 384
    %v1790 = vld [vmem:[%s1789] sm:$0xf]
    %v1791 = vld [vmem:[%s1789 + $0x4] sm:$0xf]
    %v1792 = vld [vmem:[%s1789 + $0x8] sm:$0xf]
    %v1793 = vld [vmem:[%s1789 + $0xc] sm:$0xf]
    %v1794 = vld [vmem:[%s1789 + $0x10] sm:$0xf]
    %v1795 = vld [vmem:[%s1789 + $0x14] sm:$0xf]
    %v1796 = vld [vmem:[%s1789 + $0x18] sm:$0xf]
    %v1797 = vld [vmem:[%s1789 + $0x1c] sm:$0xf]
    %v1798 = vld [vmem:[%s1789 + $0x20] sm:$0xf]
    %v1799 = vld [vmem:[%s1789 + $0x24] sm:$0xf]
    %v1800 = vld [vmem:[%s1789 + $0x28] sm:$0xf]
    %v1801 = vld [vmem:[%s1789 + $0x2c] sm:$0xf]
    %v1802 = vld [vmem:[%s1789 + $0x30] sm:$0xf]
    %v1803 = vld [vmem:[%s1789 + $0x34] sm:$0xf]
    %v1804 = vld [vmem:[%s1789 + $0x38] sm:$0xf]
    %v1805 = vld [vmem:[%s1789 + $0x3c] sm:$0xf]
    %v1806 = vld [vmem:[%s1789 + $0x40] sm:$0xf]
    %v1807 = vld [vmem:[%s1789 + $0x44] sm:$0xf]
    %v1808 = vld [vmem:[%s1789 + $0x48] sm:$0xf]
    %v1809 = vld [vmem:[%s1789 + $0x4c] sm:$0xf]
    %v1810 = vld [vmem:[%s1789 + $0x50] sm:$0xf]
    %v1811 = vld [vmem:[%s1789 + $0x54] sm:$0xf]
    %v1812 = vld [vmem:[%s1789 + $0x58] sm:$0xf]
    %v1813 = vld [vmem:[%s1789 + $0x5c] sm:$0xf]
    %v1814 = vld [vmem:[%s1789 + $0x60] sm:$0xf]
    %v1815 = vld [vmem:[%s1789 + $0x64] sm:$0xf]
    %v1816 = vld [vmem:[%s1789 + $0x68] sm:$0xf]
    %v1817 = vld [vmem:[%s1789 + $0x6c] sm:$0xf]
    %v1818 = vld [vmem:[%s1789 + $0x70] sm:$0xf]
    %v1819 = vld [vmem:[%s1789 + $0x74] sm:$0xf]
    %v1820 = vld [vmem:[%s1789 + $0x78] sm:$0xf]
    %v1821 = vld [vmem:[%s1789 + $0x7c] sm:$0xf]
    %v1822 = vld [vmem:[%s1789 + $0x80] sm:$0xf]
    %v1823 = vld [vmem:[%s1789 + $0x84] sm:$0xf]
    %v1824 = vld [vmem:[%s1789 + $0x88] sm:$0xf]
    %v1825 = vld [vmem:[%s1789 + $0x8c] sm:$0xf]
    %v1826 = vld [vmem:[%s1789 + $0x90] sm:$0xf]
    %v1827 = vld [vmem:[%s1789 + $0x94] sm:$0xf]
    %v1828 = vld [vmem:[%s1789 + $0x98] sm:$0xf]
    %v1829 = vld [vmem:[%s1789 + $0x9c] sm:$0xf]
    %v1830 = vld [vmem:[%s1789 + $0xa0] sm:$0xf]
    %v1831 = vld [vmem:[%s1789 + $0xa4] sm:$0xf]
    %v1832 = vld [vmem:[%s1789 + $0xa8] sm:$0xf]
    %v1833 = vld [vmem:[%s1789 + $0xac] sm:$0xf]
    %v1834 = vld [vmem:[%s1789 + $0xb0] sm:$0xf]
    %v1835 = vld [vmem:[%s1789 + $0xb4] sm:$0xf]
    %v1836 = vld [vmem:[%s1789 + $0xb8] sm:$0xf]
    %v1837 = vld [vmem:[%s1789 + $0xbc] sm:$0xf]
    %v1838 = vld [vmem:[%s1789 + $0xc0] sm:$0xf]
    %v1839 = vld [vmem:[%s1789 + $0xc4] sm:$0xf]
    %v1840 = vld [vmem:[%s1789 + $0xc8] sm:$0xf]
    %v1841 = vld [vmem:[%s1789 + $0xcc] sm:$0xf]
    %v1842 = vld [vmem:[%s1789 + $0xd0] sm:$0xf]
    %v1843 = vld [vmem:[%s1789 + $0xd4] sm:$0xf]
    %v1844 = vld [vmem:[%s1789 + $0xd8] sm:$0xf]
    %v1845 = vld [vmem:[%s1789 + $0xdc] sm:$0xf]
    %v1846 = vld [vmem:[%s1789 + $0xe0] sm:$0xf]
    %v1847 = vld [vmem:[%s1789 + $0xe4] sm:$0xf]
    %v1848 = vld [vmem:[%s1789 + $0xe8] sm:$0xf]
    %v1849 = vld [vmem:[%s1789 + $0xec] sm:$0xf]
    %v1850 = vld [vmem:[%s1789 + $0xf0] sm:$0xf]
    %v1851 = vld [vmem:[%s1789 + $0xf4] sm:$0xf]
    %v1852 = vld [vmem:[%s1789 + $0xf8] sm:$0xf]
    %v1853 = vld [vmem:[%s1789 + $0xfc] sm:$0xf]
    %v1854 = vld [vmem:[%s1789 + $0x100] sm:$0xf]
    %v1855 = vld [vmem:[%s1789 + $0x104] sm:$0xf]
    %v1856 = vld [vmem:[%s1789 + $0x108] sm:$0xf]
    %v1857 = vld [vmem:[%s1789 + $0x10c] sm:$0xf]
    %v1858 = vld [vmem:[%s1789 + $0x110] sm:$0xf]
    %v1859 = vld [vmem:[%s1789 + $0x114] sm:$0xf]
    %v1860 = vld [vmem:[%s1789 + $0x118] sm:$0xf]
    %v1861 = vld [vmem:[%s1789 + $0x11c] sm:$0xf]
    %v1862 = vld [vmem:[%s1789 + $0x120] sm:$0xf]
    %v1863 = vld [vmem:[%s1789 + $0x124] sm:$0xf]
    %v1864 = vld [vmem:[%s1789 + $0x128] sm:$0xf]
    %v1865 = vld [vmem:[%s1789 + $0x12c] sm:$0xf]
    %v1866 = vld [vmem:[%s1789 + $0x130] sm:$0xf]
    %v1867 = vld [vmem:[%s1789 + $0x134] sm:$0xf]
    %v1868 = vld [vmem:[%s1789 + $0x138] sm:$0xf]
    %v1869 = vld [vmem:[%s1789 + $0x13c] sm:$0xf]
    %v1870 = vld [vmem:[%s1789 + $0x140] sm:$0xf]
    %v1871 = vld [vmem:[%s1789 + $0x144] sm:$0xf]
    %v1872 = vld [vmem:[%s1789 + $0x148] sm:$0xf]
    %v1873 = vld [vmem:[%s1789 + $0x14c] sm:$0xf]
    %v1874 = vld [vmem:[%s1789 + $0x150] sm:$0xf]
    %v1875 = vld [vmem:[%s1789 + $0x154] sm:$0xf]
    %v1876 = vld [vmem:[%s1789 + $0x158] sm:$0xf]
    %v1877 = vld [vmem:[%s1789 + $0x15c] sm:$0xf]
    %v1878 = vld [vmem:[%s1789 + $0x160] sm:$0xf]
    %v1879 = vld [vmem:[%s1789 + $0x164] sm:$0xf]
    %v1880 = vld [vmem:[%s1789 + $0x168] sm:$0xf]
    %v1881 = vld [vmem:[%s1789 + $0x16c] sm:$0xf]
    %v1882 = vld [vmem:[%s1789 + $0x170] sm:$0xf]
    %v1883 = vld [vmem:[%s1789 + $0x174] sm:$0xf]
    %v1884 = vld [vmem:[%s1789 + $0x178] sm:$0xf]
    %v1885 = vld [vmem:[%s1789 + $0x17c] sm:$0xf]
    %s1886 = scalar_lea.vmem %s3, 24
    %v1887 = vld [vmem:[%s1886] sm:$0x1]
    %v1888 = vld [vmem:[%s1886 + $0x1] sm:$0x1]
    %v1889 = vld [vmem:[%s1886 + $0x2] sm:$0x1]
    %v1890 = vld [vmem:[%s1886 + $0x3] sm:$0x1]
    %v1891 = vld [vmem:[%s1886 + $0x4] sm:$0x1]
    %v1892 = vld [vmem:[%s1886 + $0x5] sm:$0x1]
    %v1893 = vld [vmem:[%s1886 + $0x6] sm:$0x1]
    %v1894 = vld [vmem:[%s1886 + $0x7] sm:$0x1]
    %v1895 = vld [vmem:[%s1886 + $0x8] sm:$0x1]
    %v1896 = vld [vmem:[%s1886 + $0x9] sm:$0x1]
    %v1897 = vld [vmem:[%s1886 + $0xa] sm:$0x1]
    %v1898 = vld [vmem:[%s1886 + $0xb] sm:$0x1]
    %v1899 = vld [vmem:[%s1886 + $0xc] sm:$0x1]
    %v1900 = vld [vmem:[%s1886 + $0xd] sm:$0x1]
    %v1901 = vld [vmem:[%s1886 + $0xe] sm:$0x1]
    %v1902 = vld [vmem:[%s1886 + $0xf] sm:$0x1]
    %v1903 = vld [vmem:[%s1886 + $0x10] sm:$0x1]
    %v1904 = vld [vmem:[%s1886 + $0x11] sm:$0x1]
    %v1905 = vld [vmem:[%s1886 + $0x12] sm:$0x1]
    %v1906 = vld [vmem:[%s1886 + $0x13] sm:$0x1]
    %v1907 = vld [vmem:[%s1886 + $0x14] sm:$0x1]
    %v1908 = vld [vmem:[%s1886 + $0x15] sm:$0x1]
    %v1909 = vld [vmem:[%s1886 + $0x16] sm:$0x1]
    %v1910 = vld [vmem:[%s1886 + $0x17] sm:$0x1]
    %v1935 = vperm.slane %v1887, 0
    %v1936 = vperm.slane %v1888, 0
    %v1937 = vperm.slane %v1889, 0
    %v1938 = vperm.slane %v1890, 0
    %v1939 = vperm.slane %v1891, 0
    %v1940 = vperm.slane %v1892, 0
    %v1941 = vperm.slane %v1893, 0
    %v1942 = vperm.slane %v1894, 0
    %v1943 = vperm.slane %v1895, 0
    %v1944 = vperm.slane %v1896, 0
    %v1945 = vperm.slane %v1897, 0
    %v1946 = vperm.slane %v1898, 0
    %v1947 = vperm.slane %v1899, 0
    %v1948 = vperm.slane %v1900, 0
    %v1949 = vperm.slane %v1901, 0
    %v1950 = vperm.slane %v1902, 0
    %v1951 = vperm.slane %v1903, 0
    %v1952 = vperm.slane %v1904, 0
    %v1953 = vperm.slane %v1905, 0
    %v1954 = vperm.slane %v1906, 0
    %v1955 = vperm.slane %v1907, 0
    %v1956 = vperm.slane %v1908, 0
    %v1957 = vperm.slane %v1909, 0
    %v1958 = vperm.slane %v1910, 0
    %v1987 = vunpack.c.l.b16 %v1790
    %v1988 = vunpack.c.l.b16 %v1791
    %v1989 = vunpack.c.l.b16 %v1792
    %v1990 = vunpack.c.l.b16 %v1793
    %v1991 = vpack.c.b16 %v1988, %v1987
    %v1992 = vpack.c.b16 %v1990, %v1989
    %v1996 = vsel %vm271, %v1787, 0
    %1998 = vmatpush.bf16.msra.mxu0 0
    %1999 = vmatpush.bf16.msra.mxu0 0
    %2000 = vmatpush.bf16.msra.mxu0 0
    %2001 = vmatpush.bf16.msra.mxu0 0
    %2002 = vmatpush.bf16.msra.mxu0 0
    %2003 = vmatpush.bf16.msra.mxu0 0
    %2004 = vmatpush.bf16.msra.mxu0 %v1992
    %2005 = vmatpush.bf16.msra.mxu0 %v1991
    %2006 = vmatmul.bf16.gmra.mxu0 %v1996
    %v2007 = vpop.f32.mrf.mxu0
    %v2008 = vadd.f32 %v1935, %v2007
    %v2009 = vpop.f32.mrf.mxu0
    %2010 = vdwg.mxu0
    %v2015 = vunpack.c.l.b16 %v1794
    %v2016 = vunpack.c.l.b16 %v1795
    %v2017 = vunpack.c.l.b16 %v1796
    %v2018 = vunpack.c.l.b16 %v1797
    %v2019 = vpack.c.b16 %v2016, %v2015
    %v2020 = vpack.c.b16 %v2018, %v2017
    %v2024 = vsel %vm271, %v1788, 0
    %2026 = vmatpush.bf16.msra.mxu0 0
    %2027 = vmatpush.bf16.msra.mxu0 0
    %2028 = vmatpush.bf16.msra.mxu0 0
    %2029 = vmatpush.bf16.msra.mxu0 0
    %2030 = vmatpush.bf16.msra.mxu0 0
    %2031 = vmatpush.bf16.msra.mxu0 0
    %2032 = vmatpush.bf16.msra.mxu0 %v2020
    %2033 = vmatpush.bf16.msra.mxu0 %v2019
    %2034 = vmatmul.bf16.gmra.mxu0 %v2024
    %v2035 = vpop.f32.mrf.mxu0
    %v2036 = vadd.f32 %v1936, %v2035
    %v2037 = vpop.f32.mrf.mxu0
    %2038 = vdwg.mxu0
    %v2043 = vunpack.c.l.b16 %v1798
    %v2044 = vunpack.c.l.b16 %v1799
    %v2045 = vunpack.c.l.b16 %v1800
    %v2046 = vunpack.c.l.b16 %v1801
    %v2047 = vpack.c.b16 %v2044, %v2043
    %v2048 = vpack.c.b16 %v2046, %v2045
    %2051 = vmatpush.bf16.msra.mxu0 0
    %2052 = vmatpush.bf16.msra.mxu0 0
    %2053 = vmatpush.bf16.msra.mxu0 0
    %2054 = vmatpush.bf16.msra.mxu0 0
    %2055 = vmatpush.bf16.msra.mxu0 0
    %2056 = vmatpush.bf16.msra.mxu0 0
    %2057 = vmatpush.bf16.msra.mxu0 %v2048
    %2058 = vmatpush.bf16.msra.mxu0 %v2047
    %2059 = vmatmul.bf16.gmra.mxu0 %v1996
    %v2060 = vpop.f32.mrf.mxu0
    %v2061 = vadd.f32 %v1937, %v2060
    %v2062 = vpop.f32.mrf.mxu0
    %2063 = vdwg.mxu0
    %v2068 = vunpack.c.l.b16 %v1802
    %v2069 = vunpack.c.l.b16 %v1803
    %v2070 = vunpack.c.l.b16 %v1804
    %v2071 = vunpack.c.l.b16 %v1805
    %v2072 = vpack.c.b16 %v2069, %v2068
    %v2073 = vpack.c.b16 %v2071, %v2070
    %2076 = vmatpush.bf16.msra.mxu0 0
    %2077 = vmatpush.bf16.msra.mxu0 0
    %2078 = vmatpush.bf16.msra.mxu0 0
    %2079 = vmatpush.bf16.msra.mxu0 0
    %2080 = vmatpush.bf16.msra.mxu0 0
    %2081 = vmatpush.bf16.msra.mxu0 0
    %2082 = vmatpush.bf16.msra.mxu0 %v2073
    %2083 = vmatpush.bf16.msra.mxu0 %v2072
    %2084 = vmatmul.bf16.gmra.mxu0 %v2024
    %v2085 = vpop.f32.mrf.mxu0
    %v2086 = vadd.f32 %v1938, %v2085
    %v2087 = vpop.f32.mrf.mxu0
    %2088 = vdwg.mxu0
    %v2093 = vunpack.c.l.b16 %v1806
    %v2094 = vunpack.c.l.b16 %v1807
    %v2095 = vunpack.c.l.b16 %v1808
    %v2096 = vunpack.c.l.b16 %v1809
    %v2097 = vpack.c.b16 %v2094, %v2093
    %v2098 = vpack.c.b16 %v2096, %v2095
    %2101 = vmatpush.bf16.msra.mxu0 0
    %2102 = vmatpush.bf16.msra.mxu0 0
    %2103 = vmatpush.bf16.msra.mxu0 0
    %2104 = vmatpush.bf16.msra.mxu0 0
    %2105 = vmatpush.bf16.msra.mxu0 0
    %2106 = vmatpush.bf16.msra.mxu0 0
    %2107 = vmatpush.bf16.msra.mxu0 %v2098
    %2108 = vmatpush.bf16.msra.mxu0 %v2097
    %2109 = vmatmul.bf16.gmra.mxu0 %v1996
    %v2110 = vpop.f32.mrf.mxu0
    %v2111 = vadd.f32 %v1939, %v2110
    %v2112 = vpop.f32.mrf.mxu0
    %2113 = vdwg.mxu0
    %v2118 = vunpack.c.l.b16 %v1810
    %v2119 = vunpack.c.l.b16 %v1811
    %v2120 = vunpack.c.l.b16 %v1812
    %v2121 = vunpack.c.l.b16 %v1813
    %v2122 = vpack.c.b16 %v2119, %v2118
    %v2123 = vpack.c.b16 %v2121, %v2120
    %2126 = vmatpush.bf16.msra.mxu0 0
    %2127 = vmatpush.bf16.msra.mxu0 0
    %2128 = vmatpush.bf16.msra.mxu0 0
    %2129 = vmatpush.bf16.msra.mxu0 0
    %2130 = vmatpush.bf16.msra.mxu0 0
    %2131 = vmatpush.bf16.msra.mxu0 0
    %2132 = vmatpush.bf16.msra.mxu0 %v2123
    %2133 = vmatpush.bf16.msra.mxu0 %v2122
    %2134 = vmatmul.bf16.gmra.mxu0 %v2024
    %v2135 = vpop.f32.mrf.mxu0
    %v2136 = vadd.f32 %v1940, %v2135
    %v2137 = vpop.f32.mrf.mxu0
    %2138 = vdwg.mxu0
    %v2143 = vunpack.c.l.b16 %v1814
    %v2144 = vunpack.c.l.b16 %v1815
    %v2145 = vunpack.c.l.b16 %v1816
    %v2146 = vunpack.c.l.b16 %v1817
    %v2147 = vpack.c.b16 %v2144, %v2143
    %v2148 = vpack.c.b16 %v2146, %v2145
    %2151 = vmatpush.bf16.msra.mxu0 0
    %2152 = vmatpush.bf16.msra.mxu0 0
    %2153 = vmatpush.bf16.msra.mxu0 0
    %2154 = vmatpush.bf16.msra.mxu0 0
    %2155 = vmatpush.bf16.msra.mxu0 0
    %2156 = vmatpush.bf16.msra.mxu0 0
    %2157 = vmatpush.bf16.msra.mxu0 %v2148
    %2158 = vmatpush.bf16.msra.mxu0 %v2147
    %2159 = vmatmul.bf16.gmra.mxu0 %v1996
    %v2160 = vpop.f32.mrf.mxu0
    %v2161 = vadd.f32 %v1941, %v2160
    %v2162 = vpop.f32.mrf.mxu0
    %2163 = vdwg.mxu0
    %v2168 = vunpack.c.l.b16 %v1818
    %v2169 = vunpack.c.l.b16 %v1819
    %v2170 = vunpack.c.l.b16 %v1820
    %v2171 = vunpack.c.l.b16 %v1821
    %v2172 = vpack.c.b16 %v2169, %v2168
    %v2173 = vpack.c.b16 %v2171, %v2170
    %2176 = vmatpush.bf16.msra.mxu0 0
    %2177 = vmatpush.bf16.msra.mxu0 0
    %2178 = vmatpush.bf16.msra.mxu0 0
    %2179 = vmatpush.bf16.msra.mxu0 0
    %2180 = vmatpush.bf16.msra.mxu0 0
    %2181 = vmatpush.bf16.msra.mxu0 0
    %2182 = vmatpush.bf16.msra.mxu0 %v2173
    %2183 = vmatpush.bf16.msra.mxu0 %v2172
    %2184 = vmatmul.bf16.gmra.mxu0 %v2024
    %v2185 = vpop.f32.mrf.mxu0
    %v2186 = vadd.f32 %v1942, %v2185
    %v2187 = vpop.f32.mrf.mxu0
    %2188 = vdwg.mxu0
    %v2193 = vunpack.c.l.b16 %v1822
    %v2194 = vunpack.c.l.b16 %v1823
    %v2195 = vunpack.c.l.b16 %v1824
    %v2196 = vunpack.c.l.b16 %v1825
    %v2197 = vpack.c.b16 %v2194, %v2193
    %v2198 = vpack.c.b16 %v2196, %v2195
    %2201 = vmatpush.bf16.msra.mxu0 0
    %2202 = vmatpush.bf16.msra.mxu0 0
    %2203 = vmatpush.bf16.msra.mxu0 0
    %2204 = vmatpush.bf16.msra.mxu0 0
    %2205 = vmatpush.bf16.msra.mxu0 0
    %2206 = vmatpush.bf16.msra.mxu0 0
    %2207 = vmatpush.bf16.msra.mxu0 %v2198
    %2208 = vmatpush.bf16.msra.mxu0 %v2197
    %2209 = vmatmul.bf16.gmra.mxu0 %v1996
    %v2210 = vpop.f32.mrf.mxu0
    %v2211 = vadd.f32 %v1943, %v2210
    %v2212 = vpop.f32.mrf.mxu0
    %2213 = vdwg.mxu0
    %v2218 = vunpack.c.l.b16 %v1826
    %v2219 = vunpack.c.l.b16 %v1827
    %v2220 = vunpack.c.l.b16 %v1828
    %v2221 = vunpack.c.l.b16 %v1829
    %v2222 = vpack.c.b16 %v2219, %v2218
    %v2223 = vpack.c.b16 %v2221, %v2220
    %2226 = vmatpush.bf16.msra.mxu0 0
    %2227 = vmatpush.bf16.msra.mxu0 0
    %2228 = vmatpush.bf16.msra.mxu0 0
    %2229 = vmatpush.bf16.msra.mxu0 0
    %2230 = vmatpush.bf16.msra.mxu0 0
    %2231 = vmatpush.bf16.msra.mxu0 0
    %2232 = vmatpush.bf16.msra.mxu0 %v2223
    %2233 = vmatpush.bf16.msra.mxu0 %v2222
    %2234 = vmatmul.bf16.gmra.mxu0 %v2024
    %v2235 = vpop.f32.mrf.mxu0
    %v2236 = vadd.f32 %v1944, %v2235
    %v2237 = vpop.f32.mrf.mxu0
    %2238 = vdwg.mxu0
    %v2243 = vunpack.c.l.b16 %v1830
    %v2244 = vunpack.c.l.b16 %v1831
    %v2245 = vunpack.c.l.b16 %v1832
    %v2246 = vunpack.c.l.b16 %v1833
    %v2247 = vpack.c.b16 %v2244, %v2243
    %v2248 = vpack.c.b16 %v2246, %v2245
    %2251 = vmatpush.bf16.msra.mxu0 0
    %2252 = vmatpush.bf16.msra.mxu0 0
    %2253 = vmatpush.bf16.msra.mxu0 0
    %2254 = vmatpush.bf16.msra.mxu0 0
    %2255 = vmatpush.bf16.msra.mxu0 0
    %2256 = vmatpush.bf16.msra.mxu0 0
    %2257 = vmatpush.bf16.msra.mxu0 %v2248
    %2258 = vmatpush.bf16.msra.mxu0 %v2247
    %2259 = vmatmul.bf16.gmra.mxu0 %v1996
    %v2260 = vpop.f32.mrf.mxu0
    %v2261 = vadd.f32 %v1945, %v2260
    %v2262 = vpop.f32.mrf.mxu0
    %2263 = vdwg.mxu0
    %v2268 = vunpack.c.l.b16 %v1834
    %v2269 = vunpack.c.l.b16 %v1835
    %v2270 = vunpack.c.l.b16 %v1836
    %v2271 = vunpack.c.l.b16 %v1837
    %v2272 = vpack.c.b16 %v2269, %v2268
    %v2273 = vpack.c.b16 %v2271, %v2270
    %2276 = vmatpush.bf16.msra.mxu0 0
    %2277 = vmatpush.bf16.msra.mxu0 0
    %2278 = vmatpush.bf16.msra.mxu0 0
    %2279 = vmatpush.bf16.msra.mxu0 0
    %2280 = vmatpush.bf16.msra.mxu0 0
    %2281 = vmatpush.bf16.msra.mxu0 0
    %2282 = vmatpush.bf16.msra.mxu0 %v2273
    %2283 = vmatpush.bf16.msra.mxu0 %v2272
    %2284 = vmatmul.bf16.gmra.mxu0 %v2024
    %v2285 = vpop.f32.mrf.mxu0
    %v2286 = vadd.f32 %v1946, %v2285
    %v2287 = vpop.f32.mrf.mxu0
    %2288 = vdwg.mxu0
    %v2293 = vunpack.c.l.b16 %v1838
    %v2294 = vunpack.c.l.b16 %v1839
    %v2295 = vunpack.c.l.b16 %v1840
    %v2296 = vunpack.c.l.b16 %v1841
    %v2297 = vpack.c.b16 %v2294, %v2293
    %v2298 = vpack.c.b16 %v2296, %v2295
    %2301 = vmatpush.bf16.msra.mxu0 0
    %2302 = vmatpush.bf16.msra.mxu0 0
    %2303 = vmatpush.bf16.msra.mxu0 0
    %2304 = vmatpush.bf16.msra.mxu0 0
    %2305 = vmatpush.bf16.msra.mxu0 0
    %2306 = vmatpush.bf16.msra.mxu0 0
    %2307 = vmatpush.bf16.msra.mxu0 %v2298
    %2308 = vmatpush.bf16.msra.mxu0 %v2297
    %2309 = vmatmul.bf16.gmra.mxu0 %v1996
    %v2310 = vpop.f32.mrf.mxu0
    %v2311 = vadd.f32 %v1947, %v2310
    %v2312 = vpop.f32.mrf.mxu0
    %2313 = vdwg.mxu0
    %v2318 = vunpack.c.l.b16 %v1842
    %v2319 = vunpack.c.l.b16 %v1843
    %v2320 = vunpack.c.l.b16 %v1844
    %v2321 = vunpack.c.l.b16 %v1845
    %v2322 = vpack.c.b16 %v2319, %v2318
    %v2323 = vpack.c.b16 %v2321, %v2320
    %2326 = vmatpush.bf16.msra.mxu0 0
    %2327 = vmatpush.bf16.msra.mxu0 0
    %2328 = vmatpush.bf16.msra.mxu0 0
    %2329 = vmatpush.bf16.msra.mxu0 0
    %2330 = vmatpush.bf16.msra.mxu0 0
    %2331 = vmatpush.bf16.msra.mxu0 0
    %2332 = vmatpush.bf16.msra.mxu0 %v2323
    %2333 = vmatpush.bf16.msra.mxu0 %v2322
    %2334 = vmatmul.bf16.gmra.mxu0 %v2024
    %v2335 = vpop.f32.mrf.mxu0
    %v2336 = vadd.f32 %v1948, %v2335
    %v2337 = vpop.f32.mrf.mxu0
    %2338 = vdwg.mxu0
    %v2343 = vunpack.c.l.b16 %v1846
    %v2344 = vunpack.c.l.b16 %v1847
    %v2345 = vunpack.c.l.b16 %v1848
    %v2346 = vunpack.c.l.b16 %v1849
    %v2347 = vpack.c.b16 %v2344, %v2343
    %v2348 = vpack.c.b16 %v2346, %v2345
    %2351 = vmatpush.bf16.msra.mxu0 0
    %2352 = vmatpush.bf16.msra.mxu0 0
    %2353 = vmatpush.bf16.msra.mxu0 0
    %2354 = vmatpush.bf16.msra.mxu0 0
    %2355 = vmatpush.bf16.msra.mxu0 0
    %2356 = vmatpush.bf16.msra.mxu0 0
    %2357 = vmatpush.bf16.msra.mxu0 %v2348
    %2358 = vmatpush.bf16.msra.mxu0 %v2347
    %2359 = vmatmul.bf16.gmra.mxu0 %v1996
    %v2360 = vpop.f32.mrf.mxu0
    %v2361 = vadd.f32 %v1949, %v2360
    %v2362 = vpop.f32.mrf.mxu0
    %2363 = vdwg.mxu0
    %v2368 = vunpack.c.l.b16 %v1850
    %v2369 = vunpack.c.l.b16 %v1851
    %v2370 = vunpack.c.l.b16 %v1852
    %v2371 = vunpack.c.l.b16 %v1853
    %v2372 = vpack.c.b16 %v2369, %v2368
    %v2373 = vpack.c.b16 %v2371, %v2370
    %2376 = vmatpush.bf16.msra.mxu0 0
    %2377 = vmatpush.bf16.msra.mxu0 0
    %2378 = vmatpush.bf16.msra.mxu0 0
    %2379 = vmatpush.bf16.msra.mxu0 0
    %2380 = vmatpush.bf16.msra.mxu0 0
    %2381 = vmatpush.bf16.msra.mxu0 0
    %2382 = vmatpush.bf16.msra.mxu0 %v2373
    %2383 = vmatpush.bf16.msra.mxu0 %v2372
    %2384 = vmatmul.bf16.gmra.mxu0 %v2024
    %v2385 = vpop.f32.mrf.mxu0
    %v2386 = vadd.f32 %v1950, %v2385
    %v2387 = vpop.f32.mrf.mxu0
    %2388 = vdwg.mxu0
    %v2393 = vunpack.c.l.b16 %v1854
    %v2394 = vunpack.c.l.b16 %v1855
    %v2395 = vunpack.c.l.b16 %v1856
    %v2396 = vunpack.c.l.b16 %v1857
    %v2397 = vpack.c.b16 %v2394, %v2393
    %v2398 = vpack.c.b16 %v2396, %v2395
    %2401 = vmatpush.bf16.msra.mxu0 0
    %2402 = vmatpush.bf16.msra.mxu0 0
    %2403 = vmatpush.bf16.msra.mxu0 0
    %2404 = vmatpush.bf16.msra.mxu0 0
    %2405 = vmatpush.bf16.msra.mxu0 0
    %2406 = vmatpush.bf16.msra.mxu0 0
    %2407 = vmatpush.bf16.msra.mxu0 %v2398
    %2408 = vmatpush.bf16.msra.mxu0 %v2397
    %2409 = vmatmul.bf16.gmra.mxu0 %v1996
    %v2410 = vpop.f32.mrf.mxu0
    %v2411 = vadd.f32 %v1951, %v2410
    %v2412 = vpop.f32.mrf.mxu0
    %2413 = vdwg.mxu0
    %v2418 = vunpack.c.l.b16 %v1858
    %v2419 = vunpack.c.l.b16 %v1859
    %v2420 = vunpack.c.l.b16 %v1860
    %v2421 = vunpack.c.l.b16 %v1861
    %v2422 = vpack.c.b16 %v2419, %v2418
    %v2423 = vpack.c.b16 %v2421, %v2420
    %2426 = vmatpush.bf16.msra.mxu0 0
    %2427 = vmatpush.bf16.msra.mxu0 0
    %2428 = vmatpush.bf16.msra.mxu0 0
    %2429 = vmatpush.bf16.msra.mxu0 0
    %2430 = vmatpush.bf16.msra.mxu0 0
    %2431 = vmatpush.bf16.msra.mxu0 0
    %2432 = vmatpush.bf16.msra.mxu0 %v2423
    %2433 = vmatpush.bf16.msra.mxu0 %v2422
    %2434 = vmatmul.bf16.gmra.mxu0 %v2024
    %v2435 = vpop.f32.mrf.mxu0
    %v2436 = vadd.f32 %v1952, %v2435
    %v2437 = vpop.f32.mrf.mxu0
    %2438 = vdwg.mxu0
    %v2443 = vunpack.c.l.b16 %v1862
    %v2444 = vunpack.c.l.b16 %v1863
    %v2445 = vunpack.c.l.b16 %v1864
    %v2446 = vunpack.c.l.b16 %v1865
    %v2447 = vpack.c.b16 %v2444, %v2443
    %v2448 = vpack.c.b16 %v2446, %v2445
    %2451 = vmatpush.bf16.msra.mxu0 0
    %2452 = vmatpush.bf16.msra.mxu0 0
    %2453 = vmatpush.bf16.msra.mxu0 0
    %2454 = vmatpush.bf16.msra.mxu0 0
    %2455 = vmatpush.bf16.msra.mxu0 0
    %2456 = vmatpush.bf16.msra.mxu0 0
    %2457 = vmatpush.bf16.msra.mxu0 %v2448
    %2458 = vmatpush.bf16.msra.mxu0 %v2447
    %2459 = vmatmul.bf16.gmra.mxu0 %v1996
    %v2460 = vpop.f32.mrf.mxu0
    %v2461 = vadd.f32 %v1953, %v2460
    %v2462 = vpop.f32.mrf.mxu0
    %2463 = vdwg.mxu0
    %v2468 = vunpack.c.l.b16 %v1866
    %v2469 = vunpack.c.l.b16 %v1867
    %v2470 = vunpack.c.l.b16 %v1868
    %v2471 = vunpack.c.l.b16 %v1869
    %v2472 = vpack.c.b16 %v2469, %v2468
    %v2473 = vpack.c.b16 %v2471, %v2470
    %2476 = vmatpush.bf16.msra.mxu0 0
    %2477 = vmatpush.bf16.msra.mxu0 0
    %2478 = vmatpush.bf16.msra.mxu0 0
    %2479 = vmatpush.bf16.msra.mxu0 0
    %2480 = vmatpush.bf16.msra.mxu0 0
    %2481 = vmatpush.bf16.msra.mxu0 0
    %2482 = vmatpush.bf16.msra.mxu0 %v2473
    %2483 = vmatpush.bf16.msra.mxu0 %v2472
    %2484 = vmatmul.bf16.gmra.mxu0 %v2024
    %v2485 = vpop.f32.mrf.mxu0
    %v2486 = vadd.f32 %v1954, %v2485
    %v2487 = vpop.f32.mrf.mxu0
    %2488 = vdwg.mxu0
    %v2493 = vunpack.c.l.b16 %v1870
    %v2494 = vunpack.c.l.b16 %v1871
    %v2495 = vunpack.c.l.b16 %v1872
    %v2496 = vunpack.c.l.b16 %v1873
    %v2497 = vpack.c.b16 %v2494, %v2493
    %v2498 = vpack.c.b16 %v2496, %v2495
    %2501 = vmatpush.bf16.msra.mxu0 0
    %2502 = vmatpush.bf16.msra.mxu0 0
    %2503 = vmatpush.bf16.msra.mxu0 0
    %2504 = vmatpush.bf16.msra.mxu0 0
    %2505 = vmatpush.bf16.msra.mxu0 0
    %2506 = vmatpush.bf16.msra.mxu0 0
    %2507 = vmatpush.bf16.msra.mxu0 %v2498
    %2508 = vmatpush.bf16.msra.mxu0 %v2497
    %2509 = vmatmul.bf16.gmra.mxu0 %v1996
    %v2510 = vpop.f32.mrf.mxu0
    %v2511 = vadd.f32 %v1955, %v2510
    %v2512 = vpop.f32.mrf.mxu0
    %2513 = vdwg.mxu0
    %v2518 = vunpack.c.l.b16 %v1874
    %v2519 = vunpack.c.l.b16 %v1875
    %v2520 = vunpack.c.l.b16 %v1876
    %v2521 = vunpack.c.l.b16 %v1877
    %v2522 = vpack.c.b16 %v2519, %v2518
    %v2523 = vpack.c.b16 %v2521, %v2520
    %2526 = vmatpush.bf16.msra.mxu0 0
    %2527 = vmatpush.bf16.msra.mxu0 0
    %2528 = vmatpush.bf16.msra.mxu0 0
    %2529 = vmatpush.bf16.msra.mxu0 0
    %2530 = vmatpush.bf16.msra.mxu0 0
    %2531 = vmatpush.bf16.msra.mxu0 0
    %2532 = vmatpush.bf16.msra.mxu0 %v2523
    %2533 = vmatpush.bf16.msra.mxu0 %v2522
    %2534 = vmatmul.bf16.gmra.mxu0 %v2024
    %v2535 = vpop.f32.mrf.mxu0
    %v2536 = vadd.f32 %v1956, %v2535
    %v2537 = vpop.f32.mrf.mxu0
    %2538 = vdwg.mxu0
    %v2543 = vunpack.c.l.b16 %v1878
    %v2544 = vunpack.c.l.b16 %v1879
    %v2545 = vunpack.c.l.b16 %v1880
    %v2546 = vunpack.c.l.b16 %v1881
    %v2547 = vpack.c.b16 %v2544, %v2543
    %v2548 = vpack.c.b16 %v2546, %v2545
    %2551 = vmatpush.bf16.msra.mxu0 0
    %2552 = vmatpush.bf16.msra.mxu0 0
    %2553 = vmatpush.bf16.msra.mxu0 0
    %2554 = vmatpush.bf16.msra.mxu0 0
    %2555 = vmatpush.bf16.msra.mxu0 0
    %2556 = vmatpush.bf16.msra.mxu0 0
    %2557 = vmatpush.bf16.msra.mxu0 %v2548
    %2558 = vmatpush.bf16.msra.mxu0 %v2547
    %2559 = vmatmul.bf16.gmra.mxu0 %v1996
    %v2560 = vpop.f32.mrf.mxu0
    %v2561 = vadd.f32 %v1957, %v2560
    %v2562 = vpop.f32.mrf.mxu0
    %2563 = vdwg.mxu0
    %v2568 = vunpack.c.l.b16 %v1882
    %v2569 = vunpack.c.l.b16 %v1883
    %v2570 = vunpack.c.l.b16 %v1884
    %v2571 = vunpack.c.l.b16 %v1885
    %v2572 = vpack.c.b16 %v2569, %v2568
    %v2573 = vpack.c.b16 %v2571, %v2570
    %2576 = vmatpush.bf16.msra.mxu0 0
    %2577 = vmatpush.bf16.msra.mxu0 0
    %2578 = vmatpush.bf16.msra.mxu0 0
    %2579 = vmatpush.bf16.msra.mxu0 0
    %2580 = vmatpush.bf16.msra.mxu0 0
    %2581 = vmatpush.bf16.msra.mxu0 0
    %2582 = vmatpush.bf16.msra.mxu0 %v2573
    %2583 = vmatpush.bf16.msra.mxu0 %v2572
    %2584 = vmatmul.bf16.gmra.mxu0 %v2024
    %v2585 = vpop.f32.mrf.mxu0
    %v2586 = vadd.f32 %v1958, %v2585
    %v2587 = vpop.f32.mrf.mxu0
    %2588 = vdwg.mxu0
    %v2589 = vpack.c.bf16 %v2008, %v2008
    %v2590 = vpack.c.bf16 %v2036, %v2036
    %v2591 = vpack.c.bf16 %v2061, %v2061
    %v2592 = vpack.c.bf16 %v2086, %v2086
    %v2593 = vpack.c.bf16 %v2111, %v2111
    %v2594 = vpack.c.bf16 %v2136, %v2136
    %v2595 = vpack.c.bf16 %v2161, %v2161
    %v2596 = vpack.c.bf16 %v2186, %v2186
    %v2597 = vpack.c.bf16 %v2211, %v2211
    %v2598 = vpack.c.bf16 %v2236, %v2236
    %v2599 = vpack.c.bf16 %v2261, %v2261
    %v2600 = vpack.c.bf16 %v2286, %v2286
    %v2601 = vpack.c.bf16 %v2311, %v2311
    %v2602 = vpack.c.bf16 %v2336, %v2336
    %v2603 = vpack.c.bf16 %v2361, %v2361
    %v2604 = vpack.c.bf16 %v2386, %v2386
    %v2605 = vpack.c.bf16 %v2411, %v2411
    %v2606 = vpack.c.bf16 %v2436, %v2436
    %v2607 = vpack.c.bf16 %v2461, %v2461
    %v2608 = vpack.c.bf16 %v2486, %v2486
    %v2609 = vpack.c.bf16 %v2511, %v2511
    %v2610 = vpack.c.bf16 %v2536, %v2536
    %v2611 = vpack.c.bf16 %v2561, %v2561
    %v2612 = vpack.c.bf16 %v2586, %v2586
    %v2614 = vsel %vm890, %v2589, 0
    %v2617 = vsel %vm890, %v2597, 0
    %2619 = vmatpush.bf16.xpose.msra.mxu0 0
    %2620 = vmatpush.bf16.xpose.msra.mxu0 0
    %2621 = vmatpush.bf16.xpose.msra.mxu0 0
    %2622 = vmatpush.bf16.xpose.msra.mxu0 0
    %2623 = vmatpush.bf16.xpose.msra.mxu0 0
    %2624 = vmatpush.bf16.xpose.msra.mxu0 0
    %2625 = vmatpush.bf16.xpose.msra.mxu0 0
    %2626 = vmatpush.bf16.xpose.msra.mxu0 %v2617
    %2627 = vmatmul.bf16.gmra.mxu0 %v2614
    %v2628 = vpop.f32.mrf.mxu0
    %v2629 = vadd.f32 0.0, %v2628
    %v2630 = vpop.f32.mrf.mxu0
    %2631 = vdwg.mxu0
    %v2633 = vsel %vm890, %v2590, 0
    %v2636 = vsel %vm890, %v2598, 0
    %2638 = vmatpush.bf16.xpose.msra.mxu0 0
    %2639 = vmatpush.bf16.xpose.msra.mxu0 0
    %2640 = vmatpush.bf16.xpose.msra.mxu0 0
    %2641 = vmatpush.bf16.xpose.msra.mxu0 0
    %2642 = vmatpush.bf16.xpose.msra.mxu0 0
    %2643 = vmatpush.bf16.xpose.msra.mxu0 0
    %2644 = vmatpush.bf16.xpose.msra.mxu0 0
    %2645 = vmatpush.bf16.xpose.msra.mxu0 %v2636
    %2646 = vmatmul.bf16.gmra.mxu0 %v2633
    %v2647 = vpop.f32.mrf.mxu0
    %v2648 = vadd.f32 0.0, %v2647
    %v2649 = vpop.f32.mrf.mxu0
    %2650 = vdwg.mxu0
    %v2652 = vsel %vm890, %v2591, 0
    %v2655 = vsel %vm890, %v2599, 0
    %2657 = vmatpush.bf16.xpose.msra.mxu0 0
    %2658 = vmatpush.bf16.xpose.msra.mxu0 0
    %2659 = vmatpush.bf16.xpose.msra.mxu0 0
    %2660 = vmatpush.bf16.xpose.msra.mxu0 0
    %2661 = vmatpush.bf16.xpose.msra.mxu0 0
    %2662 = vmatpush.bf16.xpose.msra.mxu0 0
    %2663 = vmatpush.bf16.xpose.msra.mxu0 0
    %2664 = vmatpush.bf16.xpose.msra.mxu0 %v2655
    %2665 = vmatmul.bf16.gmra.mxu0 %v2652
    %v2666 = vpop.f32.mrf.mxu0
    %v2667 = vadd.f32 0.0, %v2666
    %v2668 = vpop.f32.mrf.mxu0
    %2669 = vdwg.mxu0
    %v2671 = vsel %vm890, %v2592, 0
    %v2674 = vsel %vm890, %v2600, 0
    %2676 = vmatpush.bf16.xpose.msra.mxu0 0
    %2677 = vmatpush.bf16.xpose.msra.mxu0 0
    %2678 = vmatpush.bf16.xpose.msra.mxu0 0
    %2679 = vmatpush.bf16.xpose.msra.mxu0 0
    %2680 = vmatpush.bf16.xpose.msra.mxu0 0
    %2681 = vmatpush.bf16.xpose.msra.mxu0 0
    %2682 = vmatpush.bf16.xpose.msra.mxu0 0
    %2683 = vmatpush.bf16.xpose.msra.mxu0 %v2674
    %2684 = vmatmul.bf16.gmra.mxu0 %v2671
    %v2685 = vpop.f32.mrf.mxu0
    %v2686 = vadd.f32 0.0, %v2685
    %v2687 = vpop.f32.mrf.mxu0
    %2688 = vdwg.mxu0
    %v2690 = vsel %vm890, %v2593, 0
    %v2693 = vsel %vm890, %v2601, 0
    %2695 = vmatpush.bf16.xpose.msra.mxu0 0
    %2696 = vmatpush.bf16.xpose.msra.mxu0 0
    %2697 = vmatpush.bf16.xpose.msra.mxu0 0
    %2698 = vmatpush.bf16.xpose.msra.mxu0 0
    %2699 = vmatpush.bf16.xpose.msra.mxu0 0
    %2700 = vmatpush.bf16.xpose.msra.mxu0 0
    %2701 = vmatpush.bf16.xpose.msra.mxu0 0
    %2702 = vmatpush.bf16.xpose.msra.mxu0 %v2693
    %2703 = vmatmul.bf16.gmra.mxu0 %v2690
    %v2704 = vpop.f32.mrf.mxu0
    %v2705 = vadd.f32 0.0, %v2704
    %v2706 = vpop.f32.mrf.mxu0
    %2707 = vdwg.mxu0
    %v2709 = vsel %vm890, %v2594, 0
    %v2712 = vsel %vm890, %v2602, 0
    %2714 = vmatpush.bf16.xpose.msra.mxu0 0
    %2715 = vmatpush.bf16.xpose.msra.mxu0 0
    %2716 = vmatpush.bf16.xpose.msra.mxu0 0
    %2717 = vmatpush.bf16.xpose.msra.mxu0 0
    %2718 = vmatpush.bf16.xpose.msra.mxu0 0
    %2719 = vmatpush.bf16.xpose.msra.mxu0 0
    %2720 = vmatpush.bf16.xpose.msra.mxu0 0
    %2721 = vmatpush.bf16.xpose.msra.mxu0 %v2712
    %2722 = vmatmul.bf16.gmra.mxu0 %v2709
    %v2723 = vpop.f32.mrf.mxu0
    %v2724 = vadd.f32 0.0, %v2723
    %v2725 = vpop.f32.mrf.mxu0
    %2726 = vdwg.mxu0
    %v2728 = vsel %vm890, %v2595, 0
    %v2731 = vsel %vm890, %v2603, 0
    %2733 = vmatpush.bf16.xpose.msra.mxu0 0
    %2734 = vmatpush.bf16.xpose.msra.mxu0 0
    %2735 = vmatpush.bf16.xpose.msra.mxu0 0
    %2736 = vmatpush.bf16.xpose.msra.mxu0 0
    %2737 = vmatpush.bf16.xpose.msra.mxu0 0
    %2738 = vmatpush.bf16.xpose.msra.mxu0 0
    %2739 = vmatpush.bf16.xpose.msra.mxu0 0
    %2740 = vmatpush.bf16.xpose.msra.mxu0 %v2731
    %2741 = vmatmul.bf16.gmra.mxu0 %v2728
    %v2742 = vpop.f32.mrf.mxu0
    %v2743 = vadd.f32 0.0, %v2742
    %v2744 = vpop.f32.mrf.mxu0
    %2745 = vdwg.mxu0
    %v2747 = vsel %vm890, %v2596, 0
    %v2750 = vsel %vm890, %v2604, 0
    %2752 = vmatpush.bf16.xpose.msra.mxu0 0
    %2753 = vmatpush.bf16.xpose.msra.mxu0 0
    %2754 = vmatpush.bf16.xpose.msra.mxu0 0
    %2755 = vmatpush.bf16.xpose.msra.mxu0 0
    %2756 = vmatpush.bf16.xpose.msra.mxu0 0
    %2757 = vmatpush.bf16.xpose.msra.mxu0 0
    %2758 = vmatpush.bf16.xpose.msra.mxu0 0
    %2759 = vmatpush.bf16.xpose.msra.mxu0 %v2750
    %2760 = vmatmul.bf16.gmra.mxu0 %v2747
    %v2761 = vpop.f32.mrf.mxu0
    %v2762 = vadd.f32 0.0, %v2761
    %v2763 = vpop.f32.mrf.mxu0
    %2764 = vdwg.mxu0
    %v2765 = vmul.f32 %v2629, 0.35355338
    %v2766 = vmul.f32 %v2648, 0.35355338
    %v2767 = vmul.f32 %v2667, 0.35355338
    %v2768 = vmul.f32 %v2686, 0.35355338
    %v2769 = vmul.f32 %v2705, 0.35355338
    %v2770 = vmul.f32 %v2724, 0.35355338
    %v2771 = vmul.f32 %v2743, 0.35355338
    %v2772 = vmul.f32 %v2762, 0.35355338
    %v2773 = vadd.f32 %v2765, %v1059
    %v2774 = vadd.f32 %v2766, %v1060
    %v2775 = vadd.f32 %v2767, %v1061
    %v2776 = vadd.f32 %v2768, %v1062
    %v2777 = vadd.f32 %v2769, %v1063
    %v2778 = vadd.f32 %v2770, %v1064
    %v2779 = vadd.f32 %v2771, %v1065
    %v2780 = vadd.f32 %v2772, %v1066
    %v2781 = vsel %vm890, %v2773, -inf
    %2782 = vmax.xlane.f32.xlu0 %v2781
    %v2783 = vpop.xlane.xlu0 %2782
    %v2784 = vsel %vm890, %v2774, -inf
    %2785 = vmax.xlane.f32.xlu0 %v2784
    %v2786 = vpop.xlane.xlu0 %2785
    %v2787 = vsel %vm890, %v2775, -inf
    %2788 = vmax.xlane.f32.xlu0 %v2787
    %v2789 = vpop.xlane.xlu0 %2788
    %v2790 = vsel %vm890, %v2776, -inf
    %2791 = vmax.xlane.f32.xlu0 %v2790
    %v2792 = vpop.xlane.xlu0 %2791
    %v2793 = vsel %vm890, %v2777, -inf
    %2794 = vmax.xlane.f32.xlu0 %v2793
    %v2795 = vpop.xlane.xlu0 %2794
    %v2796 = vsel %vm890, %v2778, -inf
    %2797 = vmax.xlane.f32.xlu0 %v2796
    %v2798 = vpop.xlane.xlu0 %2797
    %v2799 = vsel %vm890, %v2779, -inf
    %2800 = vmax.xlane.f32.xlu0 %v2799
    %v2801 = vpop.xlane.xlu0 %2800
    %v2802 = vsel %vm890, %v2780, -inf
    %2803 = vmax.xlane.f32.xlu0 %v2802
    %v2804 = vpop.xlane.xlu0 %2803
    %v2805 = vsub.f32 %v2773, %v2783
    %v2806 = vsub.f32 %v2774, %v2786
    %v2807 = vsub.f32 %v2775, %v2789
    %v2808 = vsub.f32 %v2776, %v2792
    %v2809 = vsub.f32 %v2777, %v2795
    %v2810 = vsub.f32 %v2778, %v2798
    %v2811 = vsub.f32 %v2779, %v2801
    %v2812 = vsub.f32 %v2780, %v2804
    %v2813 = vmul.f32 %v2805, 1.442695
    %v2814 = vpow.pop %v2813
    %v2815 = vmul.f32 %v2806, 1.442695
    %v2816 = vpow.pop %v2815
    %v2817 = vmul.f32 %v2807, 1.442695
    %v2818 = vpow.pop %v2817
    %v2819 = vmul.f32 %v2808, 1.442695
    %v2820 = vpow.pop %v2819
    %v2821 = vmul.f32 %v2809, 1.442695
    %v2822 = vpow.pop %v2821
    %v2823 = vmul.f32 %v2810, 1.442695
    %v2824 = vpow.pop %v2823
    %v2825 = vmul.f32 %v2811, 1.442695
    %v2826 = vpow.pop %v2825
    %v2827 = vmul.f32 %v2812, 1.442695
    %v2828 = vpow.pop %v2827
    %v2829 = vsel %vm890, %v2814, 0.0
    %2830 = vadd.xlane.f32.xlu0 %v2829
    %v2831 = vpop.xlane.xlu0 %2830
    %v2832 = vsel %vm890, %v2816, 0.0
    %2833 = vadd.xlane.f32.xlu0 %v2832
    %v2834 = vpop.xlane.xlu0 %2833
    %v2835 = vsel %vm890, %v2818, 0.0
    %2836 = vadd.xlane.f32.xlu0 %v2835
    %v2837 = vpop.xlane.xlu0 %2836
    %v2838 = vsel %vm890, %v2820, 0.0
    %2839 = vadd.xlane.f32.xlu0 %v2838
    %v2840 = vpop.xlane.xlu0 %2839
    %v2841 = vsel %vm890, %v2822, 0.0
    %2842 = vadd.xlane.f32.xlu0 %v2841
    %v2843 = vpop.xlane.xlu0 %2842
    %v2844 = vsel %vm890, %v2824, 0.0
    %2845 = vadd.xlane.f32.xlu0 %v2844
    %v2846 = vpop.xlane.xlu0 %2845
    %v2847 = vsel %vm890, %v2826, 0.0
    %2848 = vadd.xlane.f32.xlu0 %v2847
    %v2849 = vpop.xlane.xlu0 %2848
    %v2850 = vsel %vm890, %v2828, 0.0
    %2851 = vadd.xlane.f32.xlu0 %v2850
    %v2852 = vpop.xlane.xlu0 %2851
    %v2853 = vrcp.pop %v2831
    %v2854 = vrcp.pop %v2834
    %v2855 = vrcp.pop %v2837
    %v2856 = vrcp.pop %v2840
    %v2857 = vrcp.pop %v2843
    %v2858 = vrcp.pop %v2846
    %v2859 = vrcp.pop %v2849
    %v2860 = vrcp.pop %v2852
    %v2861 = vmul.f32 %v2814, %v2853
    %v2862 = vmul.f32 %v2816, %v2854
    %v2863 = vmul.f32 %v2818, %v2855
    %v2864 = vmul.f32 %v2820, %v2856
    %v2865 = vmul.f32 %v2822, %v2857
    %v2866 = vmul.f32 %v2824, %v2858
    %v2867 = vmul.f32 %v2826, %v2859
    %v2868 = vmul.f32 %v2828, %v2860
    %v2869 = vpack.c.bf16 %v2861, %v2861
    %v2870 = vpack.c.bf16 %v2862, %v2862
    %v2871 = vpack.c.bf16 %v2863, %v2863
    %v2872 = vpack.c.bf16 %v2864, %v2864
    %v2873 = vpack.c.bf16 %v2865, %v2865
    %v2874 = vpack.c.bf16 %v2866, %v2866
    %v2875 = vpack.c.bf16 %v2867, %v2867
    %v2876 = vpack.c.bf16 %v2868, %v2868
    %v2878 = vsel %vm890, %v2869, 0
    %v2881 = vsel %vm1182, %v2605, 0
    %2883 = vmatpush.bf16.msra.mxu0 0
    %2884 = vmatpush.bf16.msra.mxu0 0
    %2885 = vmatpush.bf16.msra.mxu0 0
    %2886 = vmatpush.bf16.msra.mxu0 0
    %2887 = vmatpush.bf16.msra.mxu0 0
    %2888 = vmatpush.bf16.msra.mxu0 0
    %2889 = vmatpush.bf16.msra.mxu0 0
    %2890 = vmatpush.bf16.msra.mxu0 %v2881
    %2891 = vmatmul.bf16.gmra.mxu0 %v2878
    %v2892 = vpop.f32.mrf.mxu0
    %v2893 = vadd.f32 0.0, %v2892
    %v2894 = vpop.f32.mrf.mxu0
    %2895 = vdwg.mxu0
    %v2897 = vsel %vm890, %v2870, 0
    %v2900 = vsel %vm1182, %v2606, 0
    %2902 = vmatpush.bf16.msra.mxu0 0
    %2903 = vmatpush.bf16.msra.mxu0 0
    %2904 = vmatpush.bf16.msra.mxu0 0
    %2905 = vmatpush.bf16.msra.mxu0 0
    %2906 = vmatpush.bf16.msra.mxu0 0
    %2907 = vmatpush.bf16.msra.mxu0 0
    %2908 = vmatpush.bf16.msra.mxu0 0
    %2909 = vmatpush.bf16.msra.mxu0 %v2900
    %2910 = vmatmul.bf16.gmra.mxu0 %v2897
    %v2911 = vpop.f32.mrf.mxu0
    %v2912 = vadd.f32 0.0, %v2911
    %v2913 = vpop.f32.mrf.mxu0
    %2914 = vdwg.mxu0
    %v2916 = vsel %vm890, %v2871, 0
    %v2919 = vsel %vm1182, %v2607, 0
    %2921 = vmatpush.bf16.msra.mxu0 0
    %2922 = vmatpush.bf16.msra.mxu0 0
    %2923 = vmatpush.bf16.msra.mxu0 0
    %2924 = vmatpush.bf16.msra.mxu0 0
    %2925 = vmatpush.bf16.msra.mxu0 0
    %2926 = vmatpush.bf16.msra.mxu0 0
    %2927 = vmatpush.bf16.msra.mxu0 0
    %2928 = vmatpush.bf16.msra.mxu0 %v2919
    %2929 = vmatmul.bf16.gmra.mxu0 %v2916
    %v2930 = vpop.f32.mrf.mxu0
    %v2931 = vadd.f32 0.0, %v2930
    %v2932 = vpop.f32.mrf.mxu0
    %2933 = vdwg.mxu0
    %v2935 = vsel %vm890, %v2872, 0
    %v2938 = vsel %vm1182, %v2608, 0
    %2940 = vmatpush.bf16.msra.mxu0 0
    %2941 = vmatpush.bf16.msra.mxu0 0
    %2942 = vmatpush.bf16.msra.mxu0 0
    %2943 = vmatpush.bf16.msra.mxu0 0
    %2944 = vmatpush.bf16.msra.mxu0 0
    %2945 = vmatpush.bf16.msra.mxu0 0
    %2946 = vmatpush.bf16.msra.mxu0 0
    %2947 = vmatpush.bf16.msra.mxu0 %v2938
    %2948 = vmatmul.bf16.gmra.mxu0 %v2935
    %v2949 = vpop.f32.mrf.mxu0
    %v2950 = vadd.f32 0.0, %v2949
    %v2951 = vpop.f32.mrf.mxu0
    %2952 = vdwg.mxu0
    %v2954 = vsel %vm890, %v2873, 0
    %v2957 = vsel %vm1182, %v2609, 0
    %2959 = vmatpush.bf16.msra.mxu0 0
    %2960 = vmatpush.bf16.msra.mxu0 0
    %2961 = vmatpush.bf16.msra.mxu0 0
    %2962 = vmatpush.bf16.msra.mxu0 0
    %2963 = vmatpush.bf16.msra.mxu0 0
    %2964 = vmatpush.bf16.msra.mxu0 0
    %2965 = vmatpush.bf16.msra.mxu0 0
    %2966 = vmatpush.bf16.msra.mxu0 %v2957
    %2967 = vmatmul.bf16.gmra.mxu0 %v2954
    %v2968 = vpop.f32.mrf.mxu0
    %v2969 = vadd.f32 0.0, %v2968
    %v2970 = vpop.f32.mrf.mxu0
    %2971 = vdwg.mxu0
    %v2973 = vsel %vm890, %v2874, 0
    %v2976 = vsel %vm1182, %v2610, 0
    %2978 = vmatpush.bf16.msra.mxu0 0
    %2979 = vmatpush.bf16.msra.mxu0 0
    %2980 = vmatpush.bf16.msra.mxu0 0
    %2981 = vmatpush.bf16.msra.mxu0 0
    %2982 = vmatpush.bf16.msra.mxu0 0
    %2983 = vmatpush.bf16.msra.mxu0 0
    %2984 = vmatpush.bf16.msra.mxu0 0
    %2985 = vmatpush.bf16.msra.mxu0 %v2976
    %2986 = vmatmul.bf16.gmra.mxu0 %v2973
    %v2987 = vpop.f32.mrf.mxu0
    %v2988 = vadd.f32 0.0, %v2987
    %v2989 = vpop.f32.mrf.mxu0
    %2990 = vdwg.mxu0
    %v2992 = vsel %vm890, %v2875, 0
    %v2995 = vsel %vm1182, %v2611, 0
    %2997 = vmatpush.bf16.msra.mxu0 0
    %2998 = vmatpush.bf16.msra.mxu0 0
    %2999 = vmatpush.bf16.msra.mxu0 0
    %3000 = vmatpush.bf16.msra.mxu0 0
    %3001 = vmatpush.bf16.msra.mxu0 0
    %3002 = vmatpush.bf16.msra.mxu0 0
    %3003 = vmatpush.bf16.msra.mxu0 0
    %3004 = vmatpush.bf16.msra.mxu0 %v2995
    %3005 = vmatmul.bf16.gmra.mxu0 %v2992
    %v3006 = vpop.f32.mrf.mxu0
    %v3007 = vadd.f32 0.0, %v3006
    %v3008 = vpop.f32.mrf.mxu0
    %3009 = vdwg.mxu0
    %v3011 = vsel %vm890, %v2876, 0
    %v3014 = vsel %vm1182, %v2612, 0
    %3016 = vmatpush.bf16.msra.mxu0 0
    %3017 = vmatpush.bf16.msra.mxu0 0
    %3018 = vmatpush.bf16.msra.mxu0 0
    %3019 = vmatpush.bf16.msra.mxu0 0
    %3020 = vmatpush.bf16.msra.mxu0 0
    %3021 = vmatpush.bf16.msra.mxu0 0
    %3022 = vmatpush.bf16.msra.mxu0 0
    %3023 = vmatpush.bf16.msra.mxu0 %v3014
    %3024 = vmatmul.bf16.gmra.mxu0 %v3011
    %v3025 = vpop.f32.mrf.mxu0
    %v3026 = vadd.f32 0.0, %v3025
    %v3027 = vpop.f32.mrf.mxu0
    %3028 = vdwg.mxu0
    %v3029 = vpack.c.bf16 %v2893, %v2893
    %v3030 = vpack.c.bf16 %v2912, %v2912
    %v3031 = vpack.c.bf16 %v2931, %v2931
    %v3032 = vpack.c.bf16 %v2950, %v2950
    %v3033 = vpack.c.bf16 %v2969, %v2969
    %v3034 = vpack.c.bf16 %v2988, %v2988
    %v3035 = vpack.c.bf16 %v3007, %v3007
    %v3036 = vpack.c.bf16 %v3026, %v3026
    %s3037 = scalar_lea.vmem %s4, 32
    %v3038 = vld [vmem:[%s3037] sm:$0xf]
    %v3039 = vld [vmem:[%s3037 + $0x4] sm:$0xf]
    %v3040 = vld [vmem:[%s3037 + $0x8] sm:$0xf]
    %v3041 = vld [vmem:[%s3037 + $0xc] sm:$0xf]
    %v3042 = vld [vmem:[%s3037 + $0x10] sm:$0xf]
    %v3043 = vld [vmem:[%s3037 + $0x14] sm:$0xf]
    %v3044 = vld [vmem:[%s3037 + $0x18] sm:$0xf]
    %v3045 = vld [vmem:[%s3037 + $0x1c] sm:$0xf]
    %v3047 = vsel %vm890, %v3029, 0
    %v3050 = vsel %vm1182, %v3038, 0
    %3052 = vmatpush.bf16.msra.mxu0 0
    %3053 = vmatpush.bf16.msra.mxu0 0
    %3054 = vmatpush.bf16.msra.mxu0 0
    %3055 = vmatpush.bf16.msra.mxu0 0
    %3056 = vmatpush.bf16.msra.mxu0 0
    %3057 = vmatpush.bf16.msra.mxu0 0
    %3058 = vmatpush.bf16.msra.mxu0 0
    %3059 = vmatpush.bf16.msra.mxu0 %v3050
    %3060 = vmatmul.bf16.gmra.mxu0 %v3047
    %v3061 = vpop.f32.mrf.mxu0
    %v3062 = vadd.f32 0.0, %v3061
    %v3063 = vpop.f32.mrf.mxu0
    %3064 = vdwg.mxu0
    %v3066 = vsel %vm890, %v3030, 0
    %v3069 = vsel %vm1182, %v3039, 0
    %3071 = vmatpush.bf16.msra.mxu0 0
    %3072 = vmatpush.bf16.msra.mxu0 0
    %3073 = vmatpush.bf16.msra.mxu0 0
    %3074 = vmatpush.bf16.msra.mxu0 0
    %3075 = vmatpush.bf16.msra.mxu0 0
    %3076 = vmatpush.bf16.msra.mxu0 0
    %3077 = vmatpush.bf16.msra.mxu0 0
    %3078 = vmatpush.bf16.msra.mxu0 %v3069
    %3079 = vmatmul.bf16.gmra.mxu0 %v3066
    %v3080 = vpop.f32.mrf.mxu0
    %v3081 = vadd.f32 0.0, %v3080
    %v3082 = vpop.f32.mrf.mxu0
    %3083 = vdwg.mxu0
    %v3085 = vsel %vm890, %v3031, 0
    %v3088 = vsel %vm1182, %v3040, 0
    %3090 = vmatpush.bf16.msra.mxu0 0
    %3091 = vmatpush.bf16.msra.mxu0 0
    %3092 = vmatpush.bf16.msra.mxu0 0
    %3093 = vmatpush.bf16.msra.mxu0 0
    %3094 = vmatpush.bf16.msra.mxu0 0
    %3095 = vmatpush.bf16.msra.mxu0 0
    %3096 = vmatpush.bf16.msra.mxu0 0
    %3097 = vmatpush.bf16.msra.mxu0 %v3088
    %3098 = vmatmul.bf16.gmra.mxu0 %v3085
    %v3099 = vpop.f32.mrf.mxu0
    %v3100 = vadd.f32 0.0, %v3099
    %v3101 = vpop.f32.mrf.mxu0
    %3102 = vdwg.mxu0
    %v3104 = vsel %vm890, %v3032, 0
    %v3107 = vsel %vm1182, %v3041, 0
    %3109 = vmatpush.bf16.msra.mxu0 0
    %3110 = vmatpush.bf16.msra.mxu0 0
    %3111 = vmatpush.bf16.msra.mxu0 0
    %3112 = vmatpush.bf16.msra.mxu0 0
    %3113 = vmatpush.bf16.msra.mxu0 0
    %3114 = vmatpush.bf16.msra.mxu0 0
    %3115 = vmatpush.bf16.msra.mxu0 0
    %3116 = vmatpush.bf16.msra.mxu0 %v3107
    %3117 = vmatmul.bf16.gmra.mxu0 %v3104
    %v3118 = vpop.f32.mrf.mxu0
    %v3119 = vadd.f32 0.0, %v3118
    %v3120 = vpop.f32.mrf.mxu0
    %3121 = vdwg.mxu0
    %v3123 = vsel %vm890, %v3033, 0
    %v3126 = vsel %vm1182, %v3042, 0
    %3128 = vmatpush.bf16.msra.mxu0 0
    %3129 = vmatpush.bf16.msra.mxu0 0
    %3130 = vmatpush.bf16.msra.mxu0 0
    %3131 = vmatpush.bf16.msra.mxu0 0
    %3132 = vmatpush.bf16.msra.mxu0 0
    %3133 = vmatpush.bf16.msra.mxu0 0
    %3134 = vmatpush.bf16.msra.mxu0 0
    %3135 = vmatpush.bf16.msra.mxu0 %v3126
    %3136 = vmatmul.bf16.gmra.mxu0 %v3123
    %v3137 = vpop.f32.mrf.mxu0
    %v3138 = vadd.f32 0.0, %v3137
    %v3139 = vpop.f32.mrf.mxu0
    %3140 = vdwg.mxu0
    %v3142 = vsel %vm890, %v3034, 0
    %v3145 = vsel %vm1182, %v3043, 0
    %3147 = vmatpush.bf16.msra.mxu0 0
    %3148 = vmatpush.bf16.msra.mxu0 0
    %3149 = vmatpush.bf16.msra.mxu0 0
    %3150 = vmatpush.bf16.msra.mxu0 0
    %3151 = vmatpush.bf16.msra.mxu0 0
    %3152 = vmatpush.bf16.msra.mxu0 0
    %3153 = vmatpush.bf16.msra.mxu0 0
    %3154 = vmatpush.bf16.msra.mxu0 %v3145
    %3155 = vmatmul.bf16.gmra.mxu0 %v3142
    %v3156 = vpop.f32.mrf.mxu0
    %v3157 = vadd.f32 0.0, %v3156
    %v3158 = vpop.f32.mrf.mxu0
    %3159 = vdwg.mxu0
    %v3161 = vsel %vm890, %v3035, 0
    %v3164 = vsel %vm1182, %v3044, 0
    %3166 = vmatpush.bf16.msra.mxu0 0
    %3167 = vmatpush.bf16.msra.mxu0 0
    %3168 = vmatpush.bf16.msra.mxu0 0
    %3169 = vmatpush.bf16.msra.mxu0 0
    %3170 = vmatpush.bf16.msra.mxu0 0
    %3171 = vmatpush.bf16.msra.mxu0 0
    %3172 = vmatpush.bf16.msra.mxu0 0
    %3173 = vmatpush.bf16.msra.mxu0 %v3164
    %3174 = vmatmul.bf16.gmra.mxu0 %v3161
    %v3175 = vpop.f32.mrf.mxu0
    %v3176 = vadd.f32 0.0, %v3175
    %v3177 = vpop.f32.mrf.mxu0
    %3178 = vdwg.mxu0
    %v3180 = vsel %vm890, %v3036, 0
    %v3183 = vsel %vm1182, %v3045, 0
    %3185 = vmatpush.bf16.msra.mxu0 0
    %3186 = vmatpush.bf16.msra.mxu0 0
    %3187 = vmatpush.bf16.msra.mxu0 0
    %3188 = vmatpush.bf16.msra.mxu0 0
    %3189 = vmatpush.bf16.msra.mxu0 0
    %3190 = vmatpush.bf16.msra.mxu0 0
    %3191 = vmatpush.bf16.msra.mxu0 0
    %3192 = vmatpush.bf16.msra.mxu0 %v3183
    %3193 = vmatmul.bf16.gmra.mxu0 %v3180
    %v3194 = vpop.f32.mrf.mxu0
    %v3195 = vadd.f32 0.0, %v3194
    %v3196 = vpop.f32.mrf.mxu0
    %3197 = vdwg.mxu0
    %v3198 = vadd.f32 %v3062, %v3100
    %v3199 = vadd.f32 %v3081, %v3119
    %v3200 = vadd.f32 %v3198, %v3138
    %v3201 = vadd.f32 %v3199, %v3157
    %v3202 = vadd.f32 %v3200, %v3176
    %v3203 = vadd.f32 %v3201, %v3195
    %s3204 = scalar_lea.vmem %s5, 1
    %v3205 = vld [vmem:[%s3204] sm:$0x1]
    %v3207 = vperm.slane %v3205, 0
    %v3209 = vadd.f32 %v3202, %v3207
    %v3210 = vadd.f32 %v3203, %v3207
    %v3211 = vadd.f32 %v1785, %v3209
    %v3212 = vadd.f32 %v1786, %v3210
    %s3213 = scalar_lea.vmem %s6, 1
    %v3214 = vld [vmem:[%s3213] sm:$0x1]
    %s3215 = scalar_lea.vmem %s7, 1
    %v3216 = vld [vmem:[%s3215] sm:$0x1]
    %v3217 = vsel %vm271, %v3211, 0.0
    %3218 = vadd.xlane.f32.xlu0 %v3217
    %v3219 = vpop.xlane.xlu0 %3218
    %v3220 = vsel %vm271, %v3212, 0.0
    %3221 = vadd.xlane.f32.xlu0 %v3220
    %v3222 = vpop.xlane.xlu0 %3221
    %v3223 = vmul.f32 %v3219, %v1528
    %v3224 = vmul.f32 %v3222, %v1528
    %v3225 = vsub.f32 %v3211, %v3223
    %v3226 = vsub.f32 %v3212, %v3224
    %v3227 = vmul.f32 %v3225, %v3225
    %v3228 = vmul.f32 %v3226, %v3226
    %v3229 = vsel %vm271, %v3227, 0.0
    %3230 = vadd.xlane.f32.xlu0 %v3229
    %v3231 = vpop.xlane.xlu0 %3230
    %v3232 = vsel %vm271, %v3228, 0.0
    %3233 = vadd.xlane.f32.xlu0 %v3232
    %v3234 = vpop.xlane.xlu0 %3233
    %v3235 = vmul.f32 %v3231, %v1528
    %v3236 = vmul.f32 %v3234, %v1528
    %v3237 = vadd.f32 %v3235, 1e-05
    %v3238 = vadd.f32 %v3236, 1e-05
    %v3239 = vrsqrt.pop %v3237
    %v3240 = vmul.f32 %v3239, %v3237
    %v3241 = vmul.f32 %v3240, %v3239
    %v3242 = vmul.f32 0.5, %v3241
    %v3243 = vsub.f32 1.5, %v3242
    %v3244 = vmul.f32 %v3239, %v3243
    %vm3245 = vweird.f32 %v3237
    %vm3246 = vweird.f32 %v3239
    %vm3247 = vmor %vm3245, %vm3246
    %v3248 = vsel %vm3247, %v3239, %v3244
    %v3249 = vrsqrt.pop %v3238
    %v3250 = vmul.f32 %v3249, %v3238
    %v3251 = vmul.f32 %v3250, %v3249
    %v3252 = vmul.f32 0.5, %v3251
    %v3253 = vsub.f32 1.5, %v3252
    %v3254 = vmul.f32 %v3249, %v3253
    %vm3255 = vweird.f32 %v3238
    %vm3256 = vweird.f32 %v3249
    %vm3257 = vmor %vm3255, %vm3256
    %v3258 = vsel %vm3257, %v3249, %v3254
    %v3259 = vmul.f32 %v3225, %v3248
    %v3260 = vmul.f32 %v3226, %v3258
    %v3262 = vperm.slane %v3214, 0
    %v3264 = vmul.f32 %v3259, %v3262
    %v3265 = vmul.f32 %v3260, %v3262
    %v3267 = vperm.slane %v3216, 0
    %v3269 = vadd.f32 %v3264, %v3267
    %v3270 = vadd.f32 %v3265, %v3267
    %v3271 = vpack.c.bf16 %v3269, %v3269
    %v3272 = vpack.c.bf16 %v3270, %v3270
    %s3273 = scalar_lea.vmem %s8, 16
    %v3274 = vld [vmem:[%s3273] sm:$0xf]
    %v3275 = vld [vmem:[%s3273 + $0x4] sm:$0xf]
    %v3276 = vld [vmem:[%s3273 + $0x8] sm:$0xf]
    %v3277 = vld [vmem:[%s3273 + $0xc] sm:$0xf]
    %s3278 = scalar_lea.vmem %s9, 1
    %v3279 = vld [vmem:[%s3278] sm:$0x1]
    %v3281 = vperm.slane %v3279, 0
    %v3287 = vunpack.c.l.b16 %v3274
    %v3288 = vunpack.c.l.b16 %v3275
    %v3289 = vunpack.c.l.b16 %v3276
    %v3290 = vunpack.c.l.b16 %v3277
    %v3291 = vpack.c.b16 %v3288, %v3287
    %v3292 = vpack.c.b16 %v3290, %v3289
    %v3296 = vsel %vm271, %v3271, 0
    %3298 = vmatpush.bf16.msra.mxu0 0
    %3299 = vmatpush.bf16.msra.mxu0 0
    %3300 = vmatpush.bf16.msra.mxu0 0
    %3301 = vmatpush.bf16.msra.mxu0 0
    %3302 = vmatpush.bf16.msra.mxu0 0
    %3303 = vmatpush.bf16.msra.mxu0 0
    %3304 = vmatpush.bf16.msra.mxu0 %v3292
    %3305 = vmatpush.bf16.msra.mxu0 %v3291
    %3306 = vmatmul.bf16.gmra.mxu0 %v3296
    %v3307 = vpop.f32.mrf.mxu0
    %v3308 = vadd.f32 %v3281, %v3307
    %v3309 = vpop.f32.mrf.mxu0
    %3310 = vdwg.mxu0
    %v3312 = vsel %vm271, %v3272, 0
    %3314 = vmatpush.bf16.msra.mxu0 0
    %3315 = vmatpush.bf16.msra.mxu0 0
    %3316 = vmatpush.bf16.msra.mxu0 0
    %3317 = vmatpush.bf16.msra.mxu0 0
    %3318 = vmatpush.bf16.msra.mxu0 0
    %3319 = vmatpush.bf16.msra.mxu0 0
    %3320 = vmatpush.bf16.msra.mxu0 %v3292
    %3321 = vmatpush.bf16.msra.mxu0 %v3291
    %3322 = vmatmul.bf16.gmra.mxu0 %v3312
    %v3323 = vpop.f32.mrf.mxu0
    %v3324 = vadd.f32 %v3281, %v3323
    %v3325 = vpop.f32.mrf.mxu0
    %3326 = vdwg.mxu0
    %v3327 = vmax.f32 %v3308, 0.0
    %v3328 = vmax.f32 %v3324, 0.0
    %s3329 = scalar_lea.vmem %s10, 64
    %v3330 = vld [vmem:[%s3329] sm:$0xf]
    %v3331 = vld [vmem:[%s3329 + $0x4] sm:$0xf]
    %v3332 = vld [vmem:[%s3329 + $0x8] sm:$0xf]
    %v3333 = vld [vmem:[%s3329 + $0xc] sm:$0xf]
    %v3334 = vld [vmem:[%s3329 + $0x10] sm:$0xf]
    %v3335 = vld [vmem:[%s3329 + $0x14] sm:$0xf]
    %v3336 = vld [vmem:[%s3329 + $0x18] sm:$0xf]
    %v3337 = vld [vmem:[%s3329 + $0x1c] sm:$0xf]
    %v3338 = vld [vmem:[%s3329 + $0x20] sm:$0xf]
    %v3339 = vld [vmem:[%s3329 + $0x24] sm:$0xf]
    %v3340 = vld [vmem:[%s3329 + $0x28] sm:$0xf]
    %v3341 = vld [vmem:[%s3329 + $0x2c] sm:$0xf]
    %v3342 = vld [vmem:[%s3329 + $0x30] sm:$0xf]
    %v3343 = vld [vmem:[%s3329 + $0x34] sm:$0xf]
    %v3344 = vld [vmem:[%s3329 + $0x38] sm:$0xf]
    %v3345 = vld [vmem:[%s3329 + $0x3c] sm:$0xf]
    %v3346 = vpack.c.bf16 %v3327, %v3327
    %v3347 = vpack.c.bf16 %v3328, %v3328
    %s3348 = scalar_lea.vmem %s11, 1
    %v3349 = vld [vmem:[%s3348] sm:$0x1]
    %v3351 = vperm.slane %v3349, 0
    %v3369 = vunpack.c.l.b16 %v3330
    %v3370 = vunpack.c.l.b16 %v3331
    %v3371 = vunpack.c.l.b16 %v3332
    %v3372 = vunpack.c.l.b16 %v3333
    %v3373 = vunpack.c.l.b16 %v3334
    %v3374 = vunpack.c.l.b16 %v3335
    %v3375 = vunpack.c.l.b16 %v3336
    %v3376 = vunpack.c.l.b16 %v3337
    %v3377 = vunpack.c.l.b16 %v3338
    %v3378 = vunpack.c.l.b16 %v3339
    %v3379 = vunpack.c.l.b16 %v3340
    %v3380 = vunpack.c.l.b16 %v3341
    %v3381 = vunpack.c.l.b16 %v3342
    %v3382 = vunpack.c.l.b16 %v3343
    %v3383 = vunpack.c.l.b16 %v3344
    %v3384 = vunpack.c.l.b16 %v3345
    %v3385 = vpack.c.b16 %v3370, %v3369
    %v3386 = vpack.c.b16 %v3372, %v3371
    %v3387 = vpack.c.b16 %v3374, %v3373
    %v3388 = vpack.c.b16 %v3376, %v3375
    %v3389 = vpack.c.b16 %v3378, %v3377
    %v3390 = vpack.c.b16 %v3380, %v3379
    %v3391 = vpack.c.b16 %v3382, %v3381
    %v3392 = vpack.c.b16 %v3384, %v3383
    %3401 = vmatpush.bf16.msra.mxu0 %v3392
    %3402 = vmatpush.bf16.msra.mxu0 %v3391
    %3403 = vmatpush.bf16.msra.mxu0 %v3390
    %3404 = vmatpush.bf16.msra.mxu0 %v3389
    %3405 = vmatpush.bf16.msra.mxu0 %v3388
    %3406 = vmatpush.bf16.msra.mxu0 %v3387
    %3407 = vmatpush.bf16.msra.mxu0 %v3386
    %3408 = vmatpush.bf16.msra.mxu0 %v3385
    %3409 = vmatmul.bf16.gmra.mxu0 %v3346
    %v3410 = vpop.f32.mrf.mxu0
    %v3411 = vadd.f32 %v3351, %v3410
    %v3412 = vpop.f32.mrf.mxu0
    %3413 = vdwg.mxu0
    %3414 = vmatpush.bf16.msra.mxu0 %v3392
    %3415 = vmatpush.bf16.msra.mxu0 %v3391
    %3416 = vmatpush.bf16.msra.mxu0 %v3390
    %3417 = vmatpush.bf16.msra.mxu0 %v3389
    %3418 = vmatpush.bf16.msra.mxu0 %v3388
    %3419 = vmatpush.bf16.msra.mxu0 %v3387
    %3420 = vmatpush.bf16.msra.mxu0 %v3386
    %3421 = vmatpush.bf16.msra.mxu0 %v3385
    %3422 = vmatmul.bf16.gmra.mxu0 %v3347
    %v3423 = vpop.f32.mrf.mxu0
    %v3424 = vadd.f32 %v3351, %v3423
    %v3425 = vpop.f32.mrf.mxu0
    %3426 = vdwg.mxu0
    %v3427 = vadd.f32 %v3269, %v3411
    %v3428 = vadd.f32 %v3270, %v3424
    %s3429 = scalar_lea.vmem %s12, 1
    %v3430 = vld [vmem:[%s3429] sm:$0x1]
    %s3431 = scalar_lea.vmem %s13, 1
    %v3432 = vld [vmem:[%s3431] sm:$0x1]
    %v3433 = vsel %vm271, %v3427, 0.0
    %3434 = vadd.xlane.f32.xlu0 %v3433
    %v3435 = vpop.xlane.xlu0 %3434
    %v3436 = vsel %vm271, %v3428, 0.0
    %3437 = vadd.xlane.f32.xlu0 %v3436
    %v3438 = vpop.xlane.xlu0 %3437
    %v3439 = vmul.f32 %v3435, %v1528
    %v3440 = vmul.f32 %v3438, %v1528
    %v3441 = vsub.f32 %v3427, %v3439
    %v3442 = vsub.f32 %v3428, %v3440
    %v3443 = vmul.f32 %v3441, %v3441
    %v3444 = vmul.f32 %v3442, %v3442
    %v3445 = vsel %vm271, %v3443, 0.0
    %3446 = vadd.xlane.f32.xlu0 %v3445
    %v3447 = vpop.xlane.xlu0 %3446
    %v3448 = vsel %vm271, %v3444, 0.0
    %3449 = vadd.xlane.f32.xlu0 %v3448
    %v3450 = vpop.xlane.xlu0 %3449
    %v3451 = vmul.f32 %v3447, %v1528
    %v3452 = vmul.f32 %v3450, %v1528
    %v3453 = vadd.f32 %v3451, 1e-05
    %v3454 = vadd.f32 %v3452, 1e-05
    %v3455 = vrsqrt.pop %v3453
    %v3456 = vmul.f32 %v3455, %v3453
    %v3457 = vmul.f32 %v3456, %v3455
    %v3458 = vmul.f32 0.5, %v3457
    %v3459 = vsub.f32 1.5, %v3458
    %v3460 = vmul.f32 %v3455, %v3459
    %vm3461 = vweird.f32 %v3453
    %vm3462 = vweird.f32 %v3455
    %vm3463 = vmor %vm3461, %vm3462
    %v3464 = vsel %vm3463, %v3455, %v3460
    %v3465 = vrsqrt.pop %v3454
    %v3466 = vmul.f32 %v3465, %v3454
    %v3467 = vmul.f32 %v3466, %v3465
    %v3468 = vmul.f32 0.5, %v3467
    %v3469 = vsub.f32 1.5, %v3468
    %v3470 = vmul.f32 %v3465, %v3469
    %vm3471 = vweird.f32 %v3454
    %vm3472 = vweird.f32 %v3465
    %vm3473 = vmor %vm3471, %vm3472
    %v3474 = vsel %vm3473, %v3465, %v3470
    %v3475 = vmul.f32 %v3441, %v3464
    %v3476 = vmul.f32 %v3442, %v3474
    %v3478 = vperm.slane %v3430, 0
    %v3480 = vmul.f32 %v3475, %v3478
    %v3481 = vmul.f32 %v3476, %v3478
    %v3483 = vperm.slane %v3432, 0
    %v3485 = vadd.f32 %v3480, %v3483
    %v3486 = vadd.f32 %v3481, %v3483
    %v3487 = vld [vmem:[%s14] sm:$0x1]
    %v3488 = vld [vmem:[%s15] sm:$0x1]
    %v3489 = vsel %vm271, %v3485, 0.0
    %3490 = vadd.xlane.f32.xlu0 %v3489
    %v3491 = vpop.xlane.xlu0 %3490
    %v3492 = vsel %vm271, %v3486, 0.0
    %3493 = vadd.xlane.f32.xlu0 %v3492
    %v3494 = vpop.xlane.xlu0 %3493
    %v3495 = vmul.f32 %v3491, %v1528
    %v3496 = vmul.f32 %v3494, %v1528
    %v3497 = vsub.f32 %v3485, %v3495
    %v3498 = vsub.f32 %v3486, %v3496
    %v3499 = vmul.f32 %v3497, %v3497
    %v3500 = vmul.f32 %v3498, %v3498
    %v3501 = vsel %vm271, %v3499, 0.0
    %3502 = vadd.xlane.f32.xlu0 %v3501
    %v3503 = vpop.xlane.xlu0 %3502
    %v3504 = vsel %vm271, %v3500, 0.0
    %3505 = vadd.xlane.f32.xlu0 %v3504
    %v3506 = vpop.xlane.xlu0 %3505
    %v3507 = vmul.f32 %v3503, %v1528
    %v3508 = vmul.f32 %v3506, %v1528
    %v3509 = vadd.f32 %v3507, 1e-05
    %v3510 = vadd.f32 %v3508, 1e-05
    %v3511 = vrsqrt.pop %v3509
    %v3512 = vmul.f32 %v3511, %v3509
    %v3513 = vmul.f32 %v3512, %v3511
    %v3514 = vmul.f32 0.5, %v3513
    %v3515 = vsub.f32 1.5, %v3514
    %v3516 = vmul.f32 %v3511, %v3515
    %vm3517 = vweird.f32 %v3509
    %vm3518 = vweird.f32 %v3511
    %vm3519 = vmor %vm3517, %vm3518
    %v3520 = vsel %vm3519, %v3511, %v3516
    %v3521 = vrsqrt.pop %v3510
    %v3522 = vmul.f32 %v3521, %v3510
    %v3523 = vmul.f32 %v3522, %v3521
    %v3524 = vmul.f32 0.5, %v3523
    %v3525 = vsub.f32 1.5, %v3524
    %v3526 = vmul.f32 %v3521, %v3525
    %vm3527 = vweird.f32 %v3510
    %vm3528 = vweird.f32 %v3521
    %vm3529 = vmor %vm3527, %vm3528
    %v3530 = vsel %vm3529, %v3521, %v3526
    %v3531 = vmul.f32 %v3497, %v3520
    %v3532 = vmul.f32 %v3498, %v3530
    %v3534 = vperm.slane %v3487, 0
    %v3536 = vmul.f32 %v3531, %v3534
    %v3537 = vmul.f32 %v3532, %v3534
    %v3539 = vperm.slane %v3488, 0
    %v3541 = vadd.f32 %v3536, %v3539
    %v3542 = vadd.f32 %v3537, %v3539
    %3543 = vst.msk [vmem:[#allocation2] sm:$0xff] %vm271, %v3541
    %3544 = vst.msk [vmem:[#allocation2 + $0x8] sm:$0xff] %vm271, %v3542
    // Predicated region
    $region66: #{encoder_forward.1} parent=1 // pred_check
      _
    $region67: #{encoder_forward.1} parent=1 // pred_check_branch
      %3546 = sbr.rel (0) target = $region69
    $region68: #{encoder_forward.1} parent=1 // pred_region
      %3548 = vsyncadd [#allocation3], 0
      %s3549 = sshll.u32 [#allocation2], 4
      %s3550 = int_to_ptr.vmem [resolvable:$true] %s3549
      %s3551 = sshll.u32 %s16, 4
      %s3552 = int_to_ptr.hbm [resolvable:$true] %s3551
      %3557 = dma.vmem_to_hbm [thread:$0]  %s3550, 256, %s3552, [#allocation3], 128, 128, 8
    $region69: #{encoder_forward.1} parent=1 // pred_fallthru
      _
    // Predicated region
    $region70: #{encoder_forward.1} parent=1 // pred_check
      _
    $region71: #{encoder_forward.1} parent=1 // pred_check_branch
      %3559 = sbr.rel (0) target = $region73
    $region72: #{encoder_forward.1} parent=1 // pred_region
      %3561 = dma.done [#allocation3], 256
    $region73: #{encoder_forward.1} parent=1 // pred_fallthru
      _
    %3562 = vsyncpa [#allocation3], 1

</llo_original>
